<compile_context>
chip_gen: v7x
topology: tpu7x:2x2x1
jax: 0.10.0
libtpu: 0.0.40
codegen_flags: <defaults>
</compile_context>

<pallas_src>
import jax
import jax.numpy as jnp
from jax import lax
from jax.experimental import pallas as pl
from jax.experimental.pallas import tpu as pltpu  # noqa: F401  (TPU backend present)

# ----------------------- model hyper-parameters (synthetic) -----------------
B, S = 2, 8                       # batch, sequence length
EMBED_DIM = 32
NUM_HEADS = 2
FC_SIZE = 64
NUM_LAYERS = 2
NUM_BINS = 8
MAX_ENTITIES = 8
ENCODE_DIM = 16

NUM_TOKENS = 4                    # synthetic len(dataset.Token); Token.Pad == 0
NUM_VAL = NUM_TOKENS + NUM_BINS   # num_val_embeddings (INCLUDE_CONSTRUCTION=False)
NUM_COORD = 2 + 6                 # 2 + sum(len(m) for m in COORD_TOKEN_MAP) (synthetic)
NUM_POS = 3 + MAX_ENTITIES
PAD_IDX = 0
LN_EPS = 1e-5

LANE = 128                        # lane-dense padding for the decode output
NEG = -1e30                       # additive mask value (acts as -inf)


# ----------------------------- Pallas kernel ---------------------------------
def _layernorm(x, w, b):
    mu = jnp.mean(x, axis=-1, keepdims=True)
    d = x - mu
    var = jnp.mean(d * d, axis=-1, keepdims=True)
    return d * lax.rsqrt(var + LN_EPS) * w + b


def _transformer_layer(x, big, ff2, small, bias):
    """Post-norm TransformerEncoderLayer applied to the flattened (B*S, E) slab.

    big   : (E, 3E + E + F)   = [in_proj.T | out_proj.T | linear1.T]
    ff2   : (F, E)            = linear2.T
    small : (8, 128) rows     = [bqkv, bo, ln1w, ln1b, ff1b, ff2b, ln2w, ln2b]
    bias  : (B*S, B*S)        additive attention bias (block-diag batch [+ causal])
    """
    n, e = x.shape
    f = ff2.shape[0]
    dh = e // NUM_HEADS
    scale = 1.0 / float(dh) ** 0.5

    wqkv = big[:, :3 * e]
    wo = big[:, 3 * e:4 * e]
    ff1 = big[:, 4 * e:4 * e + f]
    bqkv = small[0:1, :3 * e]
    bo = small[1:2, :e]
    ln1w = small[2:3, :e]
    ln1b = small[3:4, :e]
    ff1b = small[4:5, :f]
    ff2b = small[5:6, :e]
    ln2w = small[6:7, :e]
    ln2b = small[7:8, :e]

    # --- multi-head self-attention on the whole (B*S) slab ---
    qkv = jnp.dot(x, wqkv, preferred_element_type=jnp.float32) + bqkv      # (N, 3E)
    attn = jnp.zeros((n, e), jnp.float32)
    for h in range(NUM_HEADS):
        q = qkv[:, h * dh:(h + 1) * dh]
        k = qkv[:, e + h * dh:e + (h + 1) * dh]
        v = qkv[:, 2 * e + h * dh:2 * e + (h + 1) * dh]
        s = lax.dot_general(q, k, (((1,), (1,)), ((), ())),
                            preferred_element_type=jnp.float32) * scale + bias
        m = jnp.max(s, axis=-1, keepdims=True)
        p = jnp.exp(s - m)
        p = p * pl.reciprocal(jnp.sum(p, axis=-1, keepdims=True), approx=True)
        head = jnp.dot(p, v, preferred_element_type=jnp.float32)           # (N, dh)
        # concat(heads) @ Wo.T == sum_h head_h @ Wo.T[h*dh:(h+1)*dh, :]
        attn = attn + jnp.dot(head, wo[h * dh:(h + 1) * dh, :],
                              preferred_element_type=jnp.float32)
    attn = attn + bo

    # --- residual + LayerNorm 1 ---
    x = _layernorm(x + attn, ln1w, ln1b)

    # --- feed-forward (ReLU) + residual + LayerNorm 2 ---
    h1 = jnp.maximum(jnp.dot(x, ff1, preferred_element_type=jnp.float32) + ff1b, 0.0)
    ffn = jnp.dot(h1, ff2, preferred_element_type=jnp.float32) + ff2b
    return _layernorm(x + ffn, ln2w, ln2b)


def fused_ae_kernel(enc_emb_ref, dec_emb_ref, masks_ref,
                    enc_big_ref, enc_ff2_ref, enc_small_ref,
                    dec_big_ref, dec_ff2_ref, dec_small_ref,
                    out_wb_ref, o_ref):
    n, e = enc_emb_ref.shape
    num_layers = enc_big_ref.shape[0]

    enc_bias = masks_ref[0]   # block-diagonal batch mask, no causal (use_mask=False)
    dec_bias = masks_ref[1]   # block-diagonal batch mask + causal
    sel = masks_ref[2]        # routes each batch's last-token row to its t=0 row

    # ---- encoder stack (un-masked PrimitiveModel, no linear decode) ----
    x = enc_emb_ref[...]
    for l in range(num_layers):
        x = _transformer_layer(x, enc_big_ref[l], enc_ff2_ref[l],
                               enc_small_ref[l], enc_bias)

    # ---- encoding -> add to decoder embedding at t=0, first ENCODE_DIM dims ----
    ctx = jnp.dot(sel, x, preferred_element_type=jnp.float32)              # (N, E)
    col = lax.broadcasted_iota(jnp.int32, (n, e), 1)
    y = dec_emb_ref[...] + jnp.where(col < ENCODE_DIM, ctx, 0.0)

    # ---- decoder stack (CondPrimModel, causal mask) ----
    for l in range(num_layers):
        y = _transformer_layer(y, dec_big_ref[l], dec_ff2_ref[l],
                               dec_small_ref[l], dec_bias)

    # ---- linear decode, lane-padded to 128 (sliced to NUM_VAL outside) ----
    o_ref[...] = (jnp.dot(y, out_wb_ref[:e, :], preferred_element_type=jnp.float32)
                  + out_wb_ref[e:e + 1, :])


# ------------------------------ parameters -----------------------------------
def init_embed(key, n, d):
    e = jax.random.normal(key, (n, d), jnp.float32) * 0.02
    return e.at[PAD_IDX].set(0.0)     # padding_idx zero row


def init_layer(key, e, f):
    k = jax.random.split(key, 4)
    std = 0.02
    return dict(
        wqkv_t=jax.random.normal(k[0], (e, 3 * e), jnp.float32) * std,   # in_proj_weight.T
        bqkv=jnp.zeros((1, 3 * e), jnp.float32),
        wo_t=jax.random.normal(k[1], (e, e), jnp.float32) * std,          # out_proj.weight.T
        bo=jnp.zeros((1, e), jnp.float32),
        ln1w=jnp.ones((1, e), jnp.float32), ln1b=jnp.zeros((1, e), jnp.float32),
        ff1_t=jax.random.normal(k[2], (e, f), jnp.float32) * std,         # linear1.weight.T
        ff1b=jnp.zeros((1, f), jnp.float32),
        ff2_t=jax.random.normal(k[3], (f, e), jnp.float32) * std,         # linear2.weight.T
        ff2b=jnp.zeros((1, e), jnp.float32),
        ln2w=jnp.ones((1, e), jnp.float32), ln2b=jnp.zeros((1, e), jnp.float32),
    )


def init_prim_model(key, linear_decode_flag):
    ks = jax.random.split(key, 5 + NUM_LAYERS)
    p = dict(
        val_embed=init_embed(ks[0], NUM_VAL, EMBED_DIM),
        coord_embed=init_embed(ks[1], NUM_COORD, EMBED_DIM),
        pos_embed=init_embed(ks[2], NUM_POS, EMBED_DIM),
        layers=[init_layer(ks[5 + i], EMBED_DIM, FC_SIZE) for i in range(NUM_LAYERS)],
    )
    if linear_decode_flag:
        p["out_w_t"] = jax.random.normal(ks[3], (EMBED_DIM, NUM_VAL), jnp.float32) * 0.02
        p["out_b"] = jnp.zeros((1, NUM_VAL), jnp.float32)
    return p


# --------------------------- weight packing (one-time) ------------------------
_SMALL_ORDER = ("bqkv", "bo", "ln1w", "ln1b", "ff1b", "ff2b", "ln2w", "ln2b")


def _pack_layer_small(layer):
    slab = jnp.zeros((8, LANE), jnp.float32)
    for i, name in enumerate(_SMALL_ORDER):
        v = layer[name].reshape(-1)
        slab = slab.at[i, :v.shape[0]].set(v)
    return slab


def _pack_layer_big(layer):
    return jnp.concatenate([layer["wqkv_t"], layer["wo_t"], layer["ff1_t"]], axis=1)


def pack_prim_model(model):
    packed = dict(
        val_embed=model["val_embed"],
        coord_embed=model["coord_embed"],
        pos_embed=model["pos_embed"],
        big=jnp.stack([_pack_layer_big(l) for l in model["layers"]], axis=0),
        ff2=jnp.stack([l["ff2_t"] for l in model["layers"]], axis=0),
        small=jnp.stack([_pack_layer_small(l) for l in model["layers"]], axis=0),
    )
    if "out_w_t" in model:
        wb = jnp.zeros((EMBED_DIM + 1, LANE), jnp.float32)
        wb = wb.at[:EMBED_DIM, :NUM_VAL].set(model["out_w_t"])
        wb = wb.at[EMBED_DIM, :NUM_VAL].set(model["out_b"].reshape(-1))
        packed["out_wb"] = wb
    return packed


# ------------------------------ forward pass ----------------------------------
def embed_tokens(model, val, coord, pos):
    # Embedding gathers kept in plain JAX glue (data-dependent row gather).
    return model["val_embed"][val] + model["coord_embed"][coord] + model["pos_embed"][pos]


def build_masks(b, s):
    n = b * s
    r = jnp.arange(n)[:, None]
    c = jnp.arange(n)[None, :]
    same = (r // s) == (c // s)                                       # same batch element
    enc_bias = jnp.where(same, 0.0, NEG).astype(jnp.float32)          # no causal mask
    dec_bias = jnp.where(same & (c <= r), 0.0, NEG).astype(jnp.float32)
    sel = ((r % s == 0) & (c == r + (s - 1))).astype(jnp.float32)     # last token -> t=0 row
    return jnp.stack([enc_bias, dec_bias, sel], axis=0)               # (3, n, n)


@jax.jit
def primitive_ae_forward(params, src_val, src_coord, src_pos):
    b, s = src_val.shape
    n = b * s
    enc, dec = params["encoder"], params["decoder"]

    enc_emb = embed_tokens(enc, src_val, src_coord, src_pos).reshape(n, EMBED_DIM)
    dec_emb = embed_tokens(dec, src_val, src_coord, src_pos).reshape(n, EMBED_DIM)
    masks = build_masks(b, s)

    logits_pad = pl.pallas_call(
        fused_ae_kernel,
        out_shape=jax.ShapeDtypeStruct((n, LANE), jnp.float32),
    )(enc_emb, dec_emb, masks,
      enc["big"], enc["ff2"], enc["small"],
      dec["big"], dec["ff2"], dec["small"],
      dec["out_wb"])

    return logits_pad[:, :NUM_VAL].reshape(b, s, NUM_VAL)


# ----------------------------------- main -------------------------------------
if __name__ == "__main__":
    key = jax.random.PRNGKey(0)
    k_enc, k_dec, kv, kc, kp = jax.random.split(key, 5)

    params = dict(
        encoder=pack_prim_model(init_prim_model(k_enc, linear_decode_flag=False)),
        decoder=pack_prim_model(init_prim_model(k_dec, linear_decode_flag=True)),
    )

    src_val = jax.random.randint(kv, (B, S), 0, NUM_VAL, dtype=jnp.int32)
    src_coord = jax.random.randint(kc, (B, S), 0, NUM_COORD, dtype=jnp.int32)
    src_pos = jax.random.randint(kp, (B, S), 0, NUM_POS, dtype=jnp.int32)

    out = primitive_ae_forward(params, src_val, src_coord, src_pos)
    out = jax.block_until_ready(out)

    assert out.shape == (B, S, NUM_VAL), out.shape
    assert bool(jnp.all(jnp.isfinite(out)))
    print("KERNEL_OK")
</pallas_src>

<mosaic_0001>
module attributes {stable_mosaic.version = 11 : i64} {
  func.func @fused_ae_kernel(%arg0: memref<16x32xf32, #tpu.memory_space<vmem>>, %arg1: memref<16x32xf32, #tpu.memory_space<vmem>>, %arg2: memref<3x16x16xf32, #tpu.memory_space<vmem>>, %arg3: memref<2x32x192xf32, #tpu.memory_space<vmem>>, %arg4: memref<2x64x32xf32, #tpu.memory_space<vmem>>, %arg5: memref<2x8x128xf32, #tpu.memory_space<vmem>>, %arg6: memref<2x32x192xf32, #tpu.memory_space<vmem>>, %arg7: memref<2x64x32xf32, #tpu.memory_space<vmem>>, %arg8: memref<2x8x128xf32, #tpu.memory_space<vmem>>, %arg9: memref<33x128xf32, #tpu.memory_space<vmem>>, %arg10: memref<16x128xf32, #tpu.memory_space<vmem>>) attributes {dimension_semantics = [], scalar_prefetch = 0 : i64, scratch_operands = 0 : i64, tpu.core_type = #tpu.core_type<tc>} {
    %c0 = arith.constant 0 : index
    %c0_0 = arith.constant 0 : index
    %c0_1 = arith.constant 0 : index
    %0 = vector.load %arg2[%c0, %c0_0, %c0_1] : memref<3x16x16xf32, #tpu.memory_space<vmem>>, vector<1x16x16xf32>
    %1 = vector.shape_cast %0 : vector<1x16x16xf32> to vector<16x16xf32>
    %c1 = arith.constant 1 : index
    %c0_2 = arith.constant 0 : index
    %c0_3 = arith.constant 0 : index
    %2 = vector.load %arg2[%c1, %c0_2, %c0_3] : memref<3x16x16xf32, #tpu.memory_space<vmem>>, vector<1x16x16xf32>
    %3 = vector.shape_cast %2 : vector<1x16x16xf32> to vector<16x16xf32>
    %c2 = arith.constant 2 : index
    %c0_4 = arith.constant 0 : index
    %c0_5 = arith.constant 0 : index
    %4 = vector.load %arg2[%c2, %c0_4, %c0_5] : memref<3x16x16xf32, #tpu.memory_space<vmem>>, vector<1x16x16xf32>
    %5 = vector.shape_cast %4 : vector<1x16x16xf32> to vector<16x16xf32>
    %c0_6 = arith.constant 0 : index
    %c0_7 = arith.constant 0 : index
    %6 = vector.load %arg0[%c0_6, %c0_7] : memref<16x32xf32, #tpu.memory_space<vmem>>, vector<16x32xf32>
    %c0_8 = arith.constant 0 : index
    %c0_9 = arith.constant 0 : index
    %c0_10 = arith.constant 0 : index
    %7 = vector.load %arg3[%c0_8, %c0_9, %c0_10] : memref<2x32x192xf32, #tpu.memory_space<vmem>>, vector<1x32x192xf32>
    %8 = vector.shape_cast %7 : vector<1x32x192xf32> to vector<32x192xf32>
    %c0_11 = arith.constant 0 : index
    %c0_12 = arith.constant 0 : index
    %c0_13 = arith.constant 0 : index
    %9 = vector.load %arg4[%c0_11, %c0_12, %c0_13] : memref<2x64x32xf32, #tpu.memory_space<vmem>>, vector<1x64x32xf32>
    %10 = vector.shape_cast %9 : vector<1x64x32xf32> to vector<64x32xf32>
    %c0_14 = arith.constant 0 : index
    %c0_15 = arith.constant 0 : index
    %c0_16 = arith.constant 0 : index
    %11 = vector.load %arg5[%c0_14, %c0_15, %c0_16] : memref<2x8x128xf32, #tpu.memory_space<vmem>>, vector<1x8x128xf32>
    %12 = vector.shape_cast %11 : vector<1x8x128xf32> to vector<8x128xf32>
    %13 = vector.extract_strided_slice %8 {offsets = [0, 0], sizes = [32, 96], strides = [1, 1]} : vector<32x192xf32> to vector<32x96xf32>
    %14 = vector.extract_strided_slice %8 {offsets = [0, 96], sizes = [32, 32], strides = [1, 1]} : vector<32x192xf32> to vector<32x32xf32>
    %15 = vector.extract_strided_slice %8 {offsets = [0, 128], sizes = [32, 64], strides = [1, 1]} : vector<32x192xf32> to vector<32x64xf32>
    %16 = vector.extract_strided_slice %12 {offsets = [0, 0], sizes = [1, 96], strides = [1, 1]} : vector<8x128xf32> to vector<1x96xf32>
    %17 = vector.extract_strided_slice %12 {offsets = [1, 0], sizes = [1, 32], strides = [1, 1]} : vector<8x128xf32> to vector<1x32xf32>
    %18 = vector.extract_strided_slice %12 {offsets = [2, 0], sizes = [1, 32], strides = [1, 1]} : vector<8x128xf32> to vector<1x32xf32>
    %19 = vector.extract_strided_slice %12 {offsets = [3, 0], sizes = [1, 32], strides = [1, 1]} : vector<8x128xf32> to vector<1x32xf32>
    %20 = vector.extract_strided_slice %12 {offsets = [4, 0], sizes = [1, 64], strides = [1, 1]} : vector<8x128xf32> to vector<1x64xf32>
    %21 = vector.extract_strided_slice %12 {offsets = [5, 0], sizes = [1, 32], strides = [1, 1]} : vector<8x128xf32> to vector<1x32xf32>
    %22 = vector.extract_strided_slice %12 {offsets = [6, 0], sizes = [1, 32], strides = [1, 1]} : vector<8x128xf32> to vector<1x32xf32>
    %23 = vector.extract_strided_slice %12 {offsets = [7, 0], sizes = [1, 32], strides = [1, 1]} : vector<8x128xf32> to vector<1x32xf32>
    %cst = arith.constant dense<0.000000e+00> : vector<16x96xf32>
    %24 = tpu.matmul %6, %13, %cst {dimension_numbers = #tpu.dot_dimension_numbers<[1], [0], [0], [1], [0, 0, 1, 1], [], []>} : vector<16x32xf32>, vector<32x96xf32>, vector<16x96xf32> -> vector<16x96xf32>
    %25 = vector.broadcast %16 : vector<1x96xf32> to vector<16x96xf32>
    %26 = arith.addf %24, %25 : vector<16x96xf32>
    %cst_17 = arith.constant 0.000000e+00 : f32
    %27 = vector.broadcast %cst_17 : f32 to vector<16x32xf32>
    %28 = vector.extract_strided_slice %26 {offsets = [0, 0], sizes = [16, 16], strides = [1, 1]} : vector<16x96xf32> to vector<16x16xf32>
    %29 = vector.extract_strided_slice %26 {offsets = [0, 32], sizes = [16, 16], strides = [1, 1]} : vector<16x96xf32> to vector<16x16xf32>
    %30 = vector.extract_strided_slice %26 {offsets = [0, 64], sizes = [16, 16], strides = [1, 1]} : vector<16x96xf32> to vector<16x16xf32>
    %cst_18 = arith.constant dense<0.000000e+00> : vector<16x16xf32>
    %31 = tpu.matmul %28, %29, %cst_18 {dimension_numbers = #tpu.dot_dimension_numbers<[1], [1], [0], [0], [0, 0, 1, 0], [], []>} : vector<16x16xf32>, vector<16x16xf32>, vector<16x16xf32> -> vector<16x16xf32>
    %cst_19 = arith.constant 2.500000e-01 : f32
    %32 = vector.broadcast %cst_19 : f32 to vector<16x16xf32>
    %33 = arith.mulf %31, %32 : vector<16x16xf32>
    %34 = arith.addf %33, %1 : vector<16x16xf32>
    %cst_20 = arith.constant dense<0xFF800000> : vector<16xf32>
    %35 = vector.multi_reduction <maximumf>, %34, %cst_20 [1] : vector<16x16xf32> to vector<16xf32>
    %36 = vector.shape_cast %35 : vector<16xf32> to vector<16x1xf32>
    %37 = vector.broadcast %36 : vector<16x1xf32> to vector<16x16xf32>
    %38 = arith.subf %34, %37 : vector<16x16xf32>
    %39 = math.exp %38 : vector<16x16xf32>
    %cst_21 = arith.constant dense<0.000000e+00> : vector<16xf32>
    %40 = vector.multi_reduction <add>, %39, %cst_21 [1] : vector<16x16xf32> to vector<16xf32>
    %41 = vector.shape_cast %40 : vector<16xf32> to vector<16x1xf32>
    %42 = tpu.reciprocal %41 {approx = true} : vector<16x1xf32> -> vector<16x1xf32>
    %43 = vector.broadcast %42 : vector<16x1xf32> to vector<16x16xf32>
    %44 = arith.mulf %39, %43 : vector<16x16xf32>
    %cst_22 = arith.constant dense<0.000000e+00> : vector<16x16xf32>
    %45 = tpu.matmul %44, %30, %cst_22 {dimension_numbers = #tpu.dot_dimension_numbers<[1], [0], [0], [1], [0, 0, 1, 1], [], []>} : vector<16x16xf32>, vector<16x16xf32>, vector<16x16xf32> -> vector<16x16xf32>
    %46 = vector.extract_strided_slice %14 {offsets = [0, 0], sizes = [16, 32], strides = [1, 1]} : vector<32x32xf32> to vector<16x32xf32>
    %cst_23 = arith.constant dense<0.000000e+00> : vector<16x32xf32>
    %47 = tpu.matmul %45, %46, %cst_23 {dimension_numbers = #tpu.dot_dimension_numbers<[1], [0], [0], [1], [0, 0, 1, 1], [], []>} : vector<16x16xf32>, vector<16x32xf32>, vector<16x32xf32> -> vector<16x32xf32>
    %48 = arith.addf %27, %47 : vector<16x32xf32>
    %49 = vector.extract_strided_slice %26 {offsets = [0, 16], sizes = [16, 16], strides = [1, 1]} : vector<16x96xf32> to vector<16x16xf32>
    %50 = vector.extract_strided_slice %26 {offsets = [0, 48], sizes = [16, 16], strides = [1, 1]} : vector<16x96xf32> to vector<16x16xf32>
    %51 = vector.extract_strided_slice %26 {offsets = [0, 80], sizes = [16, 16], strides = [1, 1]} : vector<16x96xf32> to vector<16x16xf32>
    %cst_24 = arith.constant dense<0.000000e+00> : vector<16x16xf32>
    %52 = tpu.matmul %49, %50, %cst_24 {dimension_numbers = #tpu.dot_dimension_numbers<[1], [1], [0], [0], [0, 0, 1, 0], [], []>} : vector<16x16xf32>, vector<16x16xf32>, vector<16x16xf32> -> vector<16x16xf32>
    %cst_25 = arith.constant 2.500000e-01 : f32
    %53 = vector.broadcast %cst_25 : f32 to vector<16x16xf32>
    %54 = arith.mulf %52, %53 : vector<16x16xf32>
    %55 = arith.addf %54, %1 : vector<16x16xf32>
    %cst_26 = arith.constant dense<0xFF800000> : vector<16xf32>
    %56 = vector.multi_reduction <maximumf>, %55, %cst_26 [1] : vector<16x16xf32> to vector<16xf32>
    %57 = vector.shape_cast %56 : vector<16xf32> to vector<16x1xf32>
    %58 = vector.broadcast %57 : vector<16x1xf32> to vector<16x16xf32>
    %59 = arith.subf %55, %58 : vector<16x16xf32>
    %60 = math.exp %59 : vector<16x16xf32>
    %cst_27 = arith.constant dense<0.000000e+00> : vector<16xf32>
    %61 = vector.multi_reduction <add>, %60, %cst_27 [1] : vector<16x16xf32> to vector<16xf32>
    %62 = vector.shape_cast %61 : vector<16xf32> to vector<16x1xf32>
    %63 = tpu.reciprocal %62 {approx = true} : vector<16x1xf32> -> vector<16x1xf32>
    %64 = vector.broadcast %63 : vector<16x1xf32> to vector<16x16xf32>
    %65 = arith.mulf %60, %64 : vector<16x16xf32>
    %cst_28 = arith.constant dense<0.000000e+00> : vector<16x16xf32>
    %66 = tpu.matmul %65, %51, %cst_28 {dimension_numbers = #tpu.dot_dimension_numbers<[1], [0], [0], [1], [0, 0, 1, 1], [], []>} : vector<16x16xf32>, vector<16x16xf32>, vector<16x16xf32> -> vector<16x16xf32>
    %67 = vector.extract_strided_slice %14 {offsets = [16, 0], sizes = [16, 32], strides = [1, 1]} : vector<32x32xf32> to vector<16x32xf32>
    %cst_29 = arith.constant dense<0.000000e+00> : vector<16x32xf32>
    %68 = tpu.matmul %66, %67, %cst_29 {dimension_numbers = #tpu.dot_dimension_numbers<[1], [0], [0], [1], [0, 0, 1, 1], [], []>} : vector<16x16xf32>, vector<16x32xf32>, vector<16x32xf32> -> vector<16x32xf32>
    %69 = arith.addf %48, %68 : vector<16x32xf32>
    %70 = vector.broadcast %17 : vector<1x32xf32> to vector<16x32xf32>
    %71 = arith.addf %69, %70 : vector<16x32xf32>
    %72 = arith.addf %6, %71 : vector<16x32xf32>
    %cst_30 = arith.constant dense<0.000000e+00> : vector<16xf32>
    %73 = vector.multi_reduction <add>, %72, %cst_30 [1] : vector<16x32xf32> to vector<16xf32>
    %74 = vector.shape_cast %73 : vector<16xf32> to vector<16x1xf32>
    %cst_31 = arith.constant 3.200000e+01 : f32
    %75 = vector.broadcast %cst_31 : f32 to vector<16x1xf32>
    %76 = arith.divf %74, %75 : vector<16x1xf32>
    %77 = vector.broadcast %76 : vector<16x1xf32> to vector<16x32xf32>
    %78 = arith.subf %72, %77 : vector<16x32xf32>
    %79 = arith.mulf %78, %78 : vector<16x32xf32>
    %cst_32 = arith.constant dense<0.000000e+00> : vector<16xf32>
    %80 = vector.multi_reduction <add>, %79, %cst_32 [1] : vector<16x32xf32> to vector<16xf32>
    %81 = vector.shape_cast %80 : vector<16xf32> to vector<16x1xf32>
    %cst_33 = arith.constant 3.200000e+01 : f32
    %82 = vector.broadcast %cst_33 : f32 to vector<16x1xf32>
    %83 = arith.divf %81, %82 : vector<16x1xf32>
    %cst_34 = arith.constant 9.99999974E-6 : f32
    %84 = vector.broadcast %cst_34 : f32 to vector<16x1xf32>
    %85 = arith.addf %83, %84 : vector<16x1xf32>
    %86 = math.rsqrt %85 : vector<16x1xf32>
    %87 = vector.broadcast %86 : vector<16x1xf32> to vector<16x32xf32>
    %88 = arith.mulf %78, %87 : vector<16x32xf32>
    %89 = vector.broadcast %18 : vector<1x32xf32> to vector<16x32xf32>
    %90 = arith.mulf %88, %89 : vector<16x32xf32>
    %91 = vector.broadcast %19 : vector<1x32xf32> to vector<16x32xf32>
    %92 = arith.addf %90, %91 : vector<16x32xf32>
    %cst_35 = arith.constant dense<0.000000e+00> : vector<16x64xf32>
    %93 = tpu.matmul %92, %15, %cst_35 {dimension_numbers = #tpu.dot_dimension_numbers<[1], [0], [0], [1], [0, 0, 1, 1], [], []>} : vector<16x32xf32>, vector<32x64xf32>, vector<16x64xf32> -> vector<16x64xf32>
    %94 = vector.broadcast %20 : vector<1x64xf32> to vector<16x64xf32>
    %95 = arith.addf %93, %94 : vector<16x64xf32>
    %cst_36 = arith.constant 0.000000e+00 : f32
    %96 = vector.broadcast %cst_36 : f32 to vector<16x64xf32>
    %97 = arith.maximumf %95, %96 : vector<16x64xf32>
    %cst_37 = arith.constant dense<0.000000e+00> : vector<16x32xf32>
    %98 = tpu.matmul %97, %10, %cst_37 {dimension_numbers = #tpu.dot_dimension_numbers<[1], [0], [0], [1], [0, 0, 1, 1], [], []>} : vector<16x64xf32>, vector<64x32xf32>, vector<16x32xf32> -> vector<16x32xf32>
    %99 = vector.broadcast %21 : vector<1x32xf32> to vector<16x32xf32>
    %100 = arith.addf %98, %99 : vector<16x32xf32>
    %101 = arith.addf %92, %100 : vector<16x32xf32>
    %cst_38 = arith.constant dense<0.000000e+00> : vector<16xf32>
    %102 = vector.multi_reduction <add>, %101, %cst_38 [1] : vector<16x32xf32> to vector<16xf32>
    %103 = vector.shape_cast %102 : vector<16xf32> to vector<16x1xf32>
    %cst_39 = arith.constant 3.200000e+01 : f32
    %104 = vector.broadcast %cst_39 : f32 to vector<16x1xf32>
    %105 = arith.divf %103, %104 : vector<16x1xf32>
    %106 = vector.broadcast %105 : vector<16x1xf32> to vector<16x32xf32>
    %107 = arith.subf %101, %106 : vector<16x32xf32>
    %108 = arith.mulf %107, %107 : vector<16x32xf32>
    %cst_40 = arith.constant dense<0.000000e+00> : vector<16xf32>
    %109 = vector.multi_reduction <add>, %108, %cst_40 [1] : vector<16x32xf32> to vector<16xf32>
    %110 = vector.shape_cast %109 : vector<16xf32> to vector<16x1xf32>
    %cst_41 = arith.constant 3.200000e+01 : f32
    %111 = vector.broadcast %cst_41 : f32 to vector<16x1xf32>
    %112 = arith.divf %110, %111 : vector<16x1xf32>
    %cst_42 = arith.constant 9.99999974E-6 : f32
    %113 = vector.broadcast %cst_42 : f32 to vector<16x1xf32>
    %114 = arith.addf %112, %113 : vector<16x1xf32>
    %115 = math.rsqrt %114 : vector<16x1xf32>
    %116 = vector.broadcast %115 : vector<16x1xf32> to vector<16x32xf32>
    %117 = arith.mulf %107, %116 : vector<16x32xf32>
    %118 = vector.broadcast %22 : vector<1x32xf32> to vector<16x32xf32>
    %119 = arith.mulf %117, %118 : vector<16x32xf32>
    %120 = vector.broadcast %23 : vector<1x32xf32> to vector<16x32xf32>
    %121 = arith.addf %119, %120 : vector<16x32xf32>
    %c1_43 = arith.constant 1 : index
    %c0_44 = arith.constant 0 : index
    %c0_45 = arith.constant 0 : index
    %122 = vector.load %arg3[%c1_43, %c0_44, %c0_45] : memref<2x32x192xf32, #tpu.memory_space<vmem>>, vector<1x32x192xf32>
    %123 = vector.shape_cast %122 : vector<1x32x192xf32> to vector<32x192xf32>
    %c1_46 = arith.constant 1 : index
    %c0_47 = arith.constant 0 : index
    %c0_48 = arith.constant 0 : index
    %124 = vector.load %arg4[%c1_46, %c0_47, %c0_48] : memref<2x64x32xf32, #tpu.memory_space<vmem>>, vector<1x64x32xf32>
    %125 = vector.shape_cast %124 : vector<1x64x32xf32> to vector<64x32xf32>
    %c1_49 = arith.constant 1 : index
    %c0_50 = arith.constant 0 : index
    %c0_51 = arith.constant 0 : index
    %126 = vector.load %arg5[%c1_49, %c0_50, %c0_51] : memref<2x8x128xf32, #tpu.memory_space<vmem>>, vector<1x8x128xf32>
    %127 = vector.shape_cast %126 : vector<1x8x128xf32> to vector<8x128xf32>
    %128 = vector.extract_strided_slice %123 {offsets = [0, 0], sizes = [32, 96], strides = [1, 1]} : vector<32x192xf32> to vector<32x96xf32>
    %129 = vector.extract_strided_slice %123 {offsets = [0, 96], sizes = [32, 32], strides = [1, 1]} : vector<32x192xf32> to vector<32x32xf32>
    %130 = vector.extract_strided_slice %123 {offsets = [0, 128], sizes = [32, 64], strides = [1, 1]} : vector<32x192xf32> to vector<32x64xf32>
    %131 = vector.extract_strided_slice %127 {offsets = [0, 0], sizes = [1, 96], strides = [1, 1]} : vector<8x128xf32> to vector<1x96xf32>
    %132 = vector.extract_strided_slice %127 {offsets = [1, 0], sizes = [1, 32], strides = [1, 1]} : vector<8x128xf32> to vector<1x32xf32>
    %133 = vector.extract_strided_slice %127 {offsets = [2, 0], sizes = [1, 32], strides = [1, 1]} : vector<8x128xf32> to vector<1x32xf32>
    %134 = vector.extract_strided_slice %127 {offsets = [3, 0], sizes = [1, 32], strides = [1, 1]} : vector<8x128xf32> to vector<1x32xf32>
    %135 = vector.extract_strided_slice %127 {offsets = [4, 0], sizes = [1, 64], strides = [1, 1]} : vector<8x128xf32> to vector<1x64xf32>
    %136 = vector.extract_strided_slice %127 {offsets = [5, 0], sizes = [1, 32], strides = [1, 1]} : vector<8x128xf32> to vector<1x32xf32>
    %137 = vector.extract_strided_slice %127 {offsets = [6, 0], sizes = [1, 32], strides = [1, 1]} : vector<8x128xf32> to vector<1x32xf32>
    %138 = vector.extract_strided_slice %127 {offsets = [7, 0], sizes = [1, 32], strides = [1, 1]} : vector<8x128xf32> to vector<1x32xf32>
    %cst_52 = arith.constant dense<0.000000e+00> : vector<16x96xf32>
    %139 = tpu.matmul %121, %128, %cst_52 {dimension_numbers = #tpu.dot_dimension_numbers<[1], [0], [0], [1], [0, 0, 1, 1], [], []>} : vector<16x32xf32>, vector<32x96xf32>, vector<16x96xf32> -> vector<16x96xf32>
    %140 = vector.broadcast %131 : vector<1x96xf32> to vector<16x96xf32>
    %141 = arith.addf %139, %140 : vector<16x96xf32>
    %cst_53 = arith.constant 0.000000e+00 : f32
    %142 = vector.broadcast %cst_53 : f32 to vector<16x32xf32>
    %143 = vector.extract_strided_slice %141 {offsets = [0, 0], sizes = [16, 16], strides = [1, 1]} : vector<16x96xf32> to vector<16x16xf32>
    %144 = vector.extract_strided_slice %141 {offsets = [0, 32], sizes = [16, 16], strides = [1, 1]} : vector<16x96xf32> to vector<16x16xf32>
    %145 = vector.extract_strided_slice %141 {offsets = [0, 64], sizes = [16, 16], strides = [1, 1]} : vector<16x96xf32> to vector<16x16xf32>
    %cst_54 = arith.constant dense<0.000000e+00> : vector<16x16xf32>
    %146 = tpu.matmul %143, %144, %cst_54 {dimension_numbers = #tpu.dot_dimension_numbers<[1], [1], [0], [0], [0, 0, 1, 0], [], []>} : vector<16x16xf32>, vector<16x16xf32>, vector<16x16xf32> -> vector<16x16xf32>
    %cst_55 = arith.constant 2.500000e-01 : f32
    %147 = vector.broadcast %cst_55 : f32 to vector<16x16xf32>
    %148 = arith.mulf %146, %147 : vector<16x16xf32>
    %149 = arith.addf %148, %1 : vector<16x16xf32>
    %cst_56 = arith.constant dense<0xFF800000> : vector<16xf32>
    %150 = vector.multi_reduction <maximumf>, %149, %cst_56 [1] : vector<16x16xf32> to vector<16xf32>
    %151 = vector.shape_cast %150 : vector<16xf32> to vector<16x1xf32>
    %152 = vector.broadcast %151 : vector<16x1xf32> to vector<16x16xf32>
    %153 = arith.subf %149, %152 : vector<16x16xf32>
    %154 = math.exp %153 : vector<16x16xf32>
    %cst_57 = arith.constant dense<0.000000e+00> : vector<16xf32>
    %155 = vector.multi_reduction <add>, %154, %cst_57 [1] : vector<16x16xf32> to vector<16xf32>
    %156 = vector.shape_cast %155 : vector<16xf32> to vector<16x1xf32>
    %157 = tpu.reciprocal %156 {approx = true} : vector<16x1xf32> -> vector<16x1xf32>
    %158 = vector.broadcast %157 : vector<16x1xf32> to vector<16x16xf32>
    %159 = arith.mulf %154, %158 : vector<16x16xf32>
    %cst_58 = arith.constant dense<0.000000e+00> : vector<16x16xf32>
    %160 = tpu.matmul %159, %145, %cst_58 {dimension_numbers = #tpu.dot_dimension_numbers<[1], [0], [0], [1], [0, 0, 1, 1], [], []>} : vector<16x16xf32>, vector<16x16xf32>, vector<16x16xf32> -> vector<16x16xf32>
    %161 = vector.extract_strided_slice %129 {offsets = [0, 0], sizes = [16, 32], strides = [1, 1]} : vector<32x32xf32> to vector<16x32xf32>
    %cst_59 = arith.constant dense<0.000000e+00> : vector<16x32xf32>
    %162 = tpu.matmul %160, %161, %cst_59 {dimension_numbers = #tpu.dot_dimension_numbers<[1], [0], [0], [1], [0, 0, 1, 1], [], []>} : vector<16x16xf32>, vector<16x32xf32>, vector<16x32xf32> -> vector<16x32xf32>
    %163 = arith.addf %142, %162 : vector<16x32xf32>
    %164 = vector.extract_strided_slice %141 {offsets = [0, 16], sizes = [16, 16], strides = [1, 1]} : vector<16x96xf32> to vector<16x16xf32>
    %165 = vector.extract_strided_slice %141 {offsets = [0, 48], sizes = [16, 16], strides = [1, 1]} : vector<16x96xf32> to vector<16x16xf32>
    %166 = vector.extract_strided_slice %141 {offsets = [0, 80], sizes = [16, 16], strides = [1, 1]} : vector<16x96xf32> to vector<16x16xf32>
    %cst_60 = arith.constant dense<0.000000e+00> : vector<16x16xf32>
    %167 = tpu.matmul %164, %165, %cst_60 {dimension_numbers = #tpu.dot_dimension_numbers<[1], [1], [0], [0], [0, 0, 1, 0], [], []>} : vector<16x16xf32>, vector<16x16xf32>, vector<16x16xf32> -> vector<16x16xf32>
    %cst_61 = arith.constant 2.500000e-01 : f32
    %168 = vector.broadcast %cst_61 : f32 to vector<16x16xf32>
    %169 = arith.mulf %167, %168 : vector<16x16xf32>
    %170 = arith.addf %169, %1 : vector<16x16xf32>
    %cst_62 = arith.constant dense<0xFF800000> : vector<16xf32>
    %171 = vector.multi_reduction <maximumf>, %170, %cst_62 [1] : vector<16x16xf32> to vector<16xf32>
    %172 = vector.shape_cast %171 : vector<16xf32> to vector<16x1xf32>
    %173 = vector.broadcast %172 : vector<16x1xf32> to vector<16x16xf32>
    %174 = arith.subf %170, %173 : vector<16x16xf32>
    %175 = math.exp %174 : vector<16x16xf32>
    %cst_63 = arith.constant dense<0.000000e+00> : vector<16xf32>
    %176 = vector.multi_reduction <add>, %175, %cst_63 [1] : vector<16x16xf32> to vector<16xf32>
    %177 = vector.shape_cast %176 : vector<16xf32> to vector<16x1xf32>
    %178 = tpu.reciprocal %177 {approx = true} : vector<16x1xf32> -> vector<16x1xf32>
    %179 = vector.broadcast %178 : vector<16x1xf32> to vector<16x16xf32>
    %180 = arith.mulf %175, %179 : vector<16x16xf32>
    %cst_64 = arith.constant dense<0.000000e+00> : vector<16x16xf32>
    %181 = tpu.matmul %180, %166, %cst_64 {dimension_numbers = #tpu.dot_dimension_numbers<[1], [0], [0], [1], [0, 0, 1, 1], [], []>} : vector<16x16xf32>, vector<16x16xf32>, vector<16x16xf32> -> vector<16x16xf32>
    %182 = vector.extract_strided_slice %129 {offsets = [16, 0], sizes = [16, 32], strides = [1, 1]} : vector<32x32xf32> to vector<16x32xf32>
    %cst_65 = arith.constant dense<0.000000e+00> : vector<16x32xf32>
    %183 = tpu.matmul %181, %182, %cst_65 {dimension_numbers = #tpu.dot_dimension_numbers<[1], [0], [0], [1], [0, 0, 1, 1], [], []>} : vector<16x16xf32>, vector<16x32xf32>, vector<16x32xf32> -> vector<16x32xf32>
    %184 = arith.addf %163, %183 : vector<16x32xf32>
    %185 = vector.broadcast %132 : vector<1x32xf32> to vector<16x32xf32>
    %186 = arith.addf %184, %185 : vector<16x32xf32>
    %187 = arith.addf %121, %186 : vector<16x32xf32>
    %cst_66 = arith.constant dense<0.000000e+00> : vector<16xf32>
    %188 = vector.multi_reduction <add>, %187, %cst_66 [1] : vector<16x32xf32> to vector<16xf32>
    %189 = vector.shape_cast %188 : vector<16xf32> to vector<16x1xf32>
    %cst_67 = arith.constant 3.200000e+01 : f32
    %190 = vector.broadcast %cst_67 : f32 to vector<16x1xf32>
    %191 = arith.divf %189, %190 : vector<16x1xf32>
    %192 = vector.broadcast %191 : vector<16x1xf32> to vector<16x32xf32>
    %193 = arith.subf %187, %192 : vector<16x32xf32>
    %194 = arith.mulf %193, %193 : vector<16x32xf32>
    %cst_68 = arith.constant dense<0.000000e+00> : vector<16xf32>
    %195 = vector.multi_reduction <add>, %194, %cst_68 [1] : vector<16x32xf32> to vector<16xf32>
    %196 = vector.shape_cast %195 : vector<16xf32> to vector<16x1xf32>
    %cst_69 = arith.constant 3.200000e+01 : f32
    %197 = vector.broadcast %cst_69 : f32 to vector<16x1xf32>
    %198 = arith.divf %196, %197 : vector<16x1xf32>
    %cst_70 = arith.constant 9.99999974E-6 : f32
    %199 = vector.broadcast %cst_70 : f32 to vector<16x1xf32>
    %200 = arith.addf %198, %199 : vector<16x1xf32>
    %201 = math.rsqrt %200 : vector<16x1xf32>
    %202 = vector.broadcast %201 : vector<16x1xf32> to vector<16x32xf32>
    %203 = arith.mulf %193, %202 : vector<16x32xf32>
    %204 = vector.broadcast %133 : vector<1x32xf32> to vector<16x32xf32>
    %205 = arith.mulf %203, %204 : vector<16x32xf32>
    %206 = vector.broadcast %134 : vector<1x32xf32> to vector<16x32xf32>
    %207 = arith.addf %205, %206 : vector<16x32xf32>
    %cst_71 = arith.constant dense<0.000000e+00> : vector<16x64xf32>
    %208 = tpu.matmul %207, %130, %cst_71 {dimension_numbers = #tpu.dot_dimension_numbers<[1], [0], [0], [1], [0, 0, 1, 1], [], []>} : vector<16x32xf32>, vector<32x64xf32>, vector<16x64xf32> -> vector<16x64xf32>
    %209 = vector.broadcast %135 : vector<1x64xf32> to vector<16x64xf32>
    %210 = arith.addf %208, %209 : vector<16x64xf32>
    %cst_72 = arith.constant 0.000000e+00 : f32
    %211 = vector.broadcast %cst_72 : f32 to vector<16x64xf32>
    %212 = arith.maximumf %210, %211 : vector<16x64xf32>
    %cst_73 = arith.constant dense<0.000000e+00> : vector<16x32xf32>
    %213 = tpu.matmul %212, %125, %cst_73 {dimension_numbers = #tpu.dot_dimension_numbers<[1], [0], [0], [1], [0, 0, 1, 1], [], []>} : vector<16x64xf32>, vector<64x32xf32>, vector<16x32xf32> -> vector<16x32xf32>
    %214 = vector.broadcast %136 : vector<1x32xf32> to vector<16x32xf32>
    %215 = arith.addf %213, %214 : vector<16x32xf32>
    %216 = arith.addf %207, %215 : vector<16x32xf32>
    %cst_74 = arith.constant dense<0.000000e+00> : vector<16xf32>
    %217 = vector.multi_reduction <add>, %216, %cst_74 [1] : vector<16x32xf32> to vector<16xf32>
    %218 = vector.shape_cast %217 : vector<16xf32> to vector<16x1xf32>
    %cst_75 = arith.constant 3.200000e+01 : f32
    %219 = vector.broadcast %cst_75 : f32 to vector<16x1xf32>
    %220 = arith.divf %218, %219 : vector<16x1xf32>
    %221 = vector.broadcast %220 : vector<16x1xf32> to vector<16x32xf32>
    %222 = arith.subf %216, %221 : vector<16x32xf32>
    %223 = arith.mulf %222, %222 : vector<16x32xf32>
    %cst_76 = arith.constant dense<0.000000e+00> : vector<16xf32>
    %224 = vector.multi_reduction <add>, %223, %cst_76 [1] : vector<16x32xf32> to vector<16xf32>
    %225 = vector.shape_cast %224 : vector<16xf32> to vector<16x1xf32>
    %cst_77 = arith.constant 3.200000e+01 : f32
    %226 = vector.broadcast %cst_77 : f32 to vector<16x1xf32>
    %227 = arith.divf %225, %226 : vector<16x1xf32>
    %cst_78 = arith.constant 9.99999974E-6 : f32
    %228 = vector.broadcast %cst_78 : f32 to vector<16x1xf32>
    %229 = arith.addf %227, %228 : vector<16x1xf32>
    %230 = math.rsqrt %229 : vector<16x1xf32>
    %231 = vector.broadcast %230 : vector<16x1xf32> to vector<16x32xf32>
    %232 = arith.mulf %222, %231 : vector<16x32xf32>
    %233 = vector.broadcast %137 : vector<1x32xf32> to vector<16x32xf32>
    %234 = arith.mulf %232, %233 : vector<16x32xf32>
    %235 = vector.broadcast %138 : vector<1x32xf32> to vector<16x32xf32>
    %236 = arith.addf %234, %235 : vector<16x32xf32>
    %cst_79 = arith.constant dense<0.000000e+00> : vector<16x32xf32>
    %237 = tpu.matmul %5, %236, %cst_79 {dimension_numbers = #tpu.dot_dimension_numbers<[1], [0], [0], [1], [0, 0, 1, 1], [], []>} : vector<16x16xf32>, vector<16x32xf32>, vector<16x32xf32> -> vector<16x32xf32>
    %238 = tpu.iota {dimensions = array<i32: 1>} : vector<16x32xi32>
    %c0_80 = arith.constant 0 : index
    %c0_81 = arith.constant 0 : index
    %239 = vector.load %arg1[%c0_80, %c0_81] : memref<16x32xf32, #tpu.memory_space<vmem>>, vector<16x32xf32>
    %c16_i32 = arith.constant 16 : i32
    %240 = vector.broadcast %c16_i32 : i32 to vector<16x32xi32>
    %241 = arith.cmpi slt, %238, %240 : vector<16x32xi32>
    %cst_82 = arith.constant 0.000000e+00 : f32
    %242 = vector.broadcast %cst_82 : f32 to vector<16x32xf32>
    %243 = arith.select %241, %237, %242 : vector<16x32xi1>, vector<16x32xf32>
    %244 = arith.addf %239, %243 : vector<16x32xf32>
    %c0_83 = arith.constant 0 : index
    %c0_84 = arith.constant 0 : index
    %c0_85 = arith.constant 0 : index
    %245 = vector.load %arg6[%c0_83, %c0_84, %c0_85] : memref<2x32x192xf32, #tpu.memory_space<vmem>>, vector<1x32x192xf32>
    %246 = vector.shape_cast %245 : vector<1x32x192xf32> to vector<32x192xf32>
    %c0_86 = arith.constant 0 : index
    %c0_87 = arith.constant 0 : index
    %c0_88 = arith.constant 0 : index
    %247 = vector.load %arg7[%c0_86, %c0_87, %c0_88] : memref<2x64x32xf32, #tpu.memory_space<vmem>>, vector<1x64x32xf32>
    %248 = vector.shape_cast %247 : vector<1x64x32xf32> to vector<64x32xf32>
    %c0_89 = arith.constant 0 : index
    %c0_90 = arith.constant 0 : index
    %c0_91 = arith.constant 0 : index
    %249 = vector.load %arg8[%c0_89, %c0_90, %c0_91] : memref<2x8x128xf32, #tpu.memory_space<vmem>>, vector<1x8x128xf32>
    %250 = vector.shape_cast %249 : vector<1x8x128xf32> to vector<8x128xf32>
    %251 = vector.extract_strided_slice %246 {offsets = [0, 0], sizes = [32, 96], strides = [1, 1]} : vector<32x192xf32> to vector<32x96xf32>
    %252 = vector.extract_strided_slice %246 {offsets = [0, 96], sizes = [32, 32], strides = [1, 1]} : vector<32x192xf32> to vector<32x32xf32>
    %253 = vector.extract_strided_slice %246 {offsets = [0, 128], sizes = [32, 64], strides = [1, 1]} : vector<32x192xf32> to vector<32x64xf32>
    %254 = vector.extract_strided_slice %250 {offsets = [0, 0], sizes = [1, 96], strides = [1, 1]} : vector<8x128xf32> to vector<1x96xf32>
    %255 = vector.extract_strided_slice %250 {offsets = [1, 0], sizes = [1, 32], strides = [1, 1]} : vector<8x128xf32> to vector<1x32xf32>
    %256 = vector.extract_strided_slice %250 {offsets = [2, 0], sizes = [1, 32], strides = [1, 1]} : vector<8x128xf32> to vector<1x32xf32>
    %257 = vector.extract_strided_slice %250 {offsets = [3, 0], sizes = [1, 32], strides = [1, 1]} : vector<8x128xf32> to vector<1x32xf32>
    %258 = vector.extract_strided_slice %250 {offsets = [4, 0], sizes = [1, 64], strides = [1, 1]} : vector<8x128xf32> to vector<1x64xf32>
    %259 = vector.extract_strided_slice %250 {offsets = [5, 0], sizes = [1, 32], strides = [1, 1]} : vector<8x128xf32> to vector<1x32xf32>
    %260 = vector.extract_strided_slice %250 {offsets = [6, 0], sizes = [1, 32], strides = [1, 1]} : vector<8x128xf32> to vector<1x32xf32>
    %261 = vector.extract_strided_slice %250 {offsets = [7, 0], sizes = [1, 32], strides = [1, 1]} : vector<8x128xf32> to vector<1x32xf32>
    %cst_92 = arith.constant dense<0.000000e+00> : vector<16x96xf32>
    %262 = tpu.matmul %244, %251, %cst_92 {dimension_numbers = #tpu.dot_dimension_numbers<[1], [0], [0], [1], [0, 0, 1, 1], [], []>} : vector<16x32xf32>, vector<32x96xf32>, vector<16x96xf32> -> vector<16x96xf32>
    %263 = vector.broadcast %254 : vector<1x96xf32> to vector<16x96xf32>
    %264 = arith.addf %262, %263 : vector<16x96xf32>
    %cst_93 = arith.constant 0.000000e+00 : f32
    %265 = vector.broadcast %cst_93 : f32 to vector<16x32xf32>
    %266 = vector.extract_strided_slice %264 {offsets = [0, 0], sizes = [16, 16], strides = [1, 1]} : vector<16x96xf32> to vector<16x16xf32>
    %267 = vector.extract_strided_slice %264 {offsets = [0, 32], sizes = [16, 16], strides = [1, 1]} : vector<16x96xf32> to vector<16x16xf32>
    %268 = vector.extract_strided_slice %264 {offsets = [0, 64], sizes = [16, 16], strides = [1, 1]} : vector<16x96xf32> to vector<16x16xf32>
    %cst_94 = arith.constant dense<0.000000e+00> : vector<16x16xf32>
    %269 = tpu.matmul %266, %267, %cst_94 {dimension_numbers = #tpu.dot_dimension_numbers<[1], [1], [0], [0], [0, 0, 1, 0], [], []>} : vector<16x16xf32>, vector<16x16xf32>, vector<16x16xf32> -> vector<16x16xf32>
    %cst_95 = arith.constant 2.500000e-01 : f32
    %270 = vector.broadcast %cst_95 : f32 to vector<16x16xf32>
    %271 = arith.mulf %269, %270 : vector<16x16xf32>
    %272 = arith.addf %271, %3 : vector<16x16xf32>
    %cst_96 = arith.constant dense<0xFF800000> : vector<16xf32>
    %273 = vector.multi_reduction <maximumf>, %272, %cst_96 [1] : vector<16x16xf32> to vector<16xf32>
    %274 = vector.shape_cast %273 : vector<16xf32> to vector<16x1xf32>
    %275 = vector.broadcast %274 : vector<16x1xf32> to vector<16x16xf32>
    %276 = arith.subf %272, %275 : vector<16x16xf32>
    %277 = math.exp %276 : vector<16x16xf32>
    %cst_97 = arith.constant dense<0.000000e+00> : vector<16xf32>
    %278 = vector.multi_reduction <add>, %277, %cst_97 [1] : vector<16x16xf32> to vector<16xf32>
    %279 = vector.shape_cast %278 : vector<16xf32> to vector<16x1xf32>
    %280 = tpu.reciprocal %279 {approx = true} : vector<16x1xf32> -> vector<16x1xf32>
    %281 = vector.broadcast %280 : vector<16x1xf32> to vector<16x16xf32>
    %282 = arith.mulf %277, %281 : vector<16x16xf32>
    %cst_98 = arith.constant dense<0.000000e+00> : vector<16x16xf32>
    %283 = tpu.matmul %282, %268, %cst_98 {dimension_numbers = #tpu.dot_dimension_numbers<[1], [0], [0], [1], [0, 0, 1, 1], [], []>} : vector<16x16xf32>, vector<16x16xf32>, vector<16x16xf32> -> vector<16x16xf32>
    %284 = vector.extract_strided_slice %252 {offsets = [0, 0], sizes = [16, 32], strides = [1, 1]} : vector<32x32xf32> to vector<16x32xf32>
    %cst_99 = arith.constant dense<0.000000e+00> : vector<16x32xf32>
    %285 = tpu.matmul %283, %284, %cst_99 {dimension_numbers = #tpu.dot_dimension_numbers<[1], [0], [0], [1], [0, 0, 1, 1], [], []>} : vector<16x16xf32>, vector<16x32xf32>, vector<16x32xf32> -> vector<16x32xf32>
    %286 = arith.addf %265, %285 : vector<16x32xf32>
    %287 = vector.extract_strided_slice %264 {offsets = [0, 16], sizes = [16, 16], strides = [1, 1]} : vector<16x96xf32> to vector<16x16xf32>
    %288 = vector.extract_strided_slice %264 {offsets = [0, 48], sizes = [16, 16], strides = [1, 1]} : vector<16x96xf32> to vector<16x16xf32>
    %289 = vector.extract_strided_slice %264 {offsets = [0, 80], sizes = [16, 16], strides = [1, 1]} : vector<16x96xf32> to vector<16x16xf32>
    %cst_100 = arith.constant dense<0.000000e+00> : vector<16x16xf32>
    %290 = tpu.matmul %287, %288, %cst_100 {dimension_numbers = #tpu.dot_dimension_numbers<[1], [1], [0], [0], [0, 0, 1, 0], [], []>} : vector<16x16xf32>, vector<16x16xf32>, vector<16x16xf32> -> vector<16x16xf32>
    %cst_101 = arith.constant 2.500000e-01 : f32
    %291 = vector.broadcast %cst_101 : f32 to vector<16x16xf32>
    %292 = arith.mulf %290, %291 : vector<16x16xf32>
    %293 = arith.addf %292, %3 : vector<16x16xf32>
    %cst_102 = arith.constant dense<0xFF800000> : vector<16xf32>
    %294 = vector.multi_reduction <maximumf>, %293, %cst_102 [1] : vector<16x16xf32> to vector<16xf32>
    %295 = vector.shape_cast %294 : vector<16xf32> to vector<16x1xf32>
    %296 = vector.broadcast %295 : vector<16x1xf32> to vector<16x16xf32>
    %297 = arith.subf %293, %296 : vector<16x16xf32>
    %298 = math.exp %297 : vector<16x16xf32>
    %cst_103 = arith.constant dense<0.000000e+00> : vector<16xf32>
    %299 = vector.multi_reduction <add>, %298, %cst_103 [1] : vector<16x16xf32> to vector<16xf32>
    %300 = vector.shape_cast %299 : vector<16xf32> to vector<16x1xf32>
    %301 = tpu.reciprocal %300 {approx = true} : vector<16x1xf32> -> vector<16x1xf32>
    %302 = vector.broadcast %301 : vector<16x1xf32> to vector<16x16xf32>
    %303 = arith.mulf %298, %302 : vector<16x16xf32>
    %cst_104 = arith.constant dense<0.000000e+00> : vector<16x16xf32>
    %304 = tpu.matmul %303, %289, %cst_104 {dimension_numbers = #tpu.dot_dimension_numbers<[1], [0], [0], [1], [0, 0, 1, 1], [], []>} : vector<16x16xf32>, vector<16x16xf32>, vector<16x16xf32> -> vector<16x16xf32>
    %305 = vector.extract_strided_slice %252 {offsets = [16, 0], sizes = [16, 32], strides = [1, 1]} : vector<32x32xf32> to vector<16x32xf32>
    %cst_105 = arith.constant dense<0.000000e+00> : vector<16x32xf32>
    %306 = tpu.matmul %304, %305, %cst_105 {dimension_numbers = #tpu.dot_dimension_numbers<[1], [0], [0], [1], [0, 0, 1, 1], [], []>} : vector<16x16xf32>, vector<16x32xf32>, vector<16x32xf32> -> vector<16x32xf32>
    %307 = arith.addf %286, %306 : vector<16x32xf32>
    %308 = vector.broadcast %255 : vector<1x32xf32> to vector<16x32xf32>
    %309 = arith.addf %307, %308 : vector<16x32xf32>
    %310 = arith.addf %244, %309 : vector<16x32xf32>
    %cst_106 = arith.constant dense<0.000000e+00> : vector<16xf32>
    %311 = vector.multi_reduction <add>, %310, %cst_106 [1] : vector<16x32xf32> to vector<16xf32>
    %312 = vector.shape_cast %311 : vector<16xf32> to vector<16x1xf32>
    %cst_107 = arith.constant 3.200000e+01 : f32
    %313 = vector.broadcast %cst_107 : f32 to vector<16x1xf32>
    %314 = arith.divf %312, %313 : vector<16x1xf32>
    %315 = vector.broadcast %314 : vector<16x1xf32> to vector<16x32xf32>
    %316 = arith.subf %310, %315 : vector<16x32xf32>
    %317 = arith.mulf %316, %316 : vector<16x32xf32>
    %cst_108 = arith.constant dense<0.000000e+00> : vector<16xf32>
    %318 = vector.multi_reduction <add>, %317, %cst_108 [1] : vector<16x32xf32> to vector<16xf32>
    %319 = vector.shape_cast %318 : vector<16xf32> to vector<16x1xf32>
    %cst_109 = arith.constant 3.200000e+01 : f32
    %320 = vector.broadcast %cst_109 : f32 to vector<16x1xf32>
    %321 = arith.divf %319, %320 : vector<16x1xf32>
    %cst_110 = arith.constant 9.99999974E-6 : f32
    %322 = vector.broadcast %cst_110 : f32 to vector<16x1xf32>
    %323 = arith.addf %321, %322 : vector<16x1xf32>
    %324 = math.rsqrt %323 : vector<16x1xf32>
    %325 = vector.broadcast %324 : vector<16x1xf32> to vector<16x32xf32>
    %326 = arith.mulf %316, %325 : vector<16x32xf32>
    %327 = vector.broadcast %256 : vector<1x32xf32> to vector<16x32xf32>
    %328 = arith.mulf %326, %327 : vector<16x32xf32>
    %329 = vector.broadcast %257 : vector<1x32xf32> to vector<16x32xf32>
    %330 = arith.addf %328, %329 : vector<16x32xf32>
    %cst_111 = arith.constant dense<0.000000e+00> : vector<16x64xf32>
    %331 = tpu.matmul %330, %253, %cst_111 {dimension_numbers = #tpu.dot_dimension_numbers<[1], [0], [0], [1], [0, 0, 1, 1], [], []>} : vector<16x32xf32>, vector<32x64xf32>, vector<16x64xf32> -> vector<16x64xf32>
    %332 = vector.broadcast %258 : vector<1x64xf32> to vector<16x64xf32>
    %333 = arith.addf %331, %332 : vector<16x64xf32>
    %cst_112 = arith.constant 0.000000e+00 : f32
    %334 = vector.broadcast %cst_112 : f32 to vector<16x64xf32>
    %335 = arith.maximumf %333, %334 : vector<16x64xf32>
    %cst_113 = arith.constant dense<0.000000e+00> : vector<16x32xf32>
    %336 = tpu.matmul %335, %248, %cst_113 {dimension_numbers = #tpu.dot_dimension_numbers<[1], [0], [0], [1], [0, 0, 1, 1], [], []>} : vector<16x64xf32>, vector<64x32xf32>, vector<16x32xf32> -> vector<16x32xf32>
    %337 = vector.broadcast %259 : vector<1x32xf32> to vector<16x32xf32>
    %338 = arith.addf %336, %337 : vector<16x32xf32>
    %339 = arith.addf %330, %338 : vector<16x32xf32>
    %cst_114 = arith.constant dense<0.000000e+00> : vector<16xf32>
    %340 = vector.multi_reduction <add>, %339, %cst_114 [1] : vector<16x32xf32> to vector<16xf32>
    %341 = vector.shape_cast %340 : vector<16xf32> to vector<16x1xf32>
    %cst_115 = arith.constant 3.200000e+01 : f32
    %342 = vector.broadcast %cst_115 : f32 to vector<16x1xf32>
    %343 = arith.divf %341, %342 : vector<16x1xf32>
    %344 = vector.broadcast %343 : vector<16x1xf32> to vector<16x32xf32>
    %345 = arith.subf %339, %344 : vector<16x32xf32>
    %346 = arith.mulf %345, %345 : vector<16x32xf32>
    %cst_116 = arith.constant dense<0.000000e+00> : vector<16xf32>
    %347 = vector.multi_reduction <add>, %346, %cst_116 [1] : vector<16x32xf32> to vector<16xf32>
    %348 = vector.shape_cast %347 : vector<16xf32> to vector<16x1xf32>
    %cst_117 = arith.constant 3.200000e+01 : f32
    %349 = vector.broadcast %cst_117 : f32 to vector<16x1xf32>
    %350 = arith.divf %348, %349 : vector<16x1xf32>
    %cst_118 = arith.constant 9.99999974E-6 : f32
    %351 = vector.broadcast %cst_118 : f32 to vector<16x1xf32>
    %352 = arith.addf %350, %351 : vector<16x1xf32>
    %353 = math.rsqrt %352 : vector<16x1xf32>
    %354 = vector.broadcast %353 : vector<16x1xf32> to vector<16x32xf32>
    %355 = arith.mulf %345, %354 : vector<16x32xf32>
    %356 = vector.broadcast %260 : vector<1x32xf32> to vector<16x32xf32>
    %357 = arith.mulf %355, %356 : vector<16x32xf32>
    %358 = vector.broadcast %261 : vector<1x32xf32> to vector<16x32xf32>
    %359 = arith.addf %357, %358 : vector<16x32xf32>
    %c1_119 = arith.constant 1 : index
    %c0_120 = arith.constant 0 : index
    %c0_121 = arith.constant 0 : index
    %360 = vector.load %arg6[%c1_119, %c0_120, %c0_121] : memref<2x32x192xf32, #tpu.memory_space<vmem>>, vector<1x32x192xf32>
    %361 = vector.shape_cast %360 : vector<1x32x192xf32> to vector<32x192xf32>
    %c1_122 = arith.constant 1 : index
    %c0_123 = arith.constant 0 : index
    %c0_124 = arith.constant 0 : index
    %362 = vector.load %arg7[%c1_122, %c0_123, %c0_124] : memref<2x64x32xf32, #tpu.memory_space<vmem>>, vector<1x64x32xf32>
    %363 = vector.shape_cast %362 : vector<1x64x32xf32> to vector<64x32xf32>
    %c1_125 = arith.constant 1 : index
    %c0_126 = arith.constant 0 : index
    %c0_127 = arith.constant 0 : index
    %364 = vector.load %arg8[%c1_125, %c0_126, %c0_127] : memref<2x8x128xf32, #tpu.memory_space<vmem>>, vector<1x8x128xf32>
    %365 = vector.shape_cast %364 : vector<1x8x128xf32> to vector<8x128xf32>
    %366 = vector.extract_strided_slice %361 {offsets = [0, 0], sizes = [32, 96], strides = [1, 1]} : vector<32x192xf32> to vector<32x96xf32>
    %367 = vector.extract_strided_slice %361 {offsets = [0, 96], sizes = [32, 32], strides = [1, 1]} : vector<32x192xf32> to vector<32x32xf32>
    %368 = vector.extract_strided_slice %361 {offsets = [0, 128], sizes = [32, 64], strides = [1, 1]} : vector<32x192xf32> to vector<32x64xf32>
    %369 = vector.extract_strided_slice %365 {offsets = [0, 0], sizes = [1, 96], strides = [1, 1]} : vector<8x128xf32> to vector<1x96xf32>
    %370 = vector.extract_strided_slice %365 {offsets = [1, 0], sizes = [1, 32], strides = [1, 1]} : vector<8x128xf32> to vector<1x32xf32>
    %371 = vector.extract_strided_slice %365 {offsets = [2, 0], sizes = [1, 32], strides = [1, 1]} : vector<8x128xf32> to vector<1x32xf32>
    %372 = vector.extract_strided_slice %365 {offsets = [3, 0], sizes = [1, 32], strides = [1, 1]} : vector<8x128xf32> to vector<1x32xf32>
    %373 = vector.extract_strided_slice %365 {offsets = [4, 0], sizes = [1, 64], strides = [1, 1]} : vector<8x128xf32> to vector<1x64xf32>
    %374 = vector.extract_strided_slice %365 {offsets = [5, 0], sizes = [1, 32], strides = [1, 1]} : vector<8x128xf32> to vector<1x32xf32>
    %375 = vector.extract_strided_slice %365 {offsets = [6, 0], sizes = [1, 32], strides = [1, 1]} : vector<8x128xf32> to vector<1x32xf32>
    %376 = vector.extract_strided_slice %365 {offsets = [7, 0], sizes = [1, 32], strides = [1, 1]} : vector<8x128xf32> to vector<1x32xf32>
    %cst_128 = arith.constant dense<0.000000e+00> : vector<16x96xf32>
    %377 = tpu.matmul %359, %366, %cst_128 {dimension_numbers = #tpu.dot_dimension_numbers<[1], [0], [0], [1], [0, 0, 1, 1], [], []>} : vector<16x32xf32>, vector<32x96xf32>, vector<16x96xf32> -> vector<16x96xf32>
    %378 = vector.broadcast %369 : vector<1x96xf32> to vector<16x96xf32>
    %379 = arith.addf %377, %378 : vector<16x96xf32>
    %cst_129 = arith.constant 0.000000e+00 : f32
    %380 = vector.broadcast %cst_129 : f32 to vector<16x32xf32>
    %381 = vector.extract_strided_slice %379 {offsets = [0, 0], sizes = [16, 16], strides = [1, 1]} : vector<16x96xf32> to vector<16x16xf32>
    %382 = vector.extract_strided_slice %379 {offsets = [0, 32], sizes = [16, 16], strides = [1, 1]} : vector<16x96xf32> to vector<16x16xf32>
    %383 = vector.extract_strided_slice %379 {offsets = [0, 64], sizes = [16, 16], strides = [1, 1]} : vector<16x96xf32> to vector<16x16xf32>
    %cst_130 = arith.constant dense<0.000000e+00> : vector<16x16xf32>
    %384 = tpu.matmul %381, %382, %cst_130 {dimension_numbers = #tpu.dot_dimension_numbers<[1], [1], [0], [0], [0, 0, 1, 0], [], []>} : vector<16x16xf32>, vector<16x16xf32>, vector<16x16xf32> -> vector<16x16xf32>
    %cst_131 = arith.constant 2.500000e-01 : f32
    %385 = vector.broadcast %cst_131 : f32 to vector<16x16xf32>
    %386 = arith.mulf %384, %385 : vector<16x16xf32>
    %387 = arith.addf %386, %3 : vector<16x16xf32>
    %cst_132 = arith.constant dense<0xFF800000> : vector<16xf32>
    %388 = vector.multi_reduction <maximumf>, %387, %cst_132 [1] : vector<16x16xf32> to vector<16xf32>
    %389 = vector.shape_cast %388 : vector<16xf32> to vector<16x1xf32>
    %390 = vector.broadcast %389 : vector<16x1xf32> to vector<16x16xf32>
    %391 = arith.subf %387, %390 : vector<16x16xf32>
    %392 = math.exp %391 : vector<16x16xf32>
    %cst_133 = arith.constant dense<0.000000e+00> : vector<16xf32>
    %393 = vector.multi_reduction <add>, %392, %cst_133 [1] : vector<16x16xf32> to vector<16xf32>
    %394 = vector.shape_cast %393 : vector<16xf32> to vector<16x1xf32>
    %395 = tpu.reciprocal %394 {approx = true} : vector<16x1xf32> -> vector<16x1xf32>
    %396 = vector.broadcast %395 : vector<16x1xf32> to vector<16x16xf32>
    %397 = arith.mulf %392, %396 : vector<16x16xf32>
    %cst_134 = arith.constant dense<0.000000e+00> : vector<16x16xf32>
    %398 = tpu.matmul %397, %383, %cst_134 {dimension_numbers = #tpu.dot_dimension_numbers<[1], [0], [0], [1], [0, 0, 1, 1], [], []>} : vector<16x16xf32>, vector<16x16xf32>, vector<16x16xf32> -> vector<16x16xf32>
    %399 = vector.extract_strided_slice %367 {offsets = [0, 0], sizes = [16, 32], strides = [1, 1]} : vector<32x32xf32> to vector<16x32xf32>
    %cst_135 = arith.constant dense<0.000000e+00> : vector<16x32xf32>
    %400 = tpu.matmul %398, %399, %cst_135 {dimension_numbers = #tpu.dot_dimension_numbers<[1], [0], [0], [1], [0, 0, 1, 1], [], []>} : vector<16x16xf32>, vector<16x32xf32>, vector<16x32xf32> -> vector<16x32xf32>
    %401 = arith.addf %380, %400 : vector<16x32xf32>
    %402 = vector.extract_strided_slice %379 {offsets = [0, 16], sizes = [16, 16], strides = [1, 1]} : vector<16x96xf32> to vector<16x16xf32>
    %403 = vector.extract_strided_slice %379 {offsets = [0, 48], sizes = [16, 16], strides = [1, 1]} : vector<16x96xf32> to vector<16x16xf32>
    %404 = vector.extract_strided_slice %379 {offsets = [0, 80], sizes = [16, 16], strides = [1, 1]} : vector<16x96xf32> to vector<16x16xf32>
    %cst_136 = arith.constant dense<0.000000e+00> : vector<16x16xf32>
    %405 = tpu.matmul %402, %403, %cst_136 {dimension_numbers = #tpu.dot_dimension_numbers<[1], [1], [0], [0], [0, 0, 1, 0], [], []>} : vector<16x16xf32>, vector<16x16xf32>, vector<16x16xf32> -> vector<16x16xf32>
    %cst_137 = arith.constant 2.500000e-01 : f32
    %406 = vector.broadcast %cst_137 : f32 to vector<16x16xf32>
    %407 = arith.mulf %405, %406 : vector<16x16xf32>
    %408 = arith.addf %407, %3 : vector<16x16xf32>
    %cst_138 = arith.constant dense<0xFF800000> : vector<16xf32>
    %409 = vector.multi_reduction <maximumf>, %408, %cst_138 [1] : vector<16x16xf32> to vector<16xf32>
    %410 = vector.shape_cast %409 : vector<16xf32> to vector<16x1xf32>
    %411 = vector.broadcast %410 : vector<16x1xf32> to vector<16x16xf32>
    %412 = arith.subf %408, %411 : vector<16x16xf32>
    %413 = math.exp %412 : vector<16x16xf32>
    %cst_139 = arith.constant dense<0.000000e+00> : vector<16xf32>
    %414 = vector.multi_reduction <add>, %413, %cst_139 [1] : vector<16x16xf32> to vector<16xf32>
    %415 = vector.shape_cast %414 : vector<16xf32> to vector<16x1xf32>
    %416 = tpu.reciprocal %415 {approx = true} : vector<16x1xf32> -> vector<16x1xf32>
    %417 = vector.broadcast %416 : vector<16x1xf32> to vector<16x16xf32>
    %418 = arith.mulf %413, %417 : vector<16x16xf32>
    %cst_140 = arith.constant dense<0.000000e+00> : vector<16x16xf32>
    %419 = tpu.matmul %418, %404, %cst_140 {dimension_numbers = #tpu.dot_dimension_numbers<[1], [0], [0], [1], [0, 0, 1, 1], [], []>} : vector<16x16xf32>, vector<16x16xf32>, vector<16x16xf32> -> vector<16x16xf32>
    %420 = vector.extract_strided_slice %367 {offsets = [16, 0], sizes = [16, 32], strides = [1, 1]} : vector<32x32xf32> to vector<16x32xf32>
    %cst_141 = arith.constant dense<0.000000e+00> : vector<16x32xf32>
    %421 = tpu.matmul %419, %420, %cst_141 {dimension_numbers = #tpu.dot_dimension_numbers<[1], [0], [0], [1], [0, 0, 1, 1], [], []>} : vector<16x16xf32>, vector<16x32xf32>, vector<16x32xf32> -> vector<16x32xf32>
    %422 = arith.addf %401, %421 : vector<16x32xf32>
    %423 = vector.broadcast %370 : vector<1x32xf32> to vector<16x32xf32>
    %424 = arith.addf %422, %423 : vector<16x32xf32>
    %425 = arith.addf %359, %424 : vector<16x32xf32>
    %cst_142 = arith.constant dense<0.000000e+00> : vector<16xf32>
    %426 = vector.multi_reduction <add>, %425, %cst_142 [1] : vector<16x32xf32> to vector<16xf32>
    %427 = vector.shape_cast %426 : vector<16xf32> to vector<16x1xf32>
    %cst_143 = arith.constant 3.200000e+01 : f32
    %428 = vector.broadcast %cst_143 : f32 to vector<16x1xf32>
    %429 = arith.divf %427, %428 : vector<16x1xf32>
    %430 = vector.broadcast %429 : vector<16x1xf32> to vector<16x32xf32>
    %431 = arith.subf %425, %430 : vector<16x32xf32>
    %432 = arith.mulf %431, %431 : vector<16x32xf32>
    %cst_144 = arith.constant dense<0.000000e+00> : vector<16xf32>
    %433 = vector.multi_reduction <add>, %432, %cst_144 [1] : vector<16x32xf32> to vector<16xf32>
    %434 = vector.shape_cast %433 : vector<16xf32> to vector<16x1xf32>
    %cst_145 = arith.constant 3.200000e+01 : f32
    %435 = vector.broadcast %cst_145 : f32 to vector<16x1xf32>
    %436 = arith.divf %434, %435 : vector<16x1xf32>
    %cst_146 = arith.constant 9.99999974E-6 : f32
    %437 = vector.broadcast %cst_146 : f32 to vector<16x1xf32>
    %438 = arith.addf %436, %437 : vector<16x1xf32>
    %439 = math.rsqrt %438 : vector<16x1xf32>
    %440 = vector.broadcast %439 : vector<16x1xf32> to vector<16x32xf32>
    %441 = arith.mulf %431, %440 : vector<16x32xf32>
    %442 = vector.broadcast %371 : vector<1x32xf32> to vector<16x32xf32>
    %443 = arith.mulf %441, %442 : vector<16x32xf32>
    %444 = vector.broadcast %372 : vector<1x32xf32> to vector<16x32xf32>
    %445 = arith.addf %443, %444 : vector<16x32xf32>
    %cst_147 = arith.constant dense<0.000000e+00> : vector<16x64xf32>
    %446 = tpu.matmul %445, %368, %cst_147 {dimension_numbers = #tpu.dot_dimension_numbers<[1], [0], [0], [1], [0, 0, 1, 1], [], []>} : vector<16x32xf32>, vector<32x64xf32>, vector<16x64xf32> -> vector<16x64xf32>
    %447 = vector.broadcast %373 : vector<1x64xf32> to vector<16x64xf32>
    %448 = arith.addf %446, %447 : vector<16x64xf32>
    %cst_148 = arith.constant 0.000000e+00 : f32
    %449 = vector.broadcast %cst_148 : f32 to vector<16x64xf32>
    %450 = arith.maximumf %448, %449 : vector<16x64xf32>
    %cst_149 = arith.constant dense<0.000000e+00> : vector<16x32xf32>
    %451 = tpu.matmul %450, %363, %cst_149 {dimension_numbers = #tpu.dot_dimension_numbers<[1], [0], [0], [1], [0, 0, 1, 1], [], []>} : vector<16x64xf32>, vector<64x32xf32>, vector<16x32xf32> -> vector<16x32xf32>
    %452 = vector.broadcast %374 : vector<1x32xf32> to vector<16x32xf32>
    %453 = arith.addf %451, %452 : vector<16x32xf32>
    %454 = arith.addf %445, %453 : vector<16x32xf32>
    %cst_150 = arith.constant dense<0.000000e+00> : vector<16xf32>
    %455 = vector.multi_reduction <add>, %454, %cst_150 [1] : vector<16x32xf32> to vector<16xf32>
    %456 = vector.shape_cast %455 : vector<16xf32> to vector<16x1xf32>
    %cst_151 = arith.constant 3.200000e+01 : f32
    %457 = vector.broadcast %cst_151 : f32 to vector<16x1xf32>
    %458 = arith.divf %456, %457 : vector<16x1xf32>
    %459 = vector.broadcast %458 : vector<16x1xf32> to vector<16x32xf32>
    %460 = arith.subf %454, %459 : vector<16x32xf32>
    %461 = arith.mulf %460, %460 : vector<16x32xf32>
    %cst_152 = arith.constant dense<0.000000e+00> : vector<16xf32>
    %462 = vector.multi_reduction <add>, %461, %cst_152 [1] : vector<16x32xf32> to vector<16xf32>
    %463 = vector.shape_cast %462 : vector<16xf32> to vector<16x1xf32>
    %cst_153 = arith.constant 3.200000e+01 : f32
    %464 = vector.broadcast %cst_153 : f32 to vector<16x1xf32>
    %465 = arith.divf %463, %464 : vector<16x1xf32>
    %cst_154 = arith.constant 9.99999974E-6 : f32
    %466 = vector.broadcast %cst_154 : f32 to vector<16x1xf32>
    %467 = arith.addf %465, %466 : vector<16x1xf32>
    %468 = math.rsqrt %467 : vector<16x1xf32>
    %469 = vector.broadcast %468 : vector<16x1xf32> to vector<16x32xf32>
    %470 = arith.mulf %460, %469 : vector<16x32xf32>
    %471 = vector.broadcast %375 : vector<1x32xf32> to vector<16x32xf32>
    %472 = arith.mulf %470, %471 : vector<16x32xf32>
    %473 = vector.broadcast %376 : vector<1x32xf32> to vector<16x32xf32>
    %474 = arith.addf %472, %473 : vector<16x32xf32>
    %c0_155 = arith.constant 0 : index
    %c0_156 = arith.constant 0 : index
    %475 = vector.load %arg9[%c0_155, %c0_156] : memref<33x128xf32, #tpu.memory_space<vmem>>, vector<32x128xf32>
    %cst_157 = arith.constant dense<0.000000e+00> : vector<16x128xf32>
    %476 = tpu.matmul %474, %475, %cst_157 {dimension_numbers = #tpu.dot_dimension_numbers<[1], [0], [0], [1], [0, 0, 1, 1], [], []>} : vector<16x32xf32>, vector<32x128xf32>, vector<16x128xf32> -> vector<16x128xf32>
    %c32 = arith.constant 32 : index
    %c0_158 = arith.constant 0 : index
    %477 = vector.load %arg9[%c32, %c0_158] : memref<33x128xf32, #tpu.memory_space<vmem>>, vector<1x128xf32>
    %478 = vector.broadcast %477 : vector<1x128xf32> to vector<16x128xf32>
    %479 = arith.addf %476, %478 : vector<16x128xf32>
    %c0_159 = arith.constant 0 : index
    %c0_160 = arith.constant 0 : index
    %480 = vector.load %arg10[%c0_159, %c0_160] : memref<16x128xf32, #tpu.memory_space<vmem>>, vector<16x128xf32>
    tpu.vector_store %arg10[%c0_159, %c0_160], %479 {strides = array<i32>} : memref<16x128xf32, #tpu.memory_space<vmem>>, vector<16x128xf32>,
    return
  }
}

</mosaic_0001>

<llo_original>
// kernel: primitive_ae_forward.1
$region0: #{primitive_ae_forward.1}
  #allocation0 [shape = 'u32[]', space=smem, size = 0x4, offset = 0x4, fixed_abs, tag = 'smem constant byte address 0x4 - core index']
  #allocation1 [shape = 'u32[144,128]{1,0:T(1,128)}', space=vmem, size = 0x12000, scoped, tag = 'internal scratch']
  %s0 = inlined_call_operand.vmem [shape: f32[16,32], index: 0, kind: input, shape index: {}]
  %s1 = inlined_call_operand.vmem [shape: f32[16,32], index: 1, kind: input, shape index: {}]
  %s2 = inlined_call_operand.vmem [shape: f32[3,16,16], index: 2, kind: input, shape index: {}]
  %s3 = inlined_call_operand.vmem [shape: f32[2,32,192], index: 3, kind: input, shape index: {}]
  %s4 = inlined_call_operand.vmem [shape: f32[2,64,32], index: 4, kind: input, shape index: {}]
  %s5 = inlined_call_operand.vmem [shape: f32[2,8,128], index: 5, kind: input, shape index: {}]
  %s6 = inlined_call_operand.vmem [shape: f32[2,32,192], index: 6, kind: input, shape index: {}]
  %s7 = inlined_call_operand.vmem [shape: f32[2,64,32], index: 7, kind: input, shape index: {}]
  %s8 = inlined_call_operand.vmem [shape: f32[2,8,128], index: 8, kind: input, shape index: {}]
  %s9 = inlined_call_operand.vmem [shape: f32[33,128], index: 9, kind: input, shape index: {}]
  %s10 = inlined_call_operand.vmem [shape: f32[16,128], index: 10, kind: output, shape index: {}]
  %s11 = sld [smem:[#allocation0]]
  $region50: #{primitive_ae_forward.1} parent=0
    _
  %s13 = ssub.s32 1, %s11
  %s14 = scalar_select 0, %s13, %s11
  // Predicated region
  $region2: #{primitive_ae_forward.1} parent=0 // pred_check
    _
  $region3: #{primitive_ae_forward.1} parent=0 // pred_check_branch
    %16 = sbr.rel (0) target = $region5
  $region4: #{primitive_ae_forward.1} parent=0 // pred_region
    _
  $region5: #{primitive_ae_forward.1} parent=0 // pred_fallthru
    _
  // Predicated region
  $region6: #{primitive_ae_forward.1} parent=0 // pred_check
    _
  $region7: #{primitive_ae_forward.1} parent=0 // pred_check_branch
    %18 = sbr.rel (0) target = $region9
  $region8: #{primitive_ae_forward.1} parent=0 // pred_region
    _
  $region9: #{primitive_ae_forward.1} parent=0 // pred_fallthru
    _
  // Predicated region
  $region10: #{primitive_ae_forward.1} parent=0 // pred_check
    _
  $region11: #{primitive_ae_forward.1} parent=0 // pred_check_branch
    %20 = sbr.rel (0) target = $region13
  $region12: #{primitive_ae_forward.1} parent=0 // pred_region
    _
  $region13: #{primitive_ae_forward.1} parent=0 // pred_fallthru
    _
  // Predicated region
  $region14: #{primitive_ae_forward.1} parent=0 // pred_check
    _
  $region15: #{primitive_ae_forward.1} parent=0 // pred_check_branch
    %22 = sbr.rel (0) target = $region17
  $region16: #{primitive_ae_forward.1} parent=0 // pred_region
    _
  $region17: #{primitive_ae_forward.1} parent=0 // pred_fallthru
    _
  // Predicated region
  $region18: #{primitive_ae_forward.1} parent=0 // pred_check
    _
  $region19: #{primitive_ae_forward.1} parent=0 // pred_check_branch
    %24 = sbr.rel (0) target = $region21
  $region20: #{primitive_ae_forward.1} parent=0 // pred_region
    _
  $region21: #{primitive_ae_forward.1} parent=0 // pred_fallthru
    _
  // Predicated region
  $region22: #{primitive_ae_forward.1} parent=0 // pred_check
    _
  $region23: #{primitive_ae_forward.1} parent=0 // pred_check_branch
    %26 = sbr.rel (0) target = $region25
  $region24: #{primitive_ae_forward.1} parent=0 // pred_region
    _
  $region25: #{primitive_ae_forward.1} parent=0 // pred_fallthru
    _
  // Predicated region
  $region26: #{primitive_ae_forward.1} parent=0 // pred_check
    _
  $region27: #{primitive_ae_forward.1} parent=0 // pred_check_branch
    %28 = sbr.rel (0) target = $region29
  $region28: #{primitive_ae_forward.1} parent=0 // pred_region
    _
  $region29: #{primitive_ae_forward.1} parent=0 // pred_fallthru
    _
  // Predicated region
  $region30: #{primitive_ae_forward.1} parent=0 // pred_check
    _
  $region31: #{primitive_ae_forward.1} parent=0 // pred_check_branch
    %30 = sbr.rel (0) target = $region33
  $region32: #{primitive_ae_forward.1} parent=0 // pred_region
    _
  $region33: #{primitive_ae_forward.1} parent=0 // pred_fallthru
    _
  // Predicated region
  $region34: #{primitive_ae_forward.1} parent=0 // pred_check
    _
  $region35: #{primitive_ae_forward.1} parent=0 // pred_check_branch
    %32 = sbr.rel (0) target = $region37
  $region36: #{primitive_ae_forward.1} parent=0 // pred_region
    _
  $region37: #{primitive_ae_forward.1} parent=0 // pred_fallthru
    _
  // Predicated region
  $region38: #{primitive_ae_forward.1} parent=0 // pred_check
    _
  $region39: #{primitive_ae_forward.1} parent=0 // pred_check_branch
    %34 = sbr.rel (0) target = $region41
  $region40: #{primitive_ae_forward.1} parent=0 // pred_region
    _
  $region41: #{primitive_ae_forward.1} parent=0 // pred_fallthru
    _
  %v35 = vld [vmem:[%s2] sm:$0xff]
  %v36 = vld [vmem:[%s2 + $0x8] sm:$0xff]
  %s37 = scalar_lea.vmem %s2, 16
  %v38 = vld [vmem:[%s37] sm:$0xff]
  %v39 = vld [vmem:[%s37 + $0x8] sm:$0xff]
  %s40 = scalar_lea.vmem %s2, 32
  %v41 = vld [vmem:[%s40] sm:$0xff]
  %v42 = vld [vmem:[%s40 + $0x8] sm:$0xff]
  %v43 = vld [vmem:[%s0] sm:$0xff]
  %v44 = vld [vmem:[%s0 + $0x8] sm:$0xff]
  %v45 = vld [vmem:[%s3] sm:$0xff]
  %v46 = vld [vmem:[%s3 + $0x8] sm:$0xff]
  %v47 = vld [vmem:[%s3 + $0x10] sm:$0xff]
  %v48 = vld [vmem:[%s3 + $0x18] sm:$0xff]
  %v49 = vld [vmem:[%s3 + $0x20] sm:$0xff]
  %v50 = vld [vmem:[%s3 + $0x28] sm:$0xff]
  %v51 = vld [vmem:[%s3 + $0x30] sm:$0xff]
  %v52 = vld [vmem:[%s3 + $0x38] sm:$0xff]
  %v53 = vld [vmem:[%s4] sm:$0xff]
  %v54 = vld [vmem:[%s4 + $0x8] sm:$0xff]
  %v55 = vld [vmem:[%s4 + $0x10] sm:$0xff]
  %v56 = vld [vmem:[%s4 + $0x18] sm:$0xff]
  %v57 = vld [vmem:[%s4 + $0x20] sm:$0xff]
  %v58 = vld [vmem:[%s4 + $0x28] sm:$0xff]
  %v59 = vld [vmem:[%s4 + $0x30] sm:$0xff]
  %v60 = vld [vmem:[%s4 + $0x38] sm:$0xff]
  %v61 = vld [vmem:[%s5] sm:$0xff]
  %v62 = vlaneseq
  %v63 = vshrl.u32 %v62, 7
  %v64 = vsub.s32 0, %v63
  %v65 = vrot.slane %v61, %v64
  %vm66 = vcmask 261120
  %v68 = vsel %vm66, %v43, 0
  %v71 = vsel %vm66, %v44, 0
  %73 = vmatprep.subr.mxu0 0.0
  %74 = vmatpush1.msra.mxu0 %v45
  %75 = vmatprep.subr.mxu0 0.0
  %76 = vmatpush1.msra.mxu0 %v47
  %77 = vmatprep.subr.mxu0 0.0
  %78 = vmatpush1.msra.mxu0 %v49
  %79 = vmatprep.subr.mxu0 0.0
  %80 = vmatpush1.msra.mxu0 %v51
  %81 = vmatprep.subr.mxu0 0.0
  %82 = vmatpush1.msra.mxu0 0.0
  %83 = vmatprep.subr.mxu0 0.0
  %84 = vmatpush1.msra.mxu0 0.0
  %85 = vmatprep.subr.mxu0 0.0
  %86 = vmatpush1.msra.mxu0 0.0
  %87 = vmatprep.subr.mxu0 0.0
  %88 = vmatpush1.msra.mxu0 0.0
  %89 = vmatprep.subr.mxu0 0.0
  %90 = vmatpush1.msra.mxu0 0.0
  %91 = vmatprep.subr.mxu0 0.0
  %92 = vmatpush1.msra.mxu0 0.0
  %93 = vmatprep.subr.mxu0 0.0
  %94 = vmatpush1.msra.mxu0 0.0
  %95 = vmatprep.subr.mxu0 0.0
  %96 = vmatpush1.msra.mxu0 0.0
  %97 = vmatprep.subr.mxu0 0.0
  %98 = vmatpush1.msra.mxu0 0.0
  %99 = vmatprep.subr.mxu0 0.0
  %100 = vmatpush1.msra.mxu0 0.0
  %101 = vmatprep.subr.mxu0 0.0
  %102 = vmatpush1.msra.mxu0 0.0
  %103 = vmatprep.subr.mxu0 0.0
  %104 = vmatpush1.msra.mxu0 0.0
  %105 = vmatprep.subr.mxu0 0.0
  %106 = vmatpush1.msra.mxu0 0.0
  %107 = vmatprep.subr.mxu0 0.0
  %108 = vmatpush1.msra.mxu0 0.0
  %109 = vmatprep.subr.mxu0 0.0
  %110 = vmatpush1.msra.mxu0 0.0
  %111 = vmatprep.subr.mxu0 0.0
  %112 = vmatpush1.msra.mxu0 0.0
  %113 = vmatprep.subr.mxu0 0.0
  %114 = vmatpush1.msra.mxu0 0.0
  %115 = vmatprep.subr.mxu0 0.0
  %116 = vmatpush1.msra.mxu0 0.0
  %117 = vmatprep.subr.mxu0 0.0
  %118 = vmatpush1.msra.mxu0 0.0
  %119 = vmatprep.subr.mxu0 0.0
  %120 = vmatpush1.msra.mxu0 0.0
  %121 = vmatprep.subr.mxu0 0.0
  %122 = vmatpush1.msra.mxu0 0.0
  %123 = vmatprep.subr.mxu0 0.0
  %124 = vmatpush1.msra.mxu0 0.0
  %125 = vmatprep.subr.mxu0 0.0
  %126 = vmatpush1.msra.mxu0 0.0
  %127 = vmatprep.subr.mxu0 0.0
  %128 = vmatpush1.msra.mxu0 0.0
  %129 = vmatprep.subr.mxu0 0.0
  %130 = vmatpush1.msra.mxu0 0.0
  %131 = vmatprep.subr.mxu0 0.0
  %132 = vmatpush1.msra.mxu0 0.0
  %133 = vmatprep.subr.mxu0 0.0
  %134 = vmatpush1.msra.mxu0 0.0
  %135 = vmatprep.subr.mxu0 0.0
  %136 = vmatpush1.msra.mxu0 0.0
  %137 = vmatprep.mubr.f32.mxu0 0.0
  %138 = vmatmul.mubr.f32.gmra.mrb[0].mxu0 %v68
  %v139 = vpop.f32.mrb[0].mxu0
  %v140 = vadd.f32 %v65, %v139
  %v141 = vpop.f32.mrb[0].mxu0
  %142 = vmatprep.mubr.f32.mxu0 0.0
  %143 = vmatmul.mubr.f32.gmra.mrb[0].mxu0 %v71
  %v144 = vpop.f32.mrb[0].mxu0
  %v145 = vadd.f32 %v65, %v144
  %v146 = vpop.f32.mrb[0].mxu0
  %147 = vdwg.mxu0
  %150 = vrot.lane.b32.xlu0 %v140, 96
  %v151 = vpop.permute.xlu0 %150
  %152 = vrot.lane.b32.xlu0 %v145, 96
  %v153 = vpop.permute.xlu0 %152
  %vm154 = vcmask 130048
  %v155 = vsel %vm154, %v140, 0
  %v157 = vsel %vm154, %v145, 0
  %v159 = vsel %vm154, %v151, 0
  %v161 = vsel %vm154, %v153, 0
  %163 = vmatprep.subr.mxu0 0.0
  %164 = vmatpush1.xpose.msra.mxu0 %v159
  %165 = vmatprep.subr.mxu0 0.0
  %166 = vmatpush1.xpose.msra.mxu0 %v161
  %167 = vmatprep.subr.mxu0 0.0
  %168 = vmatpush1.xpose.msra.mxu0 0.0
  %169 = vmatprep.subr.mxu0 0.0
  %170 = vmatpush1.xpose.msra.mxu0 0.0
  %171 = vmatprep.subr.mxu0 0.0
  %172 = vmatpush1.xpose.msra.mxu0 0.0
  %173 = vmatprep.subr.mxu0 0.0
  %174 = vmatpush1.xpose.msra.mxu0 0.0
  %175 = vmatprep.subr.mxu0 0.0
  %176 = vmatpush1.xpose.msra.mxu0 0.0
  %177 = vmatprep.subr.mxu0 0.0
  %178 = vmatpush1.xpose.msra.mxu0 0.0
  %179 = vmatprep.subr.mxu0 0.0
  %180 = vmatpush1.xpose.msra.mxu0 0.0
  %181 = vmatprep.subr.mxu0 0.0
  %182 = vmatpush1.xpose.msra.mxu0 0.0
  %183 = vmatprep.subr.mxu0 0.0
  %184 = vmatpush1.xpose.msra.mxu0 0.0
  %185 = vmatprep.subr.mxu0 0.0
  %186 = vmatpush1.xpose.msra.mxu0 0.0
  %187 = vmatprep.subr.mxu0 0.0
  %188 = vmatpush1.xpose.msra.mxu0 0.0
  %189 = vmatprep.subr.mxu0 0.0
  %190 = vmatpush1.xpose.msra.mxu0 0.0
  %191 = vmatprep.subr.mxu0 0.0
  %192 = vmatpush1.xpose.msra.mxu0 0.0
  %193 = vmatprep.subr.mxu0 0.0
  %194 = vmatpush1.xpose.msra.mxu0 0.0
  %195 = vmatprep.subr.mxu0 0.0
  %196 = vmatpush1.xpose.msra.mxu0 0.0
  %197 = vmatprep.subr.mxu0 0.0
  %198 = vmatpush1.xpose.msra.mxu0 0.0
  %199 = vmatprep.subr.mxu0 0.0
  %200 = vmatpush1.xpose.msra.mxu0 0.0
  %201 = vmatprep.subr.mxu0 0.0
  %202 = vmatpush1.xpose.msra.mxu0 0.0
  %203 = vmatprep.subr.mxu0 0.0
  %204 = vmatpush1.xpose.msra.mxu0 0.0
  %205 = vmatprep.subr.mxu0 0.0
  %206 = vmatpush1.xpose.msra.mxu0 0.0
  %207 = vmatprep.subr.mxu0 0.0
  %208 = vmatpush1.xpose.msra.mxu0 0.0
  %209 = vmatprep.subr.mxu0 0.0
  %210 = vmatpush1.xpose.msra.mxu0 0.0
  %211 = vmatprep.subr.mxu0 0.0
  %212 = vmatpush1.xpose.msra.mxu0 0.0
  %213 = vmatprep.subr.mxu0 0.0
  %214 = vmatpush1.xpose.msra.mxu0 0.0
  %215 = vmatprep.subr.mxu0 0.0
  %216 = vmatpush1.xpose.msra.mxu0 0.0
  %217 = vmatprep.subr.mxu0 0.0
  %218 = vmatpush1.xpose.msra.mxu0 0.0
  %219 = vmatprep.subr.mxu0 0.0
  %220 = vmatpush1.xpose.msra.mxu0 0.0
  %221 = vmatprep.subr.mxu0 0.0
  %222 = vmatpush1.xpose.msra.mxu0 0.0
  %223 = vmatprep.subr.mxu0 0.0
  %224 = vmatpush1.xpose.msra.mxu0 0.0
  %225 = vmatprep.subr.mxu0 0.0
  %226 = vmatpush1.xpose.msra.mxu0 0.0
  %227 = vmatprep.mubr.f32.mxu0 0.0
  %228 = vmatmul.mubr.f32.gmra.mrb[0].mxu0 %v155
  %v229 = vpop.f32.mrb[0].mxu0
  %v230 = vadd.f32 0.0, %v229
  %v231 = vpop.f32.mrb[0].mxu0
  %232 = vmatprep.mubr.f32.mxu0 0.0
  %233 = vmatmul.mubr.f32.gmra.mrb[0].mxu0 %v157
  %v234 = vpop.f32.mrb[0].mxu0
  %v235 = vadd.f32 0.0, %v234
  %v236 = vpop.f32.mrb[0].mxu0
  %237 = vdwg.mxu0
  %v238 = vmul.f32 %v230, 0.25
  %v239 = vmul.f32 %v235, 0.25
  %v240 = vadd.f32 %v238, %v35
  %v241 = vadd.f32 %v239, %v36
  %v242 = vsel %vm154, %v240, -inf
  %243 = vmax.xlane.f32.xlu0 %v242
  %v244 = vpop.xlane.xlu0 %243
  %v245 = vsel %vm154, %v241, -inf
  %246 = vmax.xlane.f32.xlu0 %v245
  %v247 = vpop.xlane.xlu0 %246
  %v248 = vsub.f32 %v240, %v244
  %v249 = vsub.f32 %v241, %v247
  %v250 = vmul.f32 %v248, 1.442695
  %v251 = vpow.pop %v250
  %v252 = vmul.f32 %v249, 1.442695
  %v253 = vpow.pop %v252
  %v254 = vsel %vm154, %v251, 0.0
  %255 = vadd.xlane.f32.xlu0 %v254
  %v256 = vpop.xlane.xlu0 %255
  %v257 = vsel %vm154, %v253, 0.0
  %258 = vadd.xlane.f32.xlu0 %v257
  %v259 = vpop.xlane.xlu0 %258
  %v260 = vrcp.pop %v256
  %v261 = vrcp.pop %v259
  %v262 = vmul.f32 %v251, %v260
  %v263 = vmul.f32 %v253, %v261
  %264 = vrot.lane.b32.xlu0 %v140, 64
  %v265 = vpop.permute.xlu0 %264
  %266 = vrot.lane.b32.xlu0 %v145, 64
  %v267 = vpop.permute.xlu0 %266
  %v271 = vsel %vm154, %v262, 0
  %v274 = vsel %vm154, %v263, 0
  %276 = vmatprep.subr.mxu0 0.0
  %277 = vmatpush1.msra.mxu0 %v265
  %278 = vmatprep.subr.mxu0 0.0
  %279 = vmatpush1.msra.mxu0 %v267
  %280 = vmatprep.subr.mxu0 0.0
  %281 = vmatpush1.msra.mxu0 0.0
  %282 = vmatprep.subr.mxu0 0.0
  %283 = vmatpush1.msra.mxu0 0.0
  %284 = vmatprep.subr.mxu0 0.0
  %285 = vmatpush1.msra.mxu0 0.0
  %286 = vmatprep.subr.mxu0 0.0
  %287 = vmatpush1.msra.mxu0 0.0
  %288 = vmatprep.subr.mxu0 0.0
  %289 = vmatpush1.msra.mxu0 0.0
  %290 = vmatprep.subr.mxu0 0.0
  %291 = vmatpush1.msra.mxu0 0.0
  %292 = vmatprep.subr.mxu0 0.0
  %293 = vmatpush1.msra.mxu0 0.0
  %294 = vmatprep.subr.mxu0 0.0
  %295 = vmatpush1.msra.mxu0 0.0
  %296 = vmatprep.subr.mxu0 0.0
  %297 = vmatpush1.msra.mxu0 0.0
  %298 = vmatprep.subr.mxu0 0.0
  %299 = vmatpush1.msra.mxu0 0.0
  %300 = vmatprep.subr.mxu0 0.0
  %301 = vmatpush1.msra.mxu0 0.0
  %302 = vmatprep.subr.mxu0 0.0
  %303 = vmatpush1.msra.mxu0 0.0
  %304 = vmatprep.subr.mxu0 0.0
  %305 = vmatpush1.msra.mxu0 0.0
  %306 = vmatprep.subr.mxu0 0.0
  %307 = vmatpush1.msra.mxu0 0.0
  %308 = vmatprep.subr.mxu0 0.0
  %309 = vmatpush1.msra.mxu0 0.0
  %310 = vmatprep.subr.mxu0 0.0
  %311 = vmatpush1.msra.mxu0 0.0
  %312 = vmatprep.subr.mxu0 0.0
  %313 = vmatpush1.msra.mxu0 0.0
  %314 = vmatprep.subr.mxu0 0.0
  %315 = vmatpush1.msra.mxu0 0.0
  %316 = vmatprep.subr.mxu0 0.0
  %317 = vmatpush1.msra.mxu0 0.0
  %318 = vmatprep.subr.mxu0 0.0
  %319 = vmatpush1.msra.mxu0 0.0
  %320 = vmatprep.subr.mxu0 0.0
  %321 = vmatpush1.msra.mxu0 0.0
  %322 = vmatprep.subr.mxu0 0.0
  %323 = vmatpush1.msra.mxu0 0.0
  %324 = vmatprep.subr.mxu0 0.0
  %325 = vmatpush1.msra.mxu0 0.0
  %326 = vmatprep.subr.mxu0 0.0
  %327 = vmatpush1.msra.mxu0 0.0
  %328 = vmatprep.subr.mxu0 0.0
  %329 = vmatpush1.msra.mxu0 0.0
  %330 = vmatprep.subr.mxu0 0.0
  %331 = vmatpush1.msra.mxu0 0.0
  %332 = vmatprep.subr.mxu0 0.0
  %333 = vmatpush1.msra.mxu0 0.0
  %334 = vmatprep.subr.mxu0 0.0
  %335 = vmatpush1.msra.mxu0 0.0
  %336 = vmatprep.subr.mxu0 0.0
  %337 = vmatpush1.msra.mxu0 0.0
  %338 = vmatprep.subr.mxu0 0.0
  %339 = vmatpush1.msra.mxu0 0.0
  %340 = vmatprep.mubr.f32.mxu0 0.0
  %341 = vmatmul.mubr.f32.gmra.mrb[0].mxu0 %v271
  %v342 = vpop.f32.mrb[0].mxu0
  %v343 = vadd.f32 0.0, %v342
  %v344 = vpop.f32.mrb[0].mxu0
  %345 = vmatprep.mubr.f32.mxu0 0.0
  %346 = vmatmul.mubr.f32.gmra.mrb[0].mxu0 %v274
  %v347 = vpop.f32.mrb[0].mxu0
  %v348 = vadd.f32 0.0, %v347
  %v349 = vpop.f32.mrb[0].mxu0
  %350 = vdwg.mxu0
  %351 = vrot.lane.b32.xlu0 %v140, 112
  %v352 = vpop.permute.xlu0 %351
  %353 = vrot.lane.b32.xlu0 %v145, 112
  %v354 = vpop.permute.xlu0 %353
  %355 = vrot.lane.b32.xlu0 %v140, 80
  %v356 = vpop.permute.xlu0 %355
  %357 = vrot.lane.b32.xlu0 %v145, 80
  %v358 = vpop.permute.xlu0 %357
  %v359 = vsel %vm154, %v352, 0
  %v361 = vsel %vm154, %v354, 0
  %v363 = vsel %vm154, %v356, 0
  %v365 = vsel %vm154, %v358, 0
  %367 = vmatprep.subr.mxu0 0.0
  %368 = vmatpush1.xpose.msra.mxu0 %v363
  %369 = vmatprep.subr.mxu0 0.0
  %370 = vmatpush1.xpose.msra.mxu0 %v365
  %371 = vmatprep.subr.mxu0 0.0
  %372 = vmatpush1.xpose.msra.mxu0 0.0
  %373 = vmatprep.subr.mxu0 0.0
  %374 = vmatpush1.xpose.msra.mxu0 0.0
  %375 = vmatprep.subr.mxu0 0.0
  %376 = vmatpush1.xpose.msra.mxu0 0.0
  %377 = vmatprep.subr.mxu0 0.0
  %378 = vmatpush1.xpose.msra.mxu0 0.0
  %379 = vmatprep.subr.mxu0 0.0
  %380 = vmatpush1.xpose.msra.mxu0 0.0
  %381 = vmatprep.subr.mxu0 0.0
  %382 = vmatpush1.xpose.msra.mxu0 0.0
  %383 = vmatprep.subr.mxu0 0.0
  %384 = vmatpush1.xpose.msra.mxu0 0.0
  %385 = vmatprep.subr.mxu0 0.0
  %386 = vmatpush1.xpose.msra.mxu0 0.0
  %387 = vmatprep.subr.mxu0 0.0
  %388 = vmatpush1.xpose.msra.mxu0 0.0
  %389 = vmatprep.subr.mxu0 0.0
  %390 = vmatpush1.xpose.msra.mxu0 0.0
  %391 = vmatprep.subr.mxu0 0.0
  %392 = vmatpush1.xpose.msra.mxu0 0.0
  %393 = vmatprep.subr.mxu0 0.0
  %394 = vmatpush1.xpose.msra.mxu0 0.0
  %395 = vmatprep.subr.mxu0 0.0
  %396 = vmatpush1.xpose.msra.mxu0 0.0
  %397 = vmatprep.subr.mxu0 0.0
  %398 = vmatpush1.xpose.msra.mxu0 0.0
  %399 = vmatprep.subr.mxu0 0.0
  %400 = vmatpush1.xpose.msra.mxu0 0.0
  %401 = vmatprep.subr.mxu0 0.0
  %402 = vmatpush1.xpose.msra.mxu0 0.0
  %403 = vmatprep.subr.mxu0 0.0
  %404 = vmatpush1.xpose.msra.mxu0 0.0
  %405 = vmatprep.subr.mxu0 0.0
  %406 = vmatpush1.xpose.msra.mxu0 0.0
  %407 = vmatprep.subr.mxu0 0.0
  %408 = vmatpush1.xpose.msra.mxu0 0.0
  %409 = vmatprep.subr.mxu0 0.0
  %410 = vmatpush1.xpose.msra.mxu0 0.0
  %411 = vmatprep.subr.mxu0 0.0
  %412 = vmatpush1.xpose.msra.mxu0 0.0
  %413 = vmatprep.subr.mxu0 0.0
  %414 = vmatpush1.xpose.msra.mxu0 0.0
  %415 = vmatprep.subr.mxu0 0.0
  %416 = vmatpush1.xpose.msra.mxu0 0.0
  %417 = vmatprep.subr.mxu0 0.0
  %418 = vmatpush1.xpose.msra.mxu0 0.0
  %419 = vmatprep.subr.mxu0 0.0
  %420 = vmatpush1.xpose.msra.mxu0 0.0
  %421 = vmatprep.subr.mxu0 0.0
  %422 = vmatpush1.xpose.msra.mxu0 0.0
  %423 = vmatprep.subr.mxu0 0.0
  %424 = vmatpush1.xpose.msra.mxu0 0.0
  %425 = vmatprep.subr.mxu0 0.0
  %426 = vmatpush1.xpose.msra.mxu0 0.0
  %427 = vmatprep.subr.mxu0 0.0
  %428 = vmatpush1.xpose.msra.mxu0 0.0
  %429 = vmatprep.subr.mxu0 0.0
  %430 = vmatpush1.xpose.msra.mxu0 0.0
  %431 = vmatprep.mubr.f32.mxu0 0.0
  %432 = vmatmul.mubr.f32.gmra.mrb[0].mxu0 %v359
  %v433 = vpop.f32.mrb[0].mxu0
  %v434 = vadd.f32 0.0, %v433
  %v435 = vpop.f32.mrb[0].mxu0
  %436 = vmatprep.mubr.f32.mxu0 0.0
  %437 = vmatmul.mubr.f32.gmra.mrb[0].mxu0 %v361
  %v438 = vpop.f32.mrb[0].mxu0
  %v439 = vadd.f32 0.0, %v438
  %v440 = vpop.f32.mrb[0].mxu0
  %441 = vdwg.mxu0
  %v442 = vmul.f32 %v434, 0.25
  %v443 = vmul.f32 %v439, 0.25
  %v444 = vadd.f32 %v442, %v35
  %v445 = vadd.f32 %v443, %v36
  %v446 = vsel %vm154, %v444, -inf
  %447 = vmax.xlane.f32.xlu0 %v446
  %v448 = vpop.xlane.xlu0 %447
  %v449 = vsel %vm154, %v445, -inf
  %450 = vmax.xlane.f32.xlu0 %v449
  %v451 = vpop.xlane.xlu0 %450
  %v452 = vsub.f32 %v444, %v448
  %v453 = vsub.f32 %v445, %v451
  %v454 = vmul.f32 %v452, 1.442695
  %v455 = vpow.pop %v454
  %v456 = vmul.f32 %v453, 1.442695
  %v457 = vpow.pop %v456
  %v458 = vsel %vm154, %v455, 0.0
  %459 = vadd.xlane.f32.xlu0 %v458
  %v460 = vpop.xlane.xlu0 %459
  %v461 = vsel %vm154, %v457, 0.0
  %462 = vadd.xlane.f32.xlu0 %v461
  %v463 = vpop.xlane.xlu0 %462
  %v464 = vrcp.pop %v460
  %v465 = vrcp.pop %v463
  %v466 = vmul.f32 %v455, %v464
  %v467 = vmul.f32 %v457, %v465
  %468 = vrot.lane.b32.xlu0 %v140, 48
  %v469 = vpop.permute.xlu0 %468
  %470 = vrot.lane.b32.xlu0 %v145, 48
  %v471 = vpop.permute.xlu0 %470
  %v475 = vsel %vm154, %v466, 0
  %v478 = vsel %vm154, %v467, 0
  %480 = vmatprep.subr.mxu0 0.0
  %481 = vmatpush1.msra.mxu0 %v469
  %482 = vmatprep.subr.mxu0 0.0
  %483 = vmatpush1.msra.mxu0 %v471
  %484 = vmatprep.subr.mxu0 0.0
  %485 = vmatpush1.msra.mxu0 0.0
  %486 = vmatprep.subr.mxu0 0.0
  %487 = vmatpush1.msra.mxu0 0.0
  %488 = vmatprep.subr.mxu0 0.0
  %489 = vmatpush1.msra.mxu0 0.0
  %490 = vmatprep.subr.mxu0 0.0
  %491 = vmatpush1.msra.mxu0 0.0
  %492 = vmatprep.subr.mxu0 0.0
  %493 = vmatpush1.msra.mxu0 0.0
  %494 = vmatprep.subr.mxu0 0.0
  %495 = vmatpush1.msra.mxu0 0.0
  %496 = vmatprep.subr.mxu0 0.0
  %497 = vmatpush1.msra.mxu0 0.0
  %498 = vmatprep.subr.mxu0 0.0
  %499 = vmatpush1.msra.mxu0 0.0
  %500 = vmatprep.subr.mxu0 0.0
  %501 = vmatpush1.msra.mxu0 0.0
  %502 = vmatprep.subr.mxu0 0.0
  %503 = vmatpush1.msra.mxu0 0.0
  %504 = vmatprep.subr.mxu0 0.0
  %505 = vmatpush1.msra.mxu0 0.0
  %506 = vmatprep.subr.mxu0 0.0
  %507 = vmatpush1.msra.mxu0 0.0
  %508 = vmatprep.subr.mxu0 0.0
  %509 = vmatpush1.msra.mxu0 0.0
  %510 = vmatprep.subr.mxu0 0.0
  %511 = vmatpush1.msra.mxu0 0.0
  %512 = vmatprep.subr.mxu0 0.0
  %513 = vmatpush1.msra.mxu0 0.0
  %514 = vmatprep.subr.mxu0 0.0
  %515 = vmatpush1.msra.mxu0 0.0
  %516 = vmatprep.subr.mxu0 0.0
  %517 = vmatpush1.msra.mxu0 0.0
  %518 = vmatprep.subr.mxu0 0.0
  %519 = vmatpush1.msra.mxu0 0.0
  %520 = vmatprep.subr.mxu0 0.0
  %521 = vmatpush1.msra.mxu0 0.0
  %522 = vmatprep.subr.mxu0 0.0
  %523 = vmatpush1.msra.mxu0 0.0
  %524 = vmatprep.subr.mxu0 0.0
  %525 = vmatpush1.msra.mxu0 0.0
  %526 = vmatprep.subr.mxu0 0.0
  %527 = vmatpush1.msra.mxu0 0.0
  %528 = vmatprep.subr.mxu0 0.0
  %529 = vmatpush1.msra.mxu0 0.0
  %530 = vmatprep.subr.mxu0 0.0
  %531 = vmatpush1.msra.mxu0 0.0
  %532 = vmatprep.subr.mxu0 0.0
  %533 = vmatpush1.msra.mxu0 0.0
  %534 = vmatprep.subr.mxu0 0.0
  %535 = vmatpush1.msra.mxu0 0.0
  %536 = vmatprep.subr.mxu0 0.0
  %537 = vmatpush1.msra.mxu0 0.0
  %538 = vmatprep.subr.mxu0 0.0
  %539 = vmatpush1.msra.mxu0 0.0
  %540 = vmatprep.subr.mxu0 0.0
  %541 = vmatpush1.msra.mxu0 0.0
  %542 = vmatprep.subr.mxu0 0.0
  %543 = vmatpush1.msra.mxu0 0.0
  %544 = vmatprep.mubr.f32.mxu0 0.0
  %545 = vmatmul.mubr.f32.gmra.mrb[0].mxu0 %v475
  %v546 = vpop.f32.mrb[0].mxu0
  %v547 = vadd.f32 0.0, %v546
  %v548 = vpop.f32.mrb[0].mxu0
  %549 = vmatprep.mubr.f32.mxu0 0.0
  %550 = vmatmul.mubr.f32.gmra.mrb[0].mxu0 %v478
  %v551 = vpop.f32.mrb[0].mxu0
  %v552 = vadd.f32 0.0, %v551
  %v553 = vpop.f32.mrb[0].mxu0
  %554 = vdwg.mxu0
  %557 = vrot.lane.b32.xlu0 %v49, 32
  %v558 = vpop.permute.xlu0 %557
  %559 = vrot.lane.b32.xlu0 %v51, 32
  %v560 = vpop.permute.xlu0 %559
  %v564 = vsel %vm154, %v547, 0
  %v567 = vsel %vm154, %v552, 0
  %569 = vmatprep.subr.mxu0 0.0
  %570 = vmatpush1.msra.mxu0 %v558
  %571 = vmatprep.subr.mxu0 0.0
  %572 = vmatpush1.msra.mxu0 %v560
  %573 = vmatprep.subr.mxu0 0.0
  %574 = vmatpush1.msra.mxu0 0.0
  %575 = vmatprep.subr.mxu0 0.0
  %576 = vmatpush1.msra.mxu0 0.0
  %577 = vmatprep.subr.mxu0 0.0
  %578 = vmatpush1.msra.mxu0 0.0
  %579 = vmatprep.subr.mxu0 0.0
  %580 = vmatpush1.msra.mxu0 0.0
  %581 = vmatprep.subr.mxu0 0.0
  %582 = vmatpush1.msra.mxu0 0.0
  %583 = vmatprep.subr.mxu0 0.0
  %584 = vmatpush1.msra.mxu0 0.0
  %585 = vmatprep.subr.mxu0 0.0
  %586 = vmatpush1.msra.mxu0 0.0
  %587 = vmatprep.subr.mxu0 0.0
  %588 = vmatpush1.msra.mxu0 0.0
  %589 = vmatprep.subr.mxu0 0.0
  %590 = vmatpush1.msra.mxu0 0.0
  %591 = vmatprep.subr.mxu0 0.0
  %592 = vmatpush1.msra.mxu0 0.0
  %593 = vmatprep.subr.mxu0 0.0
  %594 = vmatpush1.msra.mxu0 0.0
  %595 = vmatprep.subr.mxu0 0.0
  %596 = vmatpush1.msra.mxu0 0.0
  %597 = vmatprep.subr.mxu0 0.0
  %598 = vmatpush1.msra.mxu0 0.0
  %599 = vmatprep.subr.mxu0 0.0
  %600 = vmatpush1.msra.mxu0 0.0
  %601 = vmatprep.subr.mxu0 0.0
  %602 = vmatpush1.msra.mxu0 0.0
  %603 = vmatprep.subr.mxu0 0.0
  %604 = vmatpush1.msra.mxu0 0.0
  %605 = vmatprep.subr.mxu0 0.0
  %606 = vmatpush1.msra.mxu0 0.0
  %607 = vmatprep.subr.mxu0 0.0
  %608 = vmatpush1.msra.mxu0 0.0
  %609 = vmatprep.subr.mxu0 0.0
  %610 = vmatpush1.msra.mxu0 0.0
  %611 = vmatprep.subr.mxu0 0.0
  %612 = vmatpush1.msra.mxu0 0.0
  %613 = vmatprep.subr.mxu0 0.0
  %614 = vmatpush1.msra.mxu0 0.0
  %615 = vmatprep.subr.mxu0 0.0
  %616 = vmatpush1.msra.mxu0 0.0
  %617 = vmatprep.subr.mxu0 0.0
  %618 = vmatpush1.msra.mxu0 0.0
  %619 = vmatprep.subr.mxu0 0.0
  %620 = vmatpush1.msra.mxu0 0.0
  %621 = vmatprep.subr.mxu0 0.0
  %622 = vmatpush1.msra.mxu0 0.0
  %623 = vmatprep.subr.mxu0 0.0
  %624 = vmatpush1.msra.mxu0 0.0
  %625 = vmatprep.subr.mxu0 0.0
  %626 = vmatpush1.msra.mxu0 0.0
  %627 = vmatprep.subr.mxu0 0.0
  %628 = vmatpush1.msra.mxu0 0.0
  %629 = vmatprep.subr.mxu0 0.0
  %630 = vmatpush1.msra.mxu0 0.0
  %631 = vmatprep.subr.mxu0 0.0
  %632 = vmatpush1.msra.mxu0 0.0
  %633 = vmatprep.mubr.f32.mxu0 0.0
  %634 = vmatmul.mubr.f32.gmra.mrb[0].mxu0 %v564
  %v635 = vpop.f32.mrb[0].mxu0
  %v636 = vadd.f32 0.0, %v635
  %v637 = vpop.f32.mrb[0].mxu0
  %638 = vmatprep.mubr.f32.mxu0 0.0
  %639 = vmatmul.mubr.f32.gmra.mrb[0].mxu0 %v567
  %v640 = vpop.f32.mrb[0].mxu0
  %v641 = vadd.f32 0.0, %v640
  %v642 = vpop.f32.mrb[0].mxu0
  %643 = vdwg.mxu0
  %646 = vrot.lane.b32.xlu0 %v45, 32
  %v647 = vpop.permute.xlu0 %646
  %648 = vrot.lane.b32.xlu0 %v47, 32
  %v649 = vpop.permute.xlu0 %648
  %v653 = vsel %vm154, %v343, 0
  %v656 = vsel %vm154, %v348, 0
  %658 = vmatprep.subr.mxu0 0.0
  %659 = vmatpush1.msra.mxu0 %v647
  %660 = vmatprep.subr.mxu0 0.0
  %661 = vmatpush1.msra.mxu0 %v649
  %662 = vmatprep.subr.mxu0 0.0
  %663 = vmatpush1.msra.mxu0 0.0
  %664 = vmatprep.subr.mxu0 0.0
  %665 = vmatpush1.msra.mxu0 0.0
  %666 = vmatprep.subr.mxu0 0.0
  %667 = vmatpush1.msra.mxu0 0.0
  %668 = vmatprep.subr.mxu0 0.0
  %669 = vmatpush1.msra.mxu0 0.0
  %670 = vmatprep.subr.mxu0 0.0
  %671 = vmatpush1.msra.mxu0 0.0
  %672 = vmatprep.subr.mxu0 0.0
  %673 = vmatpush1.msra.mxu0 0.0
  %674 = vmatprep.subr.mxu0 0.0
  %675 = vmatpush1.msra.mxu0 0.0
  %676 = vmatprep.subr.mxu0 0.0
  %677 = vmatpush1.msra.mxu0 0.0
  %678 = vmatprep.subr.mxu0 0.0
  %679 = vmatpush1.msra.mxu0 0.0
  %680 = vmatprep.subr.mxu0 0.0
  %681 = vmatpush1.msra.mxu0 0.0
  %682 = vmatprep.subr.mxu0 0.0
  %683 = vmatpush1.msra.mxu0 0.0
  %684 = vmatprep.subr.mxu0 0.0
  %685 = vmatpush1.msra.mxu0 0.0
  %686 = vmatprep.subr.mxu0 0.0
  %687 = vmatpush1.msra.mxu0 0.0
  %688 = vmatprep.subr.mxu0 0.0
  %689 = vmatpush1.msra.mxu0 0.0
  %690 = vmatprep.subr.mxu0 0.0
  %691 = vmatpush1.msra.mxu0 0.0
  %692 = vmatprep.subr.mxu0 0.0
  %693 = vmatpush1.msra.mxu0 0.0
  %694 = vmatprep.subr.mxu0 0.0
  %695 = vmatpush1.msra.mxu0 0.0
  %696 = vmatprep.subr.mxu0 0.0
  %697 = vmatpush1.msra.mxu0 0.0
  %698 = vmatprep.subr.mxu0 0.0
  %699 = vmatpush1.msra.mxu0 0.0
  %700 = vmatprep.subr.mxu0 0.0
  %701 = vmatpush1.msra.mxu0 0.0
  %702 = vmatprep.subr.mxu0 0.0
  %703 = vmatpush1.msra.mxu0 0.0
  %704 = vmatprep.subr.mxu0 0.0
  %705 = vmatpush1.msra.mxu0 0.0
  %706 = vmatprep.subr.mxu0 0.0
  %707 = vmatpush1.msra.mxu0 0.0
  %708 = vmatprep.subr.mxu0 0.0
  %709 = vmatpush1.msra.mxu0 0.0
  %710 = vmatprep.subr.mxu0 0.0
  %711 = vmatpush1.msra.mxu0 0.0
  %712 = vmatprep.subr.mxu0 0.0
  %713 = vmatpush1.msra.mxu0 0.0
  %714 = vmatprep.subr.mxu0 0.0
  %715 = vmatpush1.msra.mxu0 0.0
  %716 = vmatprep.subr.mxu0 0.0
  %717 = vmatpush1.msra.mxu0 0.0
  %718 = vmatprep.subr.mxu0 0.0
  %719 = vmatpush1.msra.mxu0 0.0
  %720 = vmatprep.subr.mxu0 0.0
  %721 = vmatpush1.msra.mxu0 0.0
  %722 = vmatprep.mubr.f32.mxu0 0.0
  %723 = vmatmul.mubr.f32.gmra.mrb[0].mxu0 %v653
  %v724 = vpop.f32.mrb[0].mxu0
  %v725 = vadd.f32 %v636, %v724
  %v726 = vpop.f32.mrb[0].mxu0
  %727 = vmatprep.mubr.f32.mxu0 0.0
  %728 = vmatmul.mubr.f32.gmra.mrb[0].mxu0 %v656
  %v729 = vpop.f32.mrb[0].mxu0
  %v730 = vadd.f32 %v641, %v729
  %v731 = vpop.f32.mrb[0].mxu0
  %732 = vdwg.mxu0
  %v733 = vlaneseq
  %v734 = vshrl.u32 %v733, 7
  %v735 = vsub.s32 1, %v734
  %v736 = vrot.slane %v61, %v735
  %v737 = vadd.f32 %v725, %v736
  %v738 = vadd.f32 %v730, %v736
  %v739 = vadd.f32 %v43, %v737
  %v740 = vadd.f32 %v44, %v738
  %v741 = vsel %vm66, %v739, 0.0
  %742 = vadd.xlane.f32.xlu0 %v741
  %v743 = vpop.xlane.xlu0 %742
  %v744 = vsel %vm66, %v740, 0.0
  %745 = vadd.xlane.f32.xlu0 %v744
  %v746 = vpop.xlane.xlu0 %745
  %v747 = vrcp.pop 32.0
  %v748 = vmul.f32 %v743, %v747
  %v749 = vmul.f32 %v746, %v747
  %v750 = vsub.f32 %v739, %v748
  %v751 = vsub.f32 %v740, %v749
  %v752 = vmul.f32 %v750, %v750
  %v753 = vmul.f32 %v751, %v751
  %v754 = vsel %vm66, %v752, 0.0
  %755 = vadd.xlane.f32.xlu0 %v754
  %v756 = vpop.xlane.xlu0 %755
  %v757 = vsel %vm66, %v753, 0.0
  %758 = vadd.xlane.f32.xlu0 %v757
  %v759 = vpop.xlane.xlu0 %758
  %v760 = vmul.f32 %v756, %v747
  %v761 = vmul.f32 %v759, %v747
  %v762 = vadd.f32 %v760, 1e-05
  %v763 = vadd.f32 %v761, 1e-05
  %v764 = vrsqrt.pop %v762
  %v765 = vrsqrt.pop %v763
  %v766 = vmul.f32 %v750, %v764
  %v767 = vmul.f32 %v751, %v765
  %v768 = vlaneseq
  %v769 = vshrl.u32 %v768, 7
  %v770 = vsub.s32 2, %v769
  %v771 = vrot.slane %v61, %v770
  %v772 = vmul.f32 %v766, %v771
  %v773 = vmul.f32 %v767, %v771
  %v774 = vlaneseq
  %v775 = vshrl.u32 %v774, 7
  %v776 = vsub.s32 3, %v775
  %v777 = vrot.slane %v61, %v776
  %v778 = vadd.f32 %v772, %v777
  %v779 = vadd.f32 %v773, %v777
  %v780 = vlaneseq
  %v781 = vshrl.u32 %v780, 7
  %v782 = vsub.s32 4, %v781
  %v783 = vrot.slane %v61, %v782
  %v785 = vsel %vm66, %v778, 0
  %v788 = vsel %vm66, %v779, 0
  %790 = vmatprep.subr.mxu0 0.0
  %791 = vmatpush1.msra.mxu0 %v46
  %792 = vmatprep.subr.mxu0 0.0
  %793 = vmatpush1.msra.mxu0 %v48
  %794 = vmatprep.subr.mxu0 0.0
  %795 = vmatpush1.msra.mxu0 %v50
  %796 = vmatprep.subr.mxu0 0.0
  %797 = vmatpush1.msra.mxu0 %v52
  %798 = vmatprep.subr.mxu0 0.0
  %799 = vmatpush1.msra.mxu0 0.0
  %800 = vmatprep.subr.mxu0 0.0
  %801 = vmatpush1.msra.mxu0 0.0
  %802 = vmatprep.subr.mxu0 0.0
  %803 = vmatpush1.msra.mxu0 0.0
  %804 = vmatprep.subr.mxu0 0.0
  %805 = vmatpush1.msra.mxu0 0.0
  %806 = vmatprep.subr.mxu0 0.0
  %807 = vmatpush1.msra.mxu0 0.0
  %808 = vmatprep.subr.mxu0 0.0
  %809 = vmatpush1.msra.mxu0 0.0
  %810 = vmatprep.subr.mxu0 0.0
  %811 = vmatpush1.msra.mxu0 0.0
  %812 = vmatprep.subr.mxu0 0.0
  %813 = vmatpush1.msra.mxu0 0.0
  %814 = vmatprep.subr.mxu0 0.0
  %815 = vmatpush1.msra.mxu0 0.0
  %816 = vmatprep.subr.mxu0 0.0
  %817 = vmatpush1.msra.mxu0 0.0
  %818 = vmatprep.subr.mxu0 0.0
  %819 = vmatpush1.msra.mxu0 0.0
  %820 = vmatprep.subr.mxu0 0.0
  %821 = vmatpush1.msra.mxu0 0.0
  %822 = vmatprep.subr.mxu0 0.0
  %823 = vmatpush1.msra.mxu0 0.0
  %824 = vmatprep.subr.mxu0 0.0
  %825 = vmatpush1.msra.mxu0 0.0
  %826 = vmatprep.subr.mxu0 0.0
  %827 = vmatpush1.msra.mxu0 0.0
  %828 = vmatprep.subr.mxu0 0.0
  %829 = vmatpush1.msra.mxu0 0.0
  %830 = vmatprep.subr.mxu0 0.0
  %831 = vmatpush1.msra.mxu0 0.0
  %832 = vmatprep.subr.mxu0 0.0
  %833 = vmatpush1.msra.mxu0 0.0
  %834 = vmatprep.subr.mxu0 0.0
  %835 = vmatpush1.msra.mxu0 0.0
  %836 = vmatprep.subr.mxu0 0.0
  %837 = vmatpush1.msra.mxu0 0.0
  %838 = vmatprep.subr.mxu0 0.0
  %839 = vmatpush1.msra.mxu0 0.0
  %840 = vmatprep.subr.mxu0 0.0
  %841 = vmatpush1.msra.mxu0 0.0
  %842 = vmatprep.subr.mxu0 0.0
  %843 = vmatpush1.msra.mxu0 0.0
  %844 = vmatprep.subr.mxu0 0.0
  %845 = vmatpush1.msra.mxu0 0.0
  %846 = vmatprep.subr.mxu0 0.0
  %847 = vmatpush1.msra.mxu0 0.0
  %848 = vmatprep.subr.mxu0 0.0
  %849 = vmatpush1.msra.mxu0 0.0
  %850 = vmatprep.subr.mxu0 0.0
  %851 = vmatpush1.msra.mxu0 0.0
  %852 = vmatprep.subr.mxu0 0.0
  %853 = vmatpush1.msra.mxu0 0.0
  %854 = vmatprep.mubr.f32.mxu0 0.0
  %855 = vmatmul.mubr.f32.gmra.mrb[0].mxu0 %v785
  %v856 = vpop.f32.mrb[0].mxu0
  %v857 = vadd.f32 %v783, %v856
  %v858 = vpop.f32.mrb[0].mxu0
  %859 = vmatprep.mubr.f32.mxu0 0.0
  %860 = vmatmul.mubr.f32.gmra.mrb[0].mxu0 %v788
  %v861 = vpop.f32.mrb[0].mxu0
  %v862 = vadd.f32 %v783, %v861
  %v863 = vpop.f32.mrb[0].mxu0
  %864 = vdwg.mxu0
  %v865 = vmax.f32 %v857, 0.0
  %v866 = vmax.f32 %v862, 0.0
  %v867 = vlaneseq
  %v868 = vshrl.u32 %v867, 7
  %v869 = vsub.s32 5, %v868
  %v870 = vrot.slane %v61, %v869
  %vm871 = vcmask 523264
  %v873 = vsel %vm871, %v865, 0
  %v876 = vsel %vm871, %v866, 0
  %878 = vmatprep.subr.mxu0 0.0
  %879 = vmatpush1.msra.mxu0 %v53
  %880 = vmatprep.subr.mxu0 0.0
  %881 = vmatpush1.msra.mxu0 %v54
  %882 = vmatprep.subr.mxu0 0.0
  %883 = vmatpush1.msra.mxu0 %v55
  %884 = vmatprep.subr.mxu0 0.0
  %885 = vmatpush1.msra.mxu0 %v56
  %886 = vmatprep.subr.mxu0 0.0
  %887 = vmatpush1.msra.mxu0 %v57
  %888 = vmatprep.subr.mxu0 0.0
  %889 = vmatpush1.msra.mxu0 %v58
  %890 = vmatprep.subr.mxu0 0.0
  %891 = vmatpush1.msra.mxu0 %v59
  %892 = vmatprep.subr.mxu0 0.0
  %893 = vmatpush1.msra.mxu0 %v60
  %894 = vmatprep.subr.mxu0 0.0
  %895 = vmatpush1.msra.mxu0 0.0
  %896 = vmatprep.subr.mxu0 0.0
  %897 = vmatpush1.msra.mxu0 0.0
  %898 = vmatprep.subr.mxu0 0.0
  %899 = vmatpush1.msra.mxu0 0.0
  %900 = vmatprep.subr.mxu0 0.0
  %901 = vmatpush1.msra.mxu0 0.0
  %902 = vmatprep.subr.mxu0 0.0
  %903 = vmatpush1.msra.mxu0 0.0
  %904 = vmatprep.subr.mxu0 0.0
  %905 = vmatpush1.msra.mxu0 0.0
  %906 = vmatprep.subr.mxu0 0.0
  %907 = vmatpush1.msra.mxu0 0.0
  %908 = vmatprep.subr.mxu0 0.0
  %909 = vmatpush1.msra.mxu0 0.0
  %910 = vmatprep.subr.mxu0 0.0
  %911 = vmatpush1.msra.mxu0 0.0
  %912 = vmatprep.subr.mxu0 0.0
  %913 = vmatpush1.msra.mxu0 0.0
  %914 = vmatprep.subr.mxu0 0.0
  %915 = vmatpush1.msra.mxu0 0.0
  %916 = vmatprep.subr.mxu0 0.0
  %917 = vmatpush1.msra.mxu0 0.0
  %918 = vmatprep.subr.mxu0 0.0
  %919 = vmatpush1.msra.mxu0 0.0
  %920 = vmatprep.subr.mxu0 0.0
  %921 = vmatpush1.msra.mxu0 0.0
  %922 = vmatprep.subr.mxu0 0.0
  %923 = vmatpush1.msra.mxu0 0.0
  %924 = vmatprep.subr.mxu0 0.0
  %925 = vmatpush1.msra.mxu0 0.0
  %926 = vmatprep.subr.mxu0 0.0
  %927 = vmatpush1.msra.mxu0 0.0
  %928 = vmatprep.subr.mxu0 0.0
  %929 = vmatpush1.msra.mxu0 0.0
  %930 = vmatprep.subr.mxu0 0.0
  %931 = vmatpush1.msra.mxu0 0.0
  %932 = vmatprep.subr.mxu0 0.0
  %933 = vmatpush1.msra.mxu0 0.0
  %934 = vmatprep.subr.mxu0 0.0
  %935 = vmatpush1.msra.mxu0 0.0
  %936 = vmatprep.subr.mxu0 0.0
  %937 = vmatpush1.msra.mxu0 0.0
  %938 = vmatprep.subr.mxu0 0.0
  %939 = vmatpush1.msra.mxu0 0.0
  %940 = vmatprep.subr.mxu0 0.0
  %941 = vmatpush1.msra.mxu0 0.0
  %942 = vmatprep.mubr.f32.mxu0 0.0
  %943 = vmatmul.mubr.f32.gmra.mrb[0].mxu0 %v873
  %v944 = vpop.f32.mrb[0].mxu0
  %v945 = vadd.f32 %v870, %v944
  %v946 = vpop.f32.mrb[0].mxu0
  %947 = vmatprep.mubr.f32.mxu0 0.0
  %948 = vmatmul.mubr.f32.gmra.mrb[0].mxu0 %v876
  %v949 = vpop.f32.mrb[0].mxu0
  %v950 = vadd.f32 %v870, %v949
  %v951 = vpop.f32.mrb[0].mxu0
  %952 = vdwg.mxu0
  %v953 = vadd.f32 %v778, %v945
  %v954 = vadd.f32 %v779, %v950
  %v955 = vsel %vm66, %v953, 0.0
  %956 = vadd.xlane.f32.xlu0 %v955
  %v957 = vpop.xlane.xlu0 %956
  %v958 = vsel %vm66, %v954, 0.0
  %959 = vadd.xlane.f32.xlu0 %v958
  %v960 = vpop.xlane.xlu0 %959
  %v961 = vmul.f32 %v957, %v747
  %v962 = vmul.f32 %v960, %v747
  %v963 = vsub.f32 %v953, %v961
  %v964 = vsub.f32 %v954, %v962
  %v965 = vmul.f32 %v963, %v963
  %v966 = vmul.f32 %v964, %v964
  %v967 = vsel %vm66, %v965, 0.0
  %968 = vadd.xlane.f32.xlu0 %v967
  %v969 = vpop.xlane.xlu0 %968
  %v970 = vsel %vm66, %v966, 0.0
  %971 = vadd.xlane.f32.xlu0 %v970
  %v972 = vpop.xlane.xlu0 %971
  %v973 = vmul.f32 %v969, %v747
  %v974 = vmul.f32 %v972, %v747
  %v975 = vadd.f32 %v973, 1e-05
  %v976 = vadd.f32 %v974, 1e-05
  %v977 = vrsqrt.pop %v975
  %v978 = vrsqrt.pop %v976
  %v979 = vmul.f32 %v963, %v977
  %v980 = vmul.f32 %v964, %v978
  %v981 = vlaneseq
  %v982 = vshrl.u32 %v981, 7
  %v983 = vsub.s32 6, %v982
  %v984 = vrot.slane %v61, %v983
  %v985 = vmul.f32 %v979, %v984
  %v986 = vmul.f32 %v980, %v984
  %v987 = vlaneseq
  %v988 = vshrl.u32 %v987, 7
  %v989 = vsub.s32 7, %v988
  %v990 = vrot.slane %v61, %v989
  %v991 = vadd.f32 %v985, %v990
  %v992 = vadd.f32 %v986, %v990
  %s993 = scalar_lea.vmem %s3, 64
  %v994 = vld [vmem:[%s993] sm:$0xff]
  %v995 = vld [vmem:[%s993 + $0x8] sm:$0xff]
  %v996 = vld [vmem:[%s993 + $0x10] sm:$0xff]
  %v997 = vld [vmem:[%s993 + $0x18] sm:$0xff]
  %v998 = vld [vmem:[%s993 + $0x20] sm:$0xff]
  %v999 = vld [vmem:[%s993 + $0x28] sm:$0xff]
  %v1000 = vld [vmem:[%s993 + $0x30] sm:$0xff]
  %v1001 = vld [vmem:[%s993 + $0x38] sm:$0xff]
  %s1002 = scalar_lea.vmem %s4, 64
  %v1003 = vld [vmem:[%s1002] sm:$0xff]
  %v1004 = vld [vmem:[%s1002 + $0x8] sm:$0xff]
  %v1005 = vld [vmem:[%s1002 + $0x10] sm:$0xff]
  %v1006 = vld [vmem:[%s1002 + $0x18] sm:$0xff]
  %v1007 = vld [vmem:[%s1002 + $0x20] sm:$0xff]
  %v1008 = vld [vmem:[%s1002 + $0x28] sm:$0xff]
  %v1009 = vld [vmem:[%s1002 + $0x30] sm:$0xff]
  %v1010 = vld [vmem:[%s1002 + $0x38] sm:$0xff]
  %s1011 = scalar_lea.vmem %s5, 8
  %v1012 = vld [vmem:[%s1011] sm:$0xff]
  %v1013 = vlaneseq
  %v1014 = vshrl.u32 %v1013, 7
  %v1015 = vsub.s32 0, %v1014
  %v1016 = vrot.slane %v1012, %v1015
  %v1018 = vsel %vm66, %v991, 0
  %v1021 = vsel %vm66, %v992, 0
  %1023 = vmatprep.subr.mxu0 0.0
  %1024 = vmatpush1.msra.mxu0 %v994
  %1025 = vmatprep.subr.mxu0 0.0
  %1026 = vmatpush1.msra.mxu0 %v996
  %1027 = vmatprep.subr.mxu0 0.0
  %1028 = vmatpush1.msra.mxu0 %v998
  %1029 = vmatprep.subr.mxu0 0.0
  %1030 = vmatpush1.msra.mxu0 %v1000
  %1031 = vmatprep.subr.mxu0 0.0
  %1032 = vmatpush1.msra.mxu0 0.0
  %1033 = vmatprep.subr.mxu0 0.0
  %1034 = vmatpush1.msra.mxu0 0.0
  %1035 = vmatprep.subr.mxu0 0.0
  %1036 = vmatpush1.msra.mxu0 0.0
  %1037 = vmatprep.subr.mxu0 0.0
  %1038 = vmatpush1.msra.mxu0 0.0
  %1039 = vmatprep.subr.mxu0 0.0
  %1040 = vmatpush1.msra.mxu0 0.0
  %1041 = vmatprep.subr.mxu0 0.0
  %1042 = vmatpush1.msra.mxu0 0.0
  %1043 = vmatprep.subr.mxu0 0.0
  %1044 = vmatpush1.msra.mxu0 0.0
  %1045 = vmatprep.subr.mxu0 0.0
  %1046 = vmatpush1.msra.mxu0 0.0
  %1047 = vmatprep.subr.mxu0 0.0
  %1048 = vmatpush1.msra.mxu0 0.0
  %1049 = vmatprep.subr.mxu0 0.0
  %1050 = vmatpush1.msra.mxu0 0.0
  %1051 = vmatprep.subr.mxu0 0.0
  %1052 = vmatpush1.msra.mxu0 0.0
  %1053 = vmatprep.subr.mxu0 0.0
  %1054 = vmatpush1.msra.mxu0 0.0
  %1055 = vmatprep.subr.mxu0 0.0
  %1056 = vmatpush1.msra.mxu0 0.0
  %1057 = vmatprep.subr.mxu0 0.0
  %1058 = vmatpush1.msra.mxu0 0.0
  %1059 = vmatprep.subr.mxu0 0.0
  %1060 = vmatpush1.msra.mxu0 0.0
  %1061 = vmatprep.subr.mxu0 0.0
  %1062 = vmatpush1.msra.mxu0 0.0
  %1063 = vmatprep.subr.mxu0 0.0
  %1064 = vmatpush1.msra.mxu0 0.0
  %1065 = vmatprep.subr.mxu0 0.0
  %1066 = vmatpush1.msra.mxu0 0.0
  %1067 = vmatprep.subr.mxu0 0.0
  %1068 = vmatpush1.msra.mxu0 0.0
  %1069 = vmatprep.subr.mxu0 0.0
  %1070 = vmatpush1.msra.mxu0 0.0
  %1071 = vmatprep.subr.mxu0 0.0
  %1072 = vmatpush1.msra.mxu0 0.0
  %1073 = vmatprep.subr.mxu0 0.0
  %1074 = vmatpush1.msra.mxu0 0.0
  %1075 = vmatprep.subr.mxu0 0.0
  %1076 = vmatpush1.msra.mxu0 0.0
  %1077 = vmatprep.subr.mxu0 0.0
  %1078 = vmatpush1.msra.mxu0 0.0
  %1079 = vmatprep.subr.mxu0 0.0
  %1080 = vmatpush1.msra.mxu0 0.0
  %1081 = vmatprep.subr.mxu0 0.0
  %1082 = vmatpush1.msra.mxu0 0.0
  %1083 = vmatprep.subr.mxu0 0.0
  %1084 = vmatpush1.msra.mxu0 0.0
  %1085 = vmatprep.subr.mxu0 0.0
  %1086 = vmatpush1.msra.mxu0 0.0
  %1087 = vmatprep.mubr.f32.mxu0 0.0
  %1088 = vmatmul.mubr.f32.gmra.mrb[0].mxu0 %v1018
  %v1089 = vpop.f32.mrb[0].mxu0
  %v1090 = vadd.f32 %v1016, %v1089
  %v1091 = vpop.f32.mrb[0].mxu0
  %1092 = vmatprep.mubr.f32.mxu0 0.0
  %1093 = vmatmul.mubr.f32.gmra.mrb[0].mxu0 %v1021
  %v1094 = vpop.f32.mrb[0].mxu0
  %v1095 = vadd.f32 %v1016, %v1094
  %v1096 = vpop.f32.mrb[0].mxu0
  %1097 = vdwg.mxu0
  %1100 = vrot.lane.b32.xlu0 %v1090, 96
  %v1101 = vpop.permute.xlu0 %1100
  %1102 = vrot.lane.b32.xlu0 %v1095, 96
  %v1103 = vpop.permute.xlu0 %1102
  %v1104 = vsel %vm154, %v1090, 0
  %v1106 = vsel %vm154, %v1095, 0
  %v1108 = vsel %vm154, %v1101, 0
  %v1110 = vsel %vm154, %v1103, 0
  %1112 = vmatprep.subr.mxu0 0.0
  %1113 = vmatpush1.xpose.msra.mxu0 %v1108
  %1114 = vmatprep.subr.mxu0 0.0
  %1115 = vmatpush1.xpose.msra.mxu0 %v1110
  %1116 = vmatprep.subr.mxu0 0.0
  %1117 = vmatpush1.xpose.msra.mxu0 0.0
  %1118 = vmatprep.subr.mxu0 0.0
  %1119 = vmatpush1.xpose.msra.mxu0 0.0
  %1120 = vmatprep.subr.mxu0 0.0
  %1121 = vmatpush1.xpose.msra.mxu0 0.0
  %1122 = vmatprep.subr.mxu0 0.0
  %1123 = vmatpush1.xpose.msra.mxu0 0.0
  %1124 = vmatprep.subr.mxu0 0.0
  %1125 = vmatpush1.xpose.msra.mxu0 0.0
  %1126 = vmatprep.subr.mxu0 0.0
  %1127 = vmatpush1.xpose.msra.mxu0 0.0
  %1128 = vmatprep.subr.mxu0 0.0
  %1129 = vmatpush1.xpose.msra.mxu0 0.0
  %1130 = vmatprep.subr.mxu0 0.0
  %1131 = vmatpush1.xpose.msra.mxu0 0.0
  %1132 = vmatprep.subr.mxu0 0.0
  %1133 = vmatpush1.xpose.msra.mxu0 0.0
  %1134 = vmatprep.subr.mxu0 0.0
  %1135 = vmatpush1.xpose.msra.mxu0 0.0
  %1136 = vmatprep.subr.mxu0 0.0
  %1137 = vmatpush1.xpose.msra.mxu0 0.0
  %1138 = vmatprep.subr.mxu0 0.0
  %1139 = vmatpush1.xpose.msra.mxu0 0.0
  %1140 = vmatprep.subr.mxu0 0.0
  %1141 = vmatpush1.xpose.msra.mxu0 0.0
  %1142 = vmatprep.subr.mxu0 0.0
  %1143 = vmatpush1.xpose.msra.mxu0 0.0
  %1144 = vmatprep.subr.mxu0 0.0
  %1145 = vmatpush1.xpose.msra.mxu0 0.0
  %1146 = vmatprep.subr.mxu0 0.0
  %1147 = vmatpush1.xpose.msra.mxu0 0.0
  %1148 = vmatprep.subr.mxu0 0.0
  %1149 = vmatpush1.xpose.msra.mxu0 0.0
  %1150 = vmatprep.subr.mxu0 0.0
  %1151 = vmatpush1.xpose.msra.mxu0 0.0
  %1152 = vmatprep.subr.mxu0 0.0
  %1153 = vmatpush1.xpose.msra.mxu0 0.0
  %1154 = vmatprep.subr.mxu0 0.0
  %1155 = vmatpush1.xpose.msra.mxu0 0.0
  %1156 = vmatprep.subr.mxu0 0.0
  %1157 = vmatpush1.xpose.msra.mxu0 0.0
  %1158 = vmatprep.subr.mxu0 0.0
  %1159 = vmatpush1.xpose.msra.mxu0 0.0
  %1160 = vmatprep.subr.mxu0 0.0
  %1161 = vmatpush1.xpose.msra.mxu0 0.0
  %1162 = vmatprep.subr.mxu0 0.0
  %1163 = vmatpush1.xpose.msra.mxu0 0.0
  %1164 = vmatprep.subr.mxu0 0.0
  %1165 = vmatpush1.xpose.msra.mxu0 0.0
  %1166 = vmatprep.subr.mxu0 0.0
  %1167 = vmatpush1.xpose.msra.mxu0 0.0
  %1168 = vmatprep.subr.mxu0 0.0
  %1169 = vmatpush1.xpose.msra.mxu0 0.0
  %1170 = vmatprep.subr.mxu0 0.0
  %1171 = vmatpush1.xpose.msra.mxu0 0.0
  %1172 = vmatprep.subr.mxu0 0.0
  %1173 = vmatpush1.xpose.msra.mxu0 0.0
  %1174 = vmatprep.subr.mxu0 0.0
  %1175 = vmatpush1.xpose.msra.mxu0 0.0
  %1176 = vmatprep.mubr.f32.mxu0 0.0
  %1177 = vmatmul.mubr.f32.gmra.mrb[0].mxu0 %v1104
  %v1178 = vpop.f32.mrb[0].mxu0
  %v1179 = vadd.f32 0.0, %v1178
  %v1180 = vpop.f32.mrb[0].mxu0
  %1181 = vmatprep.mubr.f32.mxu0 0.0
  %1182 = vmatmul.mubr.f32.gmra.mrb[0].mxu0 %v1106
  %v1183 = vpop.f32.mrb[0].mxu0
  %v1184 = vadd.f32 0.0, %v1183
  %v1185 = vpop.f32.mrb[0].mxu0
  %1186 = vdwg.mxu0
  %v1187 = vmul.f32 %v1179, 0.25
  %v1188 = vmul.f32 %v1184, 0.25
  %v1189 = vadd.f32 %v1187, %v35
  %v1190 = vadd.f32 %v1188, %v36
  %v1191 = vsel %vm154, %v1189, -inf
  %1192 = vmax.xlane.f32.xlu0 %v1191
  %v1193 = vpop.xlane.xlu0 %1192
  %v1194 = vsel %vm154, %v1190, -inf
  %1195 = vmax.xlane.f32.xlu0 %v1194
  %v1196 = vpop.xlane.xlu0 %1195
  %v1197 = vsub.f32 %v1189, %v1193
  %v1198 = vsub.f32 %v1190, %v1196
  %v1199 = vmul.f32 %v1197, 1.442695
  %v1200 = vpow.pop %v1199
  %v1201 = vmul.f32 %v1198, 1.442695
  %v1202 = vpow.pop %v1201
  %v1203 = vsel %vm154, %v1200, 0.0
  %1204 = vadd.xlane.f32.xlu0 %v1203
  %v1205 = vpop.xlane.xlu0 %1204
  %v1206 = vsel %vm154, %v1202, 0.0
  %1207 = vadd.xlane.f32.xlu0 %v1206
  %v1208 = vpop.xlane.xlu0 %1207
  %v1209 = vrcp.pop %v1205
  %v1210 = vrcp.pop %v1208
  %v1211 = vmul.f32 %v1200, %v1209
  %v1212 = vmul.f32 %v1202, %v1210
  %1213 = vrot.lane.b32.xlu0 %v1090, 64
  %v1214 = vpop.permute.xlu0 %1213
  %1215 = vrot.lane.b32.xlu0 %v1095, 64
  %v1216 = vpop.permute.xlu0 %1215
  %v1220 = vsel %vm154, %v1211, 0
  %v1223 = vsel %vm154, %v1212, 0
  %1225 = vmatprep.subr.mxu0 0.0
  %1226 = vmatpush1.msra.mxu0 %v1214
  %1227 = vmatprep.subr.mxu0 0.0
  %1228 = vmatpush1.msra.mxu0 %v1216
  %1229 = vmatprep.subr.mxu0 0.0
  %1230 = vmatpush1.msra.mxu0 0.0
  %1231 = vmatprep.subr.mxu0 0.0
  %1232 = vmatpush1.msra.mxu0 0.0
  %1233 = vmatprep.subr.mxu0 0.0
  %1234 = vmatpush1.msra.mxu0 0.0
  %1235 = vmatprep.subr.mxu0 0.0
  %1236 = vmatpush1.msra.mxu0 0.0
  %1237 = vmatprep.subr.mxu0 0.0
  %1238 = vmatpush1.msra.mxu0 0.0
  %1239 = vmatprep.subr.mxu0 0.0
  %1240 = vmatpush1.msra.mxu0 0.0
  %1241 = vmatprep.subr.mxu0 0.0
  %1242 = vmatpush1.msra.mxu0 0.0
  %1243 = vmatprep.subr.mxu0 0.0
  %1244 = vmatpush1.msra.mxu0 0.0
  %1245 = vmatprep.subr.mxu0 0.0
  %1246 = vmatpush1.msra.mxu0 0.0
  %1247 = vmatprep.subr.mxu0 0.0
  %1248 = vmatpush1.msra.mxu0 0.0
  %1249 = vmatprep.subr.mxu0 0.0
  %1250 = vmatpush1.msra.mxu0 0.0
  %1251 = vmatprep.subr.mxu0 0.0
  %1252 = vmatpush1.msra.mxu0 0.0
  %1253 = vmatprep.subr.mxu0 0.0
  %1254 = vmatpush1.msra.mxu0 0.0
  %1255 = vmatprep.subr.mxu0 0.0
  %1256 = vmatpush1.msra.mxu0 0.0
  %1257 = vmatprep.subr.mxu0 0.0
  %1258 = vmatpush1.msra.mxu0 0.0
  %1259 = vmatprep.subr.mxu0 0.0
  %1260 = vmatpush1.msra.mxu0 0.0
  %1261 = vmatprep.subr.mxu0 0.0
  %1262 = vmatpush1.msra.mxu0 0.0
  %1263 = vmatprep.subr.mxu0 0.0
  %1264 = vmatpush1.msra.mxu0 0.0
  %1265 = vmatprep.subr.mxu0 0.0
  %1266 = vmatpush1.msra.mxu0 0.0
  %1267 = vmatprep.subr.mxu0 0.0
  %1268 = vmatpush1.msra.mxu0 0.0
  %1269 = vmatprep.subr.mxu0 0.0
  %1270 = vmatpush1.msra.mxu0 0.0
  %1271 = vmatprep.subr.mxu0 0.0
  %1272 = vmatpush1.msra.mxu0 0.0
  %1273 = vmatprep.subr.mxu0 0.0
  %1274 = vmatpush1.msra.mxu0 0.0
  %1275 = vmatprep.subr.mxu0 0.0
  %1276 = vmatpush1.msra.mxu0 0.0
  %1277 = vmatprep.subr.mxu0 0.0
  %1278 = vmatpush1.msra.mxu0 0.0
  %1279 = vmatprep.subr.mxu0 0.0
  %1280 = vmatpush1.msra.mxu0 0.0
  %1281 = vmatprep.subr.mxu0 0.0
  %1282 = vmatpush1.msra.mxu0 0.0
  %1283 = vmatprep.subr.mxu0 0.0
  %1284 = vmatpush1.msra.mxu0 0.0
  %1285 = vmatprep.subr.mxu0 0.0
  %1286 = vmatpush1.msra.mxu0 0.0
  %1287 = vmatprep.subr.mxu0 0.0
  %1288 = vmatpush1.msra.mxu0 0.0
  %1289 = vmatprep.mubr.f32.mxu0 0.0
  %1290 = vmatmul.mubr.f32.gmra.mrb[0].mxu0 %v1220
  %v1291 = vpop.f32.mrb[0].mxu0
  %v1292 = vadd.f32 0.0, %v1291
  %v1293 = vpop.f32.mrb[0].mxu0
  %1294 = vmatprep.mubr.f32.mxu0 0.0
  %1295 = vmatmul.mubr.f32.gmra.mrb[0].mxu0 %v1223
  %v1296 = vpop.f32.mrb[0].mxu0
  %v1297 = vadd.f32 0.0, %v1296
  %v1298 = vpop.f32.mrb[0].mxu0
  %1299 = vdwg.mxu0
  %1300 = vrot.lane.b32.xlu0 %v1090, 112
  %v1301 = vpop.permute.xlu0 %1300
  %1302 = vrot.lane.b32.xlu0 %v1095, 112
  %v1303 = vpop.permute.xlu0 %1302
  %1304 = vrot.lane.b32.xlu0 %v1090, 80
  %v1305 = vpop.permute.xlu0 %1304
  %1306 = vrot.lane.b32.xlu0 %v1095, 80
  %v1307 = vpop.permute.xlu0 %1306
  %v1308 = vsel %vm154, %v1301, 0
  %v1310 = vsel %vm154, %v1303, 0
  %v1312 = vsel %vm154, %v1305, 0
  %v1314 = vsel %vm154, %v1307, 0
  %1316 = vmatprep.subr.mxu0 0.0
  %1317 = vmatpush1.xpose.msra.mxu0 %v1312
  %1318 = vmatprep.subr.mxu0 0.0
  %1319 = vmatpush1.xpose.msra.mxu0 %v1314
  %1320 = vmatprep.subr.mxu0 0.0
  %1321 = vmatpush1.xpose.msra.mxu0 0.0
  %1322 = vmatprep.subr.mxu0 0.0
  %1323 = vmatpush1.xpose.msra.mxu0 0.0
  %1324 = vmatprep.subr.mxu0 0.0
  %1325 = vmatpush1.xpose.msra.mxu0 0.0
  %1326 = vmatprep.subr.mxu0 0.0
  %1327 = vmatpush1.xpose.msra.mxu0 0.0
  %1328 = vmatprep.subr.mxu0 0.0
  %1329 = vmatpush1.xpose.msra.mxu0 0.0
  %1330 = vmatprep.subr.mxu0 0.0
  %1331 = vmatpush1.xpose.msra.mxu0 0.0
  %1332 = vmatprep.subr.mxu0 0.0
  %1333 = vmatpush1.xpose.msra.mxu0 0.0
  %1334 = vmatprep.subr.mxu0 0.0
  %1335 = vmatpush1.xpose.msra.mxu0 0.0
  %1336 = vmatprep.subr.mxu0 0.0
  %1337 = vmatpush1.xpose.msra.mxu0 0.0
  %1338 = vmatprep.subr.mxu0 0.0
  %1339 = vmatpush1.xpose.msra.mxu0 0.0
  %1340 = vmatprep.subr.mxu0 0.0
  %1341 = vmatpush1.xpose.msra.mxu0 0.0
  %1342 = vmatprep.subr.mxu0 0.0
  %1343 = vmatpush1.xpose.msra.mxu0 0.0
  %1344 = vmatprep.subr.mxu0 0.0
  %1345 = vmatpush1.xpose.msra.mxu0 0.0
  %1346 = vmatprep.subr.mxu0 0.0
  %1347 = vmatpush1.xpose.msra.mxu0 0.0
  %1348 = vmatprep.subr.mxu0 0.0
  %1349 = vmatpush1.xpose.msra.mxu0 0.0
  %1350 = vmatprep.subr.mxu0 0.0
  %1351 = vmatpush1.xpose.msra.mxu0 0.0
  %1352 = vmatprep.subr.mxu0 0.0
  %1353 = vmatpush1.xpose.msra.mxu0 0.0
  %1354 = vmatprep.subr.mxu0 0.0
  %1355 = vmatpush1.xpose.msra.mxu0 0.0
  %1356 = vmatprep.subr.mxu0 0.0
  %1357 = vmatpush1.xpose.msra.mxu0 0.0
  %1358 = vmatprep.subr.mxu0 0.0
  %1359 = vmatpush1.xpose.msra.mxu0 0.0
  %1360 = vmatprep.subr.mxu0 0.0
  %1361 = vmatpush1.xpose.msra.mxu0 0.0
  %1362 = vmatprep.subr.mxu0 0.0
  %1363 = vmatpush1.xpose.msra.mxu0 0.0
  %1364 = vmatprep.subr.mxu0 0.0
  %1365 = vmatpush1.xpose.msra.mxu0 0.0
  %1366 = vmatprep.subr.mxu0 0.0
  %1367 = vmatpush1.xpose.msra.mxu0 0.0
  %1368 = vmatprep.subr.mxu0 0.0
  %1369 = vmatpush1.xpose.msra.mxu0 0.0
  %1370 = vmatprep.subr.mxu0 0.0
  %1371 = vmatpush1.xpose.msra.mxu0 0.0
  %1372 = vmatprep.subr.mxu0 0.0
  %1373 = vmatpush1.xpose.msra.mxu0 0.0
  %1374 = vmatprep.subr.mxu0 0.0
  %1375 = vmatpush1.xpose.msra.mxu0 0.0
  %1376 = vmatprep.subr.mxu0 0.0
  %1377 = vmatpush1.xpose.msra.mxu0 0.0
  %1378 = vmatprep.subr.mxu0 0.0
  %1379 = vmatpush1.xpose.msra.mxu0 0.0
  %1380 = vmatprep.mubr.f32.mxu0 0.0
  %1381 = vmatmul.mubr.f32.gmra.mrb[0].mxu0 %v1308
  %v1382 = vpop.f32.mrb[0].mxu0
  %v1383 = vadd.f32 0.0, %v1382
  %v1384 = vpop.f32.mrb[0].mxu0
  %1385 = vmatprep.mubr.f32.mxu0 0.0
  %1386 = vmatmul.mubr.f32.gmra.mrb[0].mxu0 %v1310
  %v1387 = vpop.f32.mrb[0].mxu0
  %v1388 = vadd.f32 0.0, %v1387
  %v1389 = vpop.f32.mrb[0].mxu0
  %1390 = vdwg.mxu0
  %v1391 = vmul.f32 %v1383, 0.25
  %v1392 = vmul.f32 %v1388, 0.25
  %v1393 = vadd.f32 %v1391, %v35
  %v1394 = vadd.f32 %v1392, %v36
  %v1395 = vsel %vm154, %v1393, -inf
  %1396 = vmax.xlane.f32.xlu0 %v1395
  %v1397 = vpop.xlane.xlu0 %1396
  %v1398 = vsel %vm154, %v1394, -inf
  %1399 = vmax.xlane.f32.xlu0 %v1398
  %v1400 = vpop.xlane.xlu0 %1399
  %v1401 = vsub.f32 %v1393, %v1397
  %v1402 = vsub.f32 %v1394, %v1400
  %v1403 = vmul.f32 %v1401, 1.442695
  %v1404 = vpow.pop %v1403
  %v1405 = vmul.f32 %v1402, 1.442695
  %v1406 = vpow.pop %v1405
  %v1407 = vsel %vm154, %v1404, 0.0
  %1408 = vadd.xlane.f32.xlu0 %v1407
  %v1409 = vpop.xlane.xlu0 %1408
  %v1410 = vsel %vm154, %v1406, 0.0
  %1411 = vadd.xlane.f32.xlu0 %v1410
  %v1412 = vpop.xlane.xlu0 %1411
  %v1413 = vrcp.pop %v1409
  %v1414 = vrcp.pop %v1412
  %v1415 = vmul.f32 %v1404, %v1413
  %v1416 = vmul.f32 %v1406, %v1414
  %1417 = vrot.lane.b32.xlu0 %v1090, 48
  %v1418 = vpop.permute.xlu0 %1417
  %1419 = vrot.lane.b32.xlu0 %v1095, 48
  %v1420 = vpop.permute.xlu0 %1419
  %v1424 = vsel %vm154, %v1415, 0
  %v1427 = vsel %vm154, %v1416, 0
  %1429 = vmatprep.subr.mxu0 0.0
  %1430 = vmatpush1.msra.mxu0 %v1418
  %1431 = vmatprep.subr.mxu0 0.0
  %1432 = vmatpush1.msra.mxu0 %v1420
  %1433 = vmatprep.subr.mxu0 0.0
  %1434 = vmatpush1.msra.mxu0 0.0
  %1435 = vmatprep.subr.mxu0 0.0
  %1436 = vmatpush1.msra.mxu0 0.0
  %1437 = vmatprep.subr.mxu0 0.0
  %1438 = vmatpush1.msra.mxu0 0.0
  %1439 = vmatprep.subr.mxu0 0.0
  %1440 = vmatpush1.msra.mxu0 0.0
  %1441 = vmatprep.subr.mxu0 0.0
  %1442 = vmatpush1.msra.mxu0 0.0
  %1443 = vmatprep.subr.mxu0 0.0
  %1444 = vmatpush1.msra.mxu0 0.0
  %1445 = vmatprep.subr.mxu0 0.0
  %1446 = vmatpush1.msra.mxu0 0.0
  %1447 = vmatprep.subr.mxu0 0.0
  %1448 = vmatpush1.msra.mxu0 0.0
  %1449 = vmatprep.subr.mxu0 0.0
  %1450 = vmatpush1.msra.mxu0 0.0
  %1451 = vmatprep.subr.mxu0 0.0
  %1452 = vmatpush1.msra.mxu0 0.0
  %1453 = vmatprep.subr.mxu0 0.0
  %1454 = vmatpush1.msra.mxu0 0.0
  %1455 = vmatprep.subr.mxu0 0.0
  %1456 = vmatpush1.msra.mxu0 0.0
  %1457 = vmatprep.subr.mxu0 0.0
  %1458 = vmatpush1.msra.mxu0 0.0
  %1459 = vmatprep.subr.mxu0 0.0
  %1460 = vmatpush1.msra.mxu0 0.0
  %1461 = vmatprep.subr.mxu0 0.0
  %1462 = vmatpush1.msra.mxu0 0.0
  %1463 = vmatprep.subr.mxu0 0.0
  %1464 = vmatpush1.msra.mxu0 0.0
  %1465 = vmatprep.subr.mxu0 0.0
  %1466 = vmatpush1.msra.mxu0 0.0
  %1467 = vmatprep.subr.mxu0 0.0
  %1468 = vmatpush1.msra.mxu0 0.0
  %1469 = vmatprep.subr.mxu0 0.0
  %1470 = vmatpush1.msra.mxu0 0.0
  %1471 = vmatprep.subr.mxu0 0.0
  %1472 = vmatpush1.msra.mxu0 0.0
  %1473 = vmatprep.subr.mxu0 0.0
  %1474 = vmatpush1.msra.mxu0 0.0
  %1475 = vmatprep.subr.mxu0 0.0
  %1476 = vmatpush1.msra.mxu0 0.0
  %1477 = vmatprep.subr.mxu0 0.0
  %1478 = vmatpush1.msra.mxu0 0.0
  %1479 = vmatprep.subr.mxu0 0.0
  %1480 = vmatpush1.msra.mxu0 0.0
  %1481 = vmatprep.subr.mxu0 0.0
  %1482 = vmatpush1.msra.mxu0 0.0
  %1483 = vmatprep.subr.mxu0 0.0
  %1484 = vmatpush1.msra.mxu0 0.0
  %1485 = vmatprep.subr.mxu0 0.0
  %1486 = vmatpush1.msra.mxu0 0.0
  %1487 = vmatprep.subr.mxu0 0.0
  %1488 = vmatpush1.msra.mxu0 0.0
  %1489 = vmatprep.subr.mxu0 0.0
  %1490 = vmatpush1.msra.mxu0 0.0
  %1491 = vmatprep.subr.mxu0 0.0
  %1492 = vmatpush1.msra.mxu0 0.0
  %1493 = vmatprep.mubr.f32.mxu0 0.0
  %1494 = vmatmul.mubr.f32.gmra.mrb[0].mxu0 %v1424
  %v1495 = vpop.f32.mrb[0].mxu0
  %v1496 = vadd.f32 0.0, %v1495
  %v1497 = vpop.f32.mrb[0].mxu0
  %1498 = vmatprep.mubr.f32.mxu0 0.0
  %1499 = vmatmul.mubr.f32.gmra.mrb[0].mxu0 %v1427
  %v1500 = vpop.f32.mrb[0].mxu0
  %v1501 = vadd.f32 0.0, %v1500
  %v1502 = vpop.f32.mrb[0].mxu0
  %1503 = vdwg.mxu0
  %1506 = vrot.lane.b32.xlu0 %v998, 32
  %v1507 = vpop.permute.xlu0 %1506
  %1508 = vrot.lane.b32.xlu0 %v1000, 32
  %v1509 = vpop.permute.xlu0 %1508
  %v1513 = vsel %vm154, %v1496, 0
  %v1516 = vsel %vm154, %v1501, 0
  %1518 = vmatprep.subr.mxu0 0.0
  %1519 = vmatpush1.msra.mxu0 %v1507
  %1520 = vmatprep.subr.mxu0 0.0
  %1521 = vmatpush1.msra.mxu0 %v1509
  %1522 = vmatprep.subr.mxu0 0.0
  %1523 = vmatpush1.msra.mxu0 0.0
  %1524 = vmatprep.subr.mxu0 0.0
  %1525 = vmatpush1.msra.mxu0 0.0
  %1526 = vmatprep.subr.mxu0 0.0
  %1527 = vmatpush1.msra.mxu0 0.0
  %1528 = vmatprep.subr.mxu0 0.0
  %1529 = vmatpush1.msra.mxu0 0.0
  %1530 = vmatprep.subr.mxu0 0.0
  %1531 = vmatpush1.msra.mxu0 0.0
  %1532 = vmatprep.subr.mxu0 0.0
  %1533 = vmatpush1.msra.mxu0 0.0
  %1534 = vmatprep.subr.mxu0 0.0
  %1535 = vmatpush1.msra.mxu0 0.0
  %1536 = vmatprep.subr.mxu0 0.0
  %1537 = vmatpush1.msra.mxu0 0.0
  %1538 = vmatprep.subr.mxu0 0.0
  %1539 = vmatpush1.msra.mxu0 0.0
  %1540 = vmatprep.subr.mxu0 0.0
  %1541 = vmatpush1.msra.mxu0 0.0
  %1542 = vmatprep.subr.mxu0 0.0
  %1543 = vmatpush1.msra.mxu0 0.0
  %1544 = vmatprep.subr.mxu0 0.0
  %1545 = vmatpush1.msra.mxu0 0.0
  %1546 = vmatprep.subr.mxu0 0.0
  %1547 = vmatpush1.msra.mxu0 0.0
  %1548 = vmatprep.subr.mxu0 0.0
  %1549 = vmatpush1.msra.mxu0 0.0
  %1550 = vmatprep.subr.mxu0 0.0
  %1551 = vmatpush1.msra.mxu0 0.0
  %1552 = vmatprep.subr.mxu0 0.0
  %1553 = vmatpush1.msra.mxu0 0.0
  %1554 = vmatprep.subr.mxu0 0.0
  %1555 = vmatpush1.msra.mxu0 0.0
  %1556 = vmatprep.subr.mxu0 0.0
  %1557 = vmatpush1.msra.mxu0 0.0
  %1558 = vmatprep.subr.mxu0 0.0
  %1559 = vmatpush1.msra.mxu0 0.0
  %1560 = vmatprep.subr.mxu0 0.0
  %1561 = vmatpush1.msra.mxu0 0.0
  %1562 = vmatprep.subr.mxu0 0.0
  %1563 = vmatpush1.msra.mxu0 0.0
  %1564 = vmatprep.subr.mxu0 0.0
  %1565 = vmatpush1.msra.mxu0 0.0
  %1566 = vmatprep.subr.mxu0 0.0
  %1567 = vmatpush1.msra.mxu0 0.0
  %1568 = vmatprep.subr.mxu0 0.0
  %1569 = vmatpush1.msra.mxu0 0.0
  %1570 = vmatprep.subr.mxu0 0.0
  %1571 = vmatpush1.msra.mxu0 0.0
  %1572 = vmatprep.subr.mxu0 0.0
  %1573 = vmatpush1.msra.mxu0 0.0
  %1574 = vmatprep.subr.mxu0 0.0
  %1575 = vmatpush1.msra.mxu0 0.0
  %1576 = vmatprep.subr.mxu0 0.0
  %1577 = vmatpush1.msra.mxu0 0.0
  %1578 = vmatprep.subr.mxu0 0.0
  %1579 = vmatpush1.msra.mxu0 0.0
  %1580 = vmatprep.subr.mxu0 0.0
  %1581 = vmatpush1.msra.mxu0 0.0
  %1582 = vmatprep.mubr.f32.mxu0 0.0
  %1583 = vmatmul.mubr.f32.gmra.mrb[0].mxu0 %v1513
  %v1584 = vpop.f32.mrb[0].mxu0
  %v1585 = vadd.f32 0.0, %v1584
  %v1586 = vpop.f32.mrb[0].mxu0
  %1587 = vmatprep.mubr.f32.mxu0 0.0
  %1588 = vmatmul.mubr.f32.gmra.mrb[0].mxu0 %v1516
  %v1589 = vpop.f32.mrb[0].mxu0
  %v1590 = vadd.f32 0.0, %v1589
  %v1591 = vpop.f32.mrb[0].mxu0
  %1592 = vdwg.mxu0
  %1595 = vrot.lane.b32.xlu0 %v994, 32
  %v1596 = vpop.permute.xlu0 %1595
  %1597 = vrot.lane.b32.xlu0 %v996, 32
  %v1598 = vpop.permute.xlu0 %1597
  %v1602 = vsel %vm154, %v1292, 0
  %v1605 = vsel %vm154, %v1297, 0
  %1607 = vmatprep.subr.mxu0 0.0
  %1608 = vmatpush1.msra.mxu0 %v1596
  %1609 = vmatprep.subr.mxu0 0.0
  %1610 = vmatpush1.msra.mxu0 %v1598
  %1611 = vmatprep.subr.mxu0 0.0
  %1612 = vmatpush1.msra.mxu0 0.0
  %1613 = vmatprep.subr.mxu0 0.0
  %1614 = vmatpush1.msra.mxu0 0.0
  %1615 = vmatprep.subr.mxu0 0.0
  %1616 = vmatpush1.msra.mxu0 0.0
  %1617 = vmatprep.subr.mxu0 0.0
  %1618 = vmatpush1.msra.mxu0 0.0
  %1619 = vmatprep.subr.mxu0 0.0
  %1620 = vmatpush1.msra.mxu0 0.0
  %1621 = vmatprep.subr.mxu0 0.0
  %1622 = vmatpush1.msra.mxu0 0.0
  %1623 = vmatprep.subr.mxu0 0.0
  %1624 = vmatpush1.msra.mxu0 0.0
  %1625 = vmatprep.subr.mxu0 0.0
  %1626 = vmatpush1.msra.mxu0 0.0
  %1627 = vmatprep.subr.mxu0 0.0
  %1628 = vmatpush1.msra.mxu0 0.0
  %1629 = vmatprep.subr.mxu0 0.0
  %1630 = vmatpush1.msra.mxu0 0.0
  %1631 = vmatprep.subr.mxu0 0.0
  %1632 = vmatpush1.msra.mxu0 0.0
  %1633 = vmatprep.subr.mxu0 0.0
  %1634 = vmatpush1.msra.mxu0 0.0
  %1635 = vmatprep.subr.mxu0 0.0
  %1636 = vmatpush1.msra.mxu0 0.0
  %1637 = vmatprep.subr.mxu0 0.0
  %1638 = vmatpush1.msra.mxu0 0.0
  %1639 = vmatprep.subr.mxu0 0.0
  %1640 = vmatpush1.msra.mxu0 0.0
  %1641 = vmatprep.subr.mxu0 0.0
  %1642 = vmatpush1.msra.mxu0 0.0
  %1643 = vmatprep.subr.mxu0 0.0
  %1644 = vmatpush1.msra.mxu0 0.0
  %1645 = vmatprep.subr.mxu0 0.0
  %1646 = vmatpush1.msra.mxu0 0.0
  %1647 = vmatprep.subr.mxu0 0.0
  %1648 = vmatpush1.msra.mxu0 0.0
  %1649 = vmatprep.subr.mxu0 0.0
  %1650 = vmatpush1.msra.mxu0 0.0
  %1651 = vmatprep.subr.mxu0 0.0
  %1652 = vmatpush1.msra.mxu0 0.0
  %1653 = vmatprep.subr.mxu0 0.0
  %1654 = vmatpush1.msra.mxu0 0.0
  %1655 = vmatprep.subr.mxu0 0.0
  %1656 = vmatpush1.msra.mxu0 0.0
  %1657 = vmatprep.subr.mxu0 0.0
  %1658 = vmatpush1.msra.mxu0 0.0
  %1659 = vmatprep.subr.mxu0 0.0
  %1660 = vmatpush1.msra.mxu0 0.0
  %1661 = vmatprep.subr.mxu0 0.0
  %1662 = vmatpush1.msra.mxu0 0.0
  %1663 = vmatprep.subr.mxu0 0.0
  %1664 = vmatpush1.msra.mxu0 0.0
  %1665 = vmatprep.subr.mxu0 0.0
  %1666 = vmatpush1.msra.mxu0 0.0
  %1667 = vmatprep.subr.mxu0 0.0
  %1668 = vmatpush1.msra.mxu0 0.0
  %1669 = vmatprep.subr.mxu0 0.0
  %1670 = vmatpush1.msra.mxu0 0.0
  %1671 = vmatprep.mubr.f32.mxu0 0.0
  %1672 = vmatmul.mubr.f32.gmra.mrb[0].mxu0 %v1602
  %v1673 = vpop.f32.mrb[0].mxu0
  %v1674 = vadd.f32 %v1585, %v1673
  %v1675 = vpop.f32.mrb[0].mxu0
  %1676 = vmatprep.mubr.f32.mxu0 0.0
  %1677 = vmatmul.mubr.f32.gmra.mrb[0].mxu0 %v1605
  %v1678 = vpop.f32.mrb[0].mxu0
  %v1679 = vadd.f32 %v1590, %v1678
  %v1680 = vpop.f32.mrb[0].mxu0
  %1681 = vdwg.mxu0
  %v1682 = vlaneseq
  %v1683 = vshrl.u32 %v1682, 7
  %v1684 = vsub.s32 1, %v1683
  %v1685 = vrot.slane %v1012, %v1684
  %v1686 = vadd.f32 %v1674, %v1685
  %v1687 = vadd.f32 %v1679, %v1685
  %v1688 = vadd.f32 %v991, %v1686
  %v1689 = vadd.f32 %v992, %v1687
  %v1690 = vsel %vm66, %v1688, 0.0
  %1691 = vadd.xlane.f32.xlu0 %v1690
  %v1692 = vpop.xlane.xlu0 %1691
  %v1693 = vsel %vm66, %v1689, 0.0
  %1694 = vadd.xlane.f32.xlu0 %v1693
  %v1695 = vpop.xlane.xlu0 %1694
  %v1696 = vmul.f32 %v1692, %v747
  %v1697 = vmul.f32 %v1695, %v747
  %v1698 = vsub.f32 %v1688, %v1696
  %v1699 = vsub.f32 %v1689, %v1697
  %v1700 = vmul.f32 %v1698, %v1698
  %v1701 = vmul.f32 %v1699, %v1699
  %v1702 = vsel %vm66, %v1700, 0.0
  %1703 = vadd.xlane.f32.xlu0 %v1702
  %v1704 = vpop.xlane.xlu0 %1703
  %v1705 = vsel %vm66, %v1701, 0.0
  %1706 = vadd.xlane.f32.xlu0 %v1705
  %v1707 = vpop.xlane.xlu0 %1706
  %v1708 = vmul.f32 %v1704, %v747
  %v1709 = vmul.f32 %v1707, %v747
  %v1710 = vadd.f32 %v1708, 1e-05
  %v1711 = vadd.f32 %v1709, 1e-05
  %v1712 = vrsqrt.pop %v1710
  %v1713 = vrsqrt.pop %v1711
  %v1714 = vmul.f32 %v1698, %v1712
  %v1715 = vmul.f32 %v1699, %v1713
  %v1716 = vlaneseq
  %v1717 = vshrl.u32 %v1716, 7
  %v1718 = vsub.s32 2, %v1717
  %v1719 = vrot.slane %v1012, %v1718
  %v1720 = vmul.f32 %v1714, %v1719
  %v1721 = vmul.f32 %v1715, %v1719
  %v1722 = vlaneseq
  %v1723 = vshrl.u32 %v1722, 7
  %v1724 = vsub.s32 3, %v1723
  %v1725 = vrot.slane %v1012, %v1724
  %v1726 = vadd.f32 %v1720, %v1725
  %v1727 = vadd.f32 %v1721, %v1725
  %v1728 = vlaneseq
  %v1729 = vshrl.u32 %v1728, 7
  %v1730 = vsub.s32 4, %v1729
  %v1731 = vrot.slane %v1012, %v1730
  %v1733 = vsel %vm66, %v1726, 0
  %v1736 = vsel %vm66, %v1727, 0
  %1738 = vmatprep.subr.mxu0 0.0
  %1739 = vmatpush1.msra.mxu0 %v995
  %1740 = vmatprep.subr.mxu0 0.0
  %1741 = vmatpush1.msra.mxu0 %v997
  %1742 = vmatprep.subr.mxu0 0.0
  %1743 = vmatpush1.msra.mxu0 %v999
  %1744 = vmatprep.subr.mxu0 0.0
  %1745 = vmatpush1.msra.mxu0 %v1001
  %1746 = vmatprep.subr.mxu0 0.0
  %1747 = vmatpush1.msra.mxu0 0.0
  %1748 = vmatprep.subr.mxu0 0.0
  %1749 = vmatpush1.msra.mxu0 0.0
  %1750 = vmatprep.subr.mxu0 0.0
  %1751 = vmatpush1.msra.mxu0 0.0
  %1752 = vmatprep.subr.mxu0 0.0
  %1753 = vmatpush1.msra.mxu0 0.0
  %1754 = vmatprep.subr.mxu0 0.0
  %1755 = vmatpush1.msra.mxu0 0.0
  %1756 = vmatprep.subr.mxu0 0.0
  %1757 = vmatpush1.msra.mxu0 0.0
  %1758 = vmatprep.subr.mxu0 0.0
  %1759 = vmatpush1.msra.mxu0 0.0
  %1760 = vmatprep.subr.mxu0 0.0
  %1761 = vmatpush1.msra.mxu0 0.0
  %1762 = vmatprep.subr.mxu0 0.0
  %1763 = vmatpush1.msra.mxu0 0.0
  %1764 = vmatprep.subr.mxu0 0.0
  %1765 = vmatpush1.msra.mxu0 0.0
  %1766 = vmatprep.subr.mxu0 0.0
  %1767 = vmatpush1.msra.mxu0 0.0
  %1768 = vmatprep.subr.mxu0 0.0
  %1769 = vmatpush1.msra.mxu0 0.0
  %1770 = vmatprep.subr.mxu0 0.0
  %1771 = vmatpush1.msra.mxu0 0.0
  %1772 = vmatprep.subr.mxu0 0.0
  %1773 = vmatpush1.msra.mxu0 0.0
  %1774 = vmatprep.subr.mxu0 0.0
  %1775 = vmatpush1.msra.mxu0 0.0
  %1776 = vmatprep.subr.mxu0 0.0
  %1777 = vmatpush1.msra.mxu0 0.0
  %1778 = vmatprep.subr.mxu0 0.0
  %1779 = vmatpush1.msra.mxu0 0.0
  %1780 = vmatprep.subr.mxu0 0.0
  %1781 = vmatpush1.msra.mxu0 0.0
  %1782 = vmatprep.subr.mxu0 0.0
  %1783 = vmatpush1.msra.mxu0 0.0
  %1784 = vmatprep.subr.mxu0 0.0
  %1785 = vmatpush1.msra.mxu0 0.0
  %1786 = vmatprep.subr.mxu0 0.0
  %1787 = vmatpush1.msra.mxu0 0.0
  %1788 = vmatprep.subr.mxu0 0.0
  %1789 = vmatpush1.msra.mxu0 0.0
  %1790 = vmatprep.subr.mxu0 0.0
  %1791 = vmatpush1.msra.mxu0 0.0
  %1792 = vmatprep.subr.mxu0 0.0
  %1793 = vmatpush1.msra.mxu0 0.0
  %1794 = vmatprep.subr.mxu0 0.0
  %1795 = vmatpush1.msra.mxu0 0.0
  %1796 = vmatprep.subr.mxu0 0.0
  %1797 = vmatpush1.msra.mxu0 0.0
  %1798 = vmatprep.subr.mxu0 0.0
  %1799 = vmatpush1.msra.mxu0 0.0
  %1800 = vmatprep.subr.mxu0 0.0
  %1801 = vmatpush1.msra.mxu0 0.0
  %1802 = vmatprep.mubr.f32.mxu0 0.0
  %1803 = vmatmul.mubr.f32.gmra.mrb[0].mxu0 %v1733
  %v1804 = vpop.f32.mrb[0].mxu0
  %v1805 = vadd.f32 %v1731, %v1804
  %v1806 = vpop.f32.mrb[0].mxu0
  %1807 = vmatprep.mubr.f32.mxu0 0.0
  %1808 = vmatmul.mubr.f32.gmra.mrb[0].mxu0 %v1736
  %v1809 = vpop.f32.mrb[0].mxu0
  %v1810 = vadd.f32 %v1731, %v1809
  %v1811 = vpop.f32.mrb[0].mxu0
  %1812 = vdwg.mxu0
  %v1813 = vmax.f32 %v1805, 0.0
  %v1814 = vmax.f32 %v1810, 0.0
  %v1815 = vlaneseq
  %v1816 = vshrl.u32 %v1815, 7
  %v1817 = vsub.s32 5, %v1816
  %v1818 = vrot.slane %v1012, %v1817
  %v1820 = vsel %vm871, %v1813, 0
  %v1823 = vsel %vm871, %v1814, 0
  %1825 = vmatprep.subr.mxu0 0.0
  %1826 = vmatpush1.msra.mxu0 %v1003
  %1827 = vmatprep.subr.mxu0 0.0
  %1828 = vmatpush1.msra.mxu0 %v1004
  %1829 = vmatprep.subr.mxu0 0.0
  %1830 = vmatpush1.msra.mxu0 %v1005
  %1831 = vmatprep.subr.mxu0 0.0
  %1832 = vmatpush1.msra.mxu0 %v1006
  %1833 = vmatprep.subr.mxu0 0.0
  %1834 = vmatpush1.msra.mxu0 %v1007
  %1835 = vmatprep.subr.mxu0 0.0
  %1836 = vmatpush1.msra.mxu0 %v1008
  %1837 = vmatprep.subr.mxu0 0.0
  %1838 = vmatpush1.msra.mxu0 %v1009
  %1839 = vmatprep.subr.mxu0 0.0
  %1840 = vmatpush1.msra.mxu0 %v1010
  %1841 = vmatprep.subr.mxu0 0.0
  %1842 = vmatpush1.msra.mxu0 0.0
  %1843 = vmatprep.subr.mxu0 0.0
  %1844 = vmatpush1.msra.mxu0 0.0
  %1845 = vmatprep.subr.mxu0 0.0
  %1846 = vmatpush1.msra.mxu0 0.0
  %1847 = vmatprep.subr.mxu0 0.0
  %1848 = vmatpush1.msra.mxu0 0.0
  %1849 = vmatprep.subr.mxu0 0.0
  %1850 = vmatpush1.msra.mxu0 0.0
  %1851 = vmatprep.subr.mxu0 0.0
  %1852 = vmatpush1.msra.mxu0 0.0
  %1853 = vmatprep.subr.mxu0 0.0
  %1854 = vmatpush1.msra.mxu0 0.0
  %1855 = vmatprep.subr.mxu0 0.0
  %1856 = vmatpush1.msra.mxu0 0.0
  %1857 = vmatprep.subr.mxu0 0.0
  %1858 = vmatpush1.msra.mxu0 0.0
  %1859 = vmatprep.subr.mxu0 0.0
  %1860 = vmatpush1.msra.mxu0 0.0
  %1861 = vmatprep.subr.mxu0 0.0
  %1862 = vmatpush1.msra.mxu0 0.0
  %1863 = vmatprep.subr.mxu0 0.0
  %1864 = vmatpush1.msra.mxu0 0.0
  %1865 = vmatprep.subr.mxu0 0.0
  %1866 = vmatpush1.msra.mxu0 0.0
  %1867 = vmatprep.subr.mxu0 0.0
  %1868 = vmatpush1.msra.mxu0 0.0
  %1869 = vmatprep.subr.mxu0 0.0
  %1870 = vmatpush1.msra.mxu0 0.0
  %1871 = vmatprep.subr.mxu0 0.0
  %1872 = vmatpush1.msra.mxu0 0.0
  %1873 = vmatprep.subr.mxu0 0.0
  %1874 = vmatpush1.msra.mxu0 0.0
  %1875 = vmatprep.subr.mxu0 0.0
  %1876 = vmatpush1.msra.mxu0 0.0
  %1877 = vmatprep.subr.mxu0 0.0
  %1878 = vmatpush1.msra.mxu0 0.0
  %1879 = vmatprep.subr.mxu0 0.0
  %1880 = vmatpush1.msra.mxu0 0.0
  %1881 = vmatprep.subr.mxu0 0.0
  %1882 = vmatpush1.msra.mxu0 0.0
  %1883 = vmatprep.subr.mxu0 0.0
  %1884 = vmatpush1.msra.mxu0 0.0
  %1885 = vmatprep.subr.mxu0 0.0
  %1886 = vmatpush1.msra.mxu0 0.0
  %1887 = vmatprep.subr.mxu0 0.0
  %1888 = vmatpush1.msra.mxu0 0.0
  %1889 = vmatprep.mubr.f32.mxu0 0.0
  %1890 = vmatmul.mubr.f32.gmra.mrb[0].mxu0 %v1820
  %v1891 = vpop.f32.mrb[0].mxu0
  %v1892 = vadd.f32 %v1818, %v1891
  %v1893 = vpop.f32.mrb[0].mxu0
  %1894 = vmatprep.mubr.f32.mxu0 0.0
  %1895 = vmatmul.mubr.f32.gmra.mrb[0].mxu0 %v1823
  %v1896 = vpop.f32.mrb[0].mxu0
  %v1897 = vadd.f32 %v1818, %v1896
  %v1898 = vpop.f32.mrb[0].mxu0
  %1899 = vdwg.mxu0
  %v1900 = vadd.f32 %v1726, %v1892
  %v1901 = vadd.f32 %v1727, %v1897
  %v1902 = vsel %vm66, %v1900, 0.0
  %1903 = vadd.xlane.f32.xlu0 %v1902
  %v1904 = vpop.xlane.xlu0 %1903
  %v1905 = vsel %vm66, %v1901, 0.0
  %1906 = vadd.xlane.f32.xlu0 %v1905
  %v1907 = vpop.xlane.xlu0 %1906
  %v1908 = vmul.f32 %v1904, %v747
  %v1909 = vmul.f32 %v1907, %v747
  %v1910 = vsub.f32 %v1900, %v1908
  %v1911 = vsub.f32 %v1901, %v1909
  %v1912 = vmul.f32 %v1910, %v1910
  %v1913 = vmul.f32 %v1911, %v1911
  %v1914 = vsel %vm66, %v1912, 0.0
  %1915 = vadd.xlane.f32.xlu0 %v1914
  %v1916 = vpop.xlane.xlu0 %1915
  %v1917 = vsel %vm66, %v1913, 0.0
  %1918 = vadd.xlane.f32.xlu0 %v1917
  %v1919 = vpop.xlane.xlu0 %1918
  %v1920 = vmul.f32 %v1916, %v747
  %v1921 = vmul.f32 %v1919, %v747
  %v1922 = vadd.f32 %v1920, 1e-05
  %v1923 = vadd.f32 %v1921, 1e-05
  %v1924 = vrsqrt.pop %v1922
  %v1925 = vrsqrt.pop %v1923
  %v1926 = vmul.f32 %v1910, %v1924
  %v1927 = vmul.f32 %v1911, %v1925
  %v1928 = vlaneseq
  %v1929 = vshrl.u32 %v1928, 7
  %v1930 = vsub.s32 6, %v1929
  %v1931 = vrot.slane %v1012, %v1930
  %v1932 = vmul.f32 %v1926, %v1931
  %v1933 = vmul.f32 %v1927, %v1931
  %v1934 = vlaneseq
  %v1935 = vshrl.u32 %v1934, 7
  %v1936 = vsub.s32 7, %v1935
  %v1937 = vrot.slane %v1012, %v1936
  %v1938 = vadd.f32 %v1932, %v1937
  %v1939 = vadd.f32 %v1933, %v1937
  %v1941 = vsel %vm154, %v41, 0
  %v1944 = vsel %vm154, %v42, 0
  %1946 = vmatprep.subr.mxu0 0.0
  %1947 = vmatpush1.msra.mxu0 %v1938
  %1948 = vmatprep.subr.mxu0 0.0
  %1949 = vmatpush1.msra.mxu0 %v1939
  %1950 = vmatprep.subr.mxu0 0.0
  %1951 = vmatpush1.msra.mxu0 0.0
  %1952 = vmatprep.subr.mxu0 0.0
  %1953 = vmatpush1.msra.mxu0 0.0
  %1954 = vmatprep.subr.mxu0 0.0
  %1955 = vmatpush1.msra.mxu0 0.0
  %1956 = vmatprep.subr.mxu0 0.0
  %1957 = vmatpush1.msra.mxu0 0.0
  %1958 = vmatprep.subr.mxu0 0.0
  %1959 = vmatpush1.msra.mxu0 0.0
  %1960 = vmatprep.subr.mxu0 0.0
  %1961 = vmatpush1.msra.mxu0 0.0
  %1962 = vmatprep.subr.mxu0 0.0
  %1963 = vmatpush1.msra.mxu0 0.0
  %1964 = vmatprep.subr.mxu0 0.0
  %1965 = vmatpush1.msra.mxu0 0.0
  %1966 = vmatprep.subr.mxu0 0.0
  %1967 = vmatpush1.msra.mxu0 0.0
  %1968 = vmatprep.subr.mxu0 0.0
  %1969 = vmatpush1.msra.mxu0 0.0
  %1970 = vmatprep.subr.mxu0 0.0
  %1971 = vmatpush1.msra.mxu0 0.0
  %1972 = vmatprep.subr.mxu0 0.0
  %1973 = vmatpush1.msra.mxu0 0.0
  %1974 = vmatprep.subr.mxu0 0.0
  %1975 = vmatpush1.msra.mxu0 0.0
  %1976 = vmatprep.subr.mxu0 0.0
  %1977 = vmatpush1.msra.mxu0 0.0
  %1978 = vmatprep.subr.mxu0 0.0
  %1979 = vmatpush1.msra.mxu0 0.0
  %1980 = vmatprep.subr.mxu0 0.0
  %1981 = vmatpush1.msra.mxu0 0.0
  %1982 = vmatprep.subr.mxu0 0.0
  %1983 = vmatpush1.msra.mxu0 0.0
  %1984 = vmatprep.subr.mxu0 0.0
  %1985 = vmatpush1.msra.mxu0 0.0
  %1986 = vmatprep.subr.mxu0 0.0
  %1987 = vmatpush1.msra.mxu0 0.0
  %1988 = vmatprep.subr.mxu0 0.0
  %1989 = vmatpush1.msra.mxu0 0.0
  %1990 = vmatprep.subr.mxu0 0.0
  %1991 = vmatpush1.msra.mxu0 0.0
  %1992 = vmatprep.subr.mxu0 0.0
  %1993 = vmatpush1.msra.mxu0 0.0
  %1994 = vmatprep.subr.mxu0 0.0
  %1995 = vmatpush1.msra.mxu0 0.0
  %1996 = vmatprep.subr.mxu0 0.0
  %1997 = vmatpush1.msra.mxu0 0.0
  %1998 = vmatprep.subr.mxu0 0.0
  %1999 = vmatpush1.msra.mxu0 0.0
  %2000 = vmatprep.subr.mxu0 0.0
  %2001 = vmatpush1.msra.mxu0 0.0
  %2002 = vmatprep.subr.mxu0 0.0
  %2003 = vmatpush1.msra.mxu0 0.0
  %2004 = vmatprep.subr.mxu0 0.0
  %2005 = vmatpush1.msra.mxu0 0.0
  %2006 = vmatprep.subr.mxu0 0.0
  %2007 = vmatpush1.msra.mxu0 0.0
  %2008 = vmatprep.subr.mxu0 0.0
  %2009 = vmatpush1.msra.mxu0 0.0
  %2010 = vmatprep.mubr.f32.mxu0 0.0
  %2011 = vmatmul.mubr.f32.gmra.mrb[0].mxu0 %v1941
  %v2012 = vpop.f32.mrb[0].mxu0
  %v2013 = vadd.f32 0.0, %v2012
  %v2014 = vpop.f32.mrb[0].mxu0
  %2015 = vmatprep.mubr.f32.mxu0 0.0
  %2016 = vmatmul.mubr.f32.gmra.mrb[0].mxu0 %v1944
  %v2017 = vpop.f32.mrb[0].mxu0
  %v2018 = vadd.f32 0.0, %v2017
  %v2019 = vpop.f32.mrb[0].mxu0
  %2020 = vdwg.mxu0
  %v2021 = vlaneseq
  %v2022 = vand.u32 %v2021, 127
  %v2023 = vld [vmem:[%s1] sm:$0xff]
  %v2024 = vld [vmem:[%s1 + $0x8] sm:$0xff]
  %vm2025 = vcmp.lt.s32.totalorder %v2022, 16
  %v2026 = vsel %vm2025, %v2013, 0.0
  %v2027 = vsel %vm2025, %v2018, 0.0
  %v2028 = vadd.f32 %v2023, %v2026
  %v2029 = vadd.f32 %v2024, %v2027
  %v2030 = vld [vmem:[%s6] sm:$0xff]
  %v2031 = vld [vmem:[%s6 + $0x8] sm:$0xff]
  %v2032 = vld [vmem:[%s6 + $0x10] sm:$0xff]
  %v2033 = vld [vmem:[%s6 + $0x18] sm:$0xff]
  %v2034 = vld [vmem:[%s6 + $0x20] sm:$0xff]
  %v2035 = vld [vmem:[%s6 + $0x28] sm:$0xff]
  %v2036 = vld [vmem:[%s6 + $0x30] sm:$0xff]
  %v2037 = vld [vmem:[%s6 + $0x38] sm:$0xff]
  %v2038 = vld [vmem:[%s7] sm:$0xff]
  %v2039 = vld [vmem:[%s7 + $0x8] sm:$0xff]
  %v2040 = vld [vmem:[%s7 + $0x10] sm:$0xff]
  %v2041 = vld [vmem:[%s7 + $0x18] sm:$0xff]
  %v2042 = vld [vmem:[%s7 + $0x20] sm:$0xff]
  %v2043 = vld [vmem:[%s7 + $0x28] sm:$0xff]
  %v2044 = vld [vmem:[%s7 + $0x30] sm:$0xff]
  %v2045 = vld [vmem:[%s7 + $0x38] sm:$0xff]
  %v2046 = vld [vmem:[%s8] sm:$0xff]
  %v2047 = vlaneseq
  %v2048 = vshrl.u32 %v2047, 7
  %v2049 = vsub.s32 0, %v2048
  %v2050 = vrot.slane %v2046, %v2049
  %v2052 = vsel %vm66, %v2028, 0
  %v2055 = vsel %vm66, %v2029, 0
  %2057 = vmatprep.subr.mxu0 0.0
  %2058 = vmatpush1.msra.mxu0 %v2030
  %2059 = vmatprep.subr.mxu0 0.0
  %2060 = vmatpush1.msra.mxu0 %v2032
  %2061 = vmatprep.subr.mxu0 0.0
  %2062 = vmatpush1.msra.mxu0 %v2034
  %2063 = vmatprep.subr.mxu0 0.0
  %2064 = vmatpush1.msra.mxu0 %v2036
  %2065 = vmatprep.subr.mxu0 0.0
  %2066 = vmatpush1.msra.mxu0 0.0
  %2067 = vmatprep.subr.mxu0 0.0
  %2068 = vmatpush1.msra.mxu0 0.0
  %2069 = vmatprep.subr.mxu0 0.0
  %2070 = vmatpush1.msra.mxu0 0.0
  %2071 = vmatprep.subr.mxu0 0.0
  %2072 = vmatpush1.msra.mxu0 0.0
  %2073 = vmatprep.subr.mxu0 0.0
  %2074 = vmatpush1.msra.mxu0 0.0
  %2075 = vmatprep.subr.mxu0 0.0
  %2076 = vmatpush1.msra.mxu0 0.0
  %2077 = vmatprep.subr.mxu0 0.0
  %2078 = vmatpush1.msra.mxu0 0.0
  %2079 = vmatprep.subr.mxu0 0.0
  %2080 = vmatpush1.msra.mxu0 0.0
  %2081 = vmatprep.subr.mxu0 0.0
  %2082 = vmatpush1.msra.mxu0 0.0
  %2083 = vmatprep.subr.mxu0 0.0
  %2084 = vmatpush1.msra.mxu0 0.0
  %2085 = vmatprep.subr.mxu0 0.0
  %2086 = vmatpush1.msra.mxu0 0.0
  %2087 = vmatprep.subr.mxu0 0.0
  %2088 = vmatpush1.msra.mxu0 0.0
  %2089 = vmatprep.subr.mxu0 0.0
  %2090 = vmatpush1.msra.mxu0 0.0
  %2091 = vmatprep.subr.mxu0 0.0
  %2092 = vmatpush1.msra.mxu0 0.0
  %2093 = vmatprep.subr.mxu0 0.0
  %2094 = vmatpush1.msra.mxu0 0.0
  %2095 = vmatprep.subr.mxu0 0.0
  %2096 = vmatpush1.msra.mxu0 0.0
  %2097 = vmatprep.subr.mxu0 0.0
  %2098 = vmatpush1.msra.mxu0 0.0
  %2099 = vmatprep.subr.mxu0 0.0
  %2100 = vmatpush1.msra.mxu0 0.0
  %2101 = vmatprep.subr.mxu0 0.0
  %2102 = vmatpush1.msra.mxu0 0.0
  %2103 = vmatprep.subr.mxu0 0.0
  %2104 = vmatpush1.msra.mxu0 0.0
  %2105 = vmatprep.subr.mxu0 0.0
  %2106 = vmatpush1.msra.mxu0 0.0
  %2107 = vmatprep.subr.mxu0 0.0
  %2108 = vmatpush1.msra.mxu0 0.0
  %2109 = vmatprep.subr.mxu0 0.0
  %2110 = vmatpush1.msra.mxu0 0.0
  %2111 = vmatprep.subr.mxu0 0.0
  %2112 = vmatpush1.msra.mxu0 0.0
  %2113 = vmatprep.subr.mxu0 0.0
  %2114 = vmatpush1.msra.mxu0 0.0
  %2115 = vmatprep.subr.mxu0 0.0
  %2116 = vmatpush1.msra.mxu0 0.0
  %2117 = vmatprep.subr.mxu0 0.0
  %2118 = vmatpush1.msra.mxu0 0.0
  %2119 = vmatprep.subr.mxu0 0.0
  %2120 = vmatpush1.msra.mxu0 0.0
  %2121 = vmatprep.mubr.f32.mxu0 0.0
  %2122 = vmatmul.mubr.f32.gmra.mrb[0].mxu0 %v2052
  %v2123 = vpop.f32.mrb[0].mxu0
  %v2124 = vadd.f32 %v2050, %v2123
  %v2125 = vpop.f32.mrb[0].mxu0
  %2126 = vmatprep.mubr.f32.mxu0 0.0
  %2127 = vmatmul.mubr.f32.gmra.mrb[0].mxu0 %v2055
  %v2128 = vpop.f32.mrb[0].mxu0
  %v2129 = vadd.f32 %v2050, %v2128
  %v2130 = vpop.f32.mrb[0].mxu0
  %2131 = vdwg.mxu0
  %2134 = vrot.lane.b32.xlu0 %v2124, 96
  %v2135 = vpop.permute.xlu0 %2134
  %2136 = vrot.lane.b32.xlu0 %v2129, 96
  %v2137 = vpop.permute.xlu0 %2136
  %v2138 = vsel %vm154, %v2124, 0
  %v2140 = vsel %vm154, %v2129, 0
  %v2142 = vsel %vm154, %v2135, 0
  %v2144 = vsel %vm154, %v2137, 0
  %2146 = vmatprep.subr.mxu0 0.0
  %2147 = vmatpush1.xpose.msra.mxu0 %v2142
  %2148 = vmatprep.subr.mxu0 0.0
  %2149 = vmatpush1.xpose.msra.mxu0 %v2144
  %2150 = vmatprep.subr.mxu0 0.0
  %2151 = vmatpush1.xpose.msra.mxu0 0.0
  %2152 = vmatprep.subr.mxu0 0.0
  %2153 = vmatpush1.xpose.msra.mxu0 0.0
  %2154 = vmatprep.subr.mxu0 0.0
  %2155 = vmatpush1.xpose.msra.mxu0 0.0
  %2156 = vmatprep.subr.mxu0 0.0
  %2157 = vmatpush1.xpose.msra.mxu0 0.0
  %2158 = vmatprep.subr.mxu0 0.0
  %2159 = vmatpush1.xpose.msra.mxu0 0.0
  %2160 = vmatprep.subr.mxu0 0.0
  %2161 = vmatpush1.xpose.msra.mxu0 0.0
  %2162 = vmatprep.subr.mxu0 0.0
  %2163 = vmatpush1.xpose.msra.mxu0 0.0
  %2164 = vmatprep.subr.mxu0 0.0
  %2165 = vmatpush1.xpose.msra.mxu0 0.0
  %2166 = vmatprep.subr.mxu0 0.0
  %2167 = vmatpush1.xpose.msra.mxu0 0.0
  %2168 = vmatprep.subr.mxu0 0.0
  %2169 = vmatpush1.xpose.msra.mxu0 0.0
  %2170 = vmatprep.subr.mxu0 0.0
  %2171 = vmatpush1.xpose.msra.mxu0 0.0
  %2172 = vmatprep.subr.mxu0 0.0
  %2173 = vmatpush1.xpose.msra.mxu0 0.0
  %2174 = vmatprep.subr.mxu0 0.0
  %2175 = vmatpush1.xpose.msra.mxu0 0.0
  %2176 = vmatprep.subr.mxu0 0.0
  %2177 = vmatpush1.xpose.msra.mxu0 0.0
  %2178 = vmatprep.subr.mxu0 0.0
  %2179 = vmatpush1.xpose.msra.mxu0 0.0
  %2180 = vmatprep.subr.mxu0 0.0
  %2181 = vmatpush1.xpose.msra.mxu0 0.0
  %2182 = vmatprep.subr.mxu0 0.0
  %2183 = vmatpush1.xpose.msra.mxu0 0.0
  %2184 = vmatprep.subr.mxu0 0.0
  %2185 = vmatpush1.xpose.msra.mxu0 0.0
  %2186 = vmatprep.subr.mxu0 0.0
  %2187 = vmatpush1.xpose.msra.mxu0 0.0
  %2188 = vmatprep.subr.mxu0 0.0
  %2189 = vmatpush1.xpose.msra.mxu0 0.0
  %2190 = vmatprep.subr.mxu0 0.0
  %2191 = vmatpush1.xpose.msra.mxu0 0.0
  %2192 = vmatprep.subr.mxu0 0.0
  %2193 = vmatpush1.xpose.msra.mxu0 0.0
  %2194 = vmatprep.subr.mxu0 0.0
  %2195 = vmatpush1.xpose.msra.mxu0 0.0
  %2196 = vmatprep.subr.mxu0 0.0
  %2197 = vmatpush1.xpose.msra.mxu0 0.0
  %2198 = vmatprep.subr.mxu0 0.0
  %2199 = vmatpush1.xpose.msra.mxu0 0.0
  %2200 = vmatprep.subr.mxu0 0.0
  %2201 = vmatpush1.xpose.msra.mxu0 0.0
  %2202 = vmatprep.subr.mxu0 0.0
  %2203 = vmatpush1.xpose.msra.mxu0 0.0
  %2204 = vmatprep.subr.mxu0 0.0
  %2205 = vmatpush1.xpose.msra.mxu0 0.0
  %2206 = vmatprep.subr.mxu0 0.0
  %2207 = vmatpush1.xpose.msra.mxu0 0.0
  %2208 = vmatprep.subr.mxu0 0.0
  %2209 = vmatpush1.xpose.msra.mxu0 0.0
  %2210 = vmatprep.mubr.f32.mxu0 0.0
  %2211 = vmatmul.mubr.f32.gmra.mrb[0].mxu0 %v2138
  %v2212 = vpop.f32.mrb[0].mxu0
  %v2213 = vadd.f32 0.0, %v2212
  %v2214 = vpop.f32.mrb[0].mxu0
  %2215 = vmatprep.mubr.f32.mxu0 0.0
  %2216 = vmatmul.mubr.f32.gmra.mrb[0].mxu0 %v2140
  %v2217 = vpop.f32.mrb[0].mxu0
  %v2218 = vadd.f32 0.0, %v2217
  %v2219 = vpop.f32.mrb[0].mxu0
  %2220 = vdwg.mxu0
  %v2221 = vmul.f32 %v2213, 0.25
  %v2222 = vmul.f32 %v2218, 0.25
  %v2223 = vadd.f32 %v2221, %v38
  %v2224 = vadd.f32 %v2222, %v39
  %v2225 = vsel %vm154, %v2223, -inf
  %2226 = vmax.xlane.f32.xlu0 %v2225
  %v2227 = vpop.xlane.xlu0 %2226
  %v2228 = vsel %vm154, %v2224, -inf
  %2229 = vmax.xlane.f32.xlu0 %v2228
  %v2230 = vpop.xlane.xlu0 %2229
  %v2231 = vsub.f32 %v2223, %v2227
  %v2232 = vsub.f32 %v2224, %v2230
  %v2233 = vmul.f32 %v2231, 1.442695
  %v2234 = vpow.pop %v2233
  %v2235 = vmul.f32 %v2232, 1.442695
  %v2236 = vpow.pop %v2235
  %v2237 = vsel %vm154, %v2234, 0.0
  %2238 = vadd.xlane.f32.xlu0 %v2237
  %v2239 = vpop.xlane.xlu0 %2238
  %v2240 = vsel %vm154, %v2236, 0.0
  %2241 = vadd.xlane.f32.xlu0 %v2240
  %v2242 = vpop.xlane.xlu0 %2241
  %v2243 = vrcp.pop %v2239
  %v2244 = vrcp.pop %v2242
  %v2245 = vmul.f32 %v2234, %v2243
  %v2246 = vmul.f32 %v2236, %v2244
  %2247 = vrot.lane.b32.xlu0 %v2124, 64
  %v2248 = vpop.permute.xlu0 %2247
  %2249 = vrot.lane.b32.xlu0 %v2129, 64
  %v2250 = vpop.permute.xlu0 %2249
  %v2254 = vsel %vm154, %v2245, 0
  %v2257 = vsel %vm154, %v2246, 0
  %2259 = vmatprep.subr.mxu0 0.0
  %2260 = vmatpush1.msra.mxu0 %v2248
  %2261 = vmatprep.subr.mxu0 0.0
  %2262 = vmatpush1.msra.mxu0 %v2250
  %2263 = vmatprep.subr.mxu0 0.0
  %2264 = vmatpush1.msra.mxu0 0.0
  %2265 = vmatprep.subr.mxu0 0.0
  %2266 = vmatpush1.msra.mxu0 0.0
  %2267 = vmatprep.subr.mxu0 0.0
  %2268 = vmatpush1.msra.mxu0 0.0
  %2269 = vmatprep.subr.mxu0 0.0
  %2270 = vmatpush1.msra.mxu0 0.0
  %2271 = vmatprep.subr.mxu0 0.0
  %2272 = vmatpush1.msra.mxu0 0.0
  %2273 = vmatprep.subr.mxu0 0.0
  %2274 = vmatpush1.msra.mxu0 0.0
  %2275 = vmatprep.subr.mxu0 0.0
  %2276 = vmatpush1.msra.mxu0 0.0
  %2277 = vmatprep.subr.mxu0 0.0
  %2278 = vmatpush1.msra.mxu0 0.0
  %2279 = vmatprep.subr.mxu0 0.0
  %2280 = vmatpush1.msra.mxu0 0.0
  %2281 = vmatprep.subr.mxu0 0.0
  %2282 = vmatpush1.msra.mxu0 0.0
  %2283 = vmatprep.subr.mxu0 0.0
  %2284 = vmatpush1.msra.mxu0 0.0
  %2285 = vmatprep.subr.mxu0 0.0
  %2286 = vmatpush1.msra.mxu0 0.0
  %2287 = vmatprep.subr.mxu0 0.0
  %2288 = vmatpush1.msra.mxu0 0.0
  %2289 = vmatprep.subr.mxu0 0.0
  %2290 = vmatpush1.msra.mxu0 0.0
  %2291 = vmatprep.subr.mxu0 0.0
  %2292 = vmatpush1.msra.mxu0 0.0
  %2293 = vmatprep.subr.mxu0 0.0
  %2294 = vmatpush1.msra.mxu0 0.0
  %2295 = vmatprep.subr.mxu0 0.0
  %2296 = vmatpush1.msra.mxu0 0.0
  %2297 = vmatprep.subr.mxu0 0.0
  %2298 = vmatpush1.msra.mxu0 0.0
  %2299 = vmatprep.subr.mxu0 0.0
  %2300 = vmatpush1.msra.mxu0 0.0
  %2301 = vmatprep.subr.mxu0 0.0
  %2302 = vmatpush1.msra.mxu0 0.0
  %2303 = vmatprep.subr.mxu0 0.0
  %2304 = vmatpush1.msra.mxu0 0.0
  %2305 = vmatprep.subr.mxu0 0.0
  %2306 = vmatpush1.msra.mxu0 0.0
  %2307 = vmatprep.subr.mxu0 0.0
  %2308 = vmatpush1.msra.mxu0 0.0
  %2309 = vmatprep.subr.mxu0 0.0
  %2310 = vmatpush1.msra.mxu0 0.0
  %2311 = vmatprep.subr.mxu0 0.0
  %2312 = vmatpush1.msra.mxu0 0.0
  %2313 = vmatprep.subr.mxu0 0.0
  %2314 = vmatpush1.msra.mxu0 0.0
  %2315 = vmatprep.subr.mxu0 0.0
  %2316 = vmatpush1.msra.mxu0 0.0
  %2317 = vmatprep.subr.mxu0 0.0
  %2318 = vmatpush1.msra.mxu0 0.0
  %2319 = vmatprep.subr.mxu0 0.0
  %2320 = vmatpush1.msra.mxu0 0.0
  %2321 = vmatprep.subr.mxu0 0.0
  %2322 = vmatpush1.msra.mxu0 0.0
  %2323 = vmatprep.mubr.f32.mxu0 0.0
  %2324 = vmatmul.mubr.f32.gmra.mrb[0].mxu0 %v2254
  %v2325 = vpop.f32.mrb[0].mxu0
  %v2326 = vadd.f32 0.0, %v2325
  %v2327 = vpop.f32.mrb[0].mxu0
  %2328 = vmatprep.mubr.f32.mxu0 0.0
  %2329 = vmatmul.mubr.f32.gmra.mrb[0].mxu0 %v2257
  %v2330 = vpop.f32.mrb[0].mxu0
  %v2331 = vadd.f32 0.0, %v2330
  %v2332 = vpop.f32.mrb[0].mxu0
  %2333 = vdwg.mxu0
  %2334 = vrot.lane.b32.xlu0 %v2124, 112
  %v2335 = vpop.permute.xlu0 %2334
  %2336 = vrot.lane.b32.xlu0 %v2129, 112
  %v2337 = vpop.permute.xlu0 %2336
  %2338 = vrot.lane.b32.xlu0 %v2124, 80
  %v2339 = vpop.permute.xlu0 %2338
  %2340 = vrot.lane.b32.xlu0 %v2129, 80
  %v2341 = vpop.permute.xlu0 %2340
  %v2342 = vsel %vm154, %v2335, 0
  %v2344 = vsel %vm154, %v2337, 0
  %v2346 = vsel %vm154, %v2339, 0
  %v2348 = vsel %vm154, %v2341, 0
  %2350 = vmatprep.subr.mxu0 0.0
  %2351 = vmatpush1.xpose.msra.mxu0 %v2346
  %2352 = vmatprep.subr.mxu0 0.0
  %2353 = vmatpush1.xpose.msra.mxu0 %v2348
  %2354 = vmatprep.subr.mxu0 0.0
  %2355 = vmatpush1.xpose.msra.mxu0 0.0
  %2356 = vmatprep.subr.mxu0 0.0
  %2357 = vmatpush1.xpose.msra.mxu0 0.0
  %2358 = vmatprep.subr.mxu0 0.0
  %2359 = vmatpush1.xpose.msra.mxu0 0.0
  %2360 = vmatprep.subr.mxu0 0.0
  %2361 = vmatpush1.xpose.msra.mxu0 0.0
  %2362 = vmatprep.subr.mxu0 0.0
  %2363 = vmatpush1.xpose.msra.mxu0 0.0
  %2364 = vmatprep.subr.mxu0 0.0
  %2365 = vmatpush1.xpose.msra.mxu0 0.0
  %2366 = vmatprep.subr.mxu0 0.0
  %2367 = vmatpush1.xpose.msra.mxu0 0.0
  %2368 = vmatprep.subr.mxu0 0.0
  %2369 = vmatpush1.xpose.msra.mxu0 0.0
  %2370 = vmatprep.subr.mxu0 0.0
  %2371 = vmatpush1.xpose.msra.mxu0 0.0
  %2372 = vmatprep.subr.mxu0 0.0
  %2373 = vmatpush1.xpose.msra.mxu0 0.0
  %2374 = vmatprep.subr.mxu0 0.0
  %2375 = vmatpush1.xpose.msra.mxu0 0.0
  %2376 = vmatprep.subr.mxu0 0.0
  %2377 = vmatpush1.xpose.msra.mxu0 0.0
  %2378 = vmatprep.subr.mxu0 0.0
  %2379 = vmatpush1.xpose.msra.mxu0 0.0
  %2380 = vmatprep.subr.mxu0 0.0
  %2381 = vmatpush1.xpose.msra.mxu0 0.0
  %2382 = vmatprep.subr.mxu0 0.0
  %2383 = vmatpush1.xpose.msra.mxu0 0.0
  %2384 = vmatprep.subr.mxu0 0.0
  %2385 = vmatpush1.xpose.msra.mxu0 0.0
  %2386 = vmatprep.subr.mxu0 0.0
  %2387 = vmatpush1.xpose.msra.mxu0 0.0
  %2388 = vmatprep.subr.mxu0 0.0
  %2389 = vmatpush1.xpose.msra.mxu0 0.0
  %2390 = vmatprep.subr.mxu0 0.0
  %2391 = vmatpush1.xpose.msra.mxu0 0.0
  %2392 = vmatprep.subr.mxu0 0.0
  %2393 = vmatpush1.xpose.msra.mxu0 0.0
  %2394 = vmatprep.subr.mxu0 0.0
  %2395 = vmatpush1.xpose.msra.mxu0 0.0
  %2396 = vmatprep.subr.mxu0 0.0
  %2397 = vmatpush1.xpose.msra.mxu0 0.0
  %2398 = vmatprep.subr.mxu0 0.0
  %2399 = vmatpush1.xpose.msra.mxu0 0.0
  %2400 = vmatprep.subr.mxu0 0.0
  %2401 = vmatpush1.xpose.msra.mxu0 0.0
  %2402 = vmatprep.subr.mxu0 0.0
  %2403 = vmatpush1.xpose.msra.mxu0 0.0
  %2404 = vmatprep.subr.mxu0 0.0
  %2405 = vmatpush1.xpose.msra.mxu0 0.0
  %2406 = vmatprep.subr.mxu0 0.0
  %2407 = vmatpush1.xpose.msra.mxu0 0.0
  %2408 = vmatprep.subr.mxu0 0.0
  %2409 = vmatpush1.xpose.msra.mxu0 0.0
  %2410 = vmatprep.subr.mxu0 0.0
  %2411 = vmatpush1.xpose.msra.mxu0 0.0
  %2412 = vmatprep.subr.mxu0 0.0
  %2413 = vmatpush1.xpose.msra.mxu0 0.0
  %2414 = vmatprep.mubr.f32.mxu0 0.0
  %2415 = vmatmul.mubr.f32.gmra.mrb[0].mxu0 %v2342
  %v2416 = vpop.f32.mrb[0].mxu0
  %v2417 = vadd.f32 0.0, %v2416
  %v2418 = vpop.f32.mrb[0].mxu0
  %2419 = vmatprep.mubr.f32.mxu0 0.0
  %2420 = vmatmul.mubr.f32.gmra.mrb[0].mxu0 %v2344
  %v2421 = vpop.f32.mrb[0].mxu0
  %v2422 = vadd.f32 0.0, %v2421
  %v2423 = vpop.f32.mrb[0].mxu0
  %2424 = vdwg.mxu0
  %v2425 = vmul.f32 %v2417, 0.25
  %v2426 = vmul.f32 %v2422, 0.25
  %v2427 = vadd.f32 %v2425, %v38
  %v2428 = vadd.f32 %v2426, %v39
  %v2429 = vsel %vm154, %v2427, -inf
  %2430 = vmax.xlane.f32.xlu0 %v2429
  %v2431 = vpop.xlane.xlu0 %2430
  %v2432 = vsel %vm154, %v2428, -inf
  %2433 = vmax.xlane.f32.xlu0 %v2432
  %v2434 = vpop.xlane.xlu0 %2433
  %v2435 = vsub.f32 %v2427, %v2431
  %v2436 = vsub.f32 %v2428, %v2434
  %v2437 = vmul.f32 %v2435, 1.442695
  %v2438 = vpow.pop %v2437
  %v2439 = vmul.f32 %v2436, 1.442695
  %v2440 = vpow.pop %v2439
  %v2441 = vsel %vm154, %v2438, 0.0
  %2442 = vadd.xlane.f32.xlu0 %v2441
  %v2443 = vpop.xlane.xlu0 %2442
  %v2444 = vsel %vm154, %v2440, 0.0
  %2445 = vadd.xlane.f32.xlu0 %v2444
  %v2446 = vpop.xlane.xlu0 %2445
  %v2447 = vrcp.pop %v2443
  %v2448 = vrcp.pop %v2446
  %v2449 = vmul.f32 %v2438, %v2447
  %v2450 = vmul.f32 %v2440, %v2448
  %2451 = vrot.lane.b32.xlu0 %v2124, 48
  %v2452 = vpop.permute.xlu0 %2451
  %2453 = vrot.lane.b32.xlu0 %v2129, 48
  %v2454 = vpop.permute.xlu0 %2453
  %v2458 = vsel %vm154, %v2449, 0
  %v2461 = vsel %vm154, %v2450, 0
  %2463 = vmatprep.subr.mxu0 0.0
  %2464 = vmatpush1.msra.mxu0 %v2452
  %2465 = vmatprep.subr.mxu0 0.0
  %2466 = vmatpush1.msra.mxu0 %v2454
  %2467 = vmatprep.subr.mxu0 0.0
  %2468 = vmatpush1.msra.mxu0 0.0
  %2469 = vmatprep.subr.mxu0 0.0
  %2470 = vmatpush1.msra.mxu0 0.0
  %2471 = vmatprep.subr.mxu0 0.0
  %2472 = vmatpush1.msra.mxu0 0.0
  %2473 = vmatprep.subr.mxu0 0.0
  %2474 = vmatpush1.msra.mxu0 0.0
  %2475 = vmatprep.subr.mxu0 0.0
  %2476 = vmatpush1.msra.mxu0 0.0
  %2477 = vmatprep.subr.mxu0 0.0
  %2478 = vmatpush1.msra.mxu0 0.0
  %2479 = vmatprep.subr.mxu0 0.0
  %2480 = vmatpush1.msra.mxu0 0.0
  %2481 = vmatprep.subr.mxu0 0.0
  %2482 = vmatpush1.msra.mxu0 0.0
  %2483 = vmatprep.subr.mxu0 0.0
  %2484 = vmatpush1.msra.mxu0 0.0
  %2485 = vmatprep.subr.mxu0 0.0
  %2486 = vmatpush1.msra.mxu0 0.0
  %2487 = vmatprep.subr.mxu0 0.0
  %2488 = vmatpush1.msra.mxu0 0.0
  %2489 = vmatprep.subr.mxu0 0.0
  %2490 = vmatpush1.msra.mxu0 0.0
  %2491 = vmatprep.subr.mxu0 0.0
  %2492 = vmatpush1.msra.mxu0 0.0
  %2493 = vmatprep.subr.mxu0 0.0
  %2494 = vmatpush1.msra.mxu0 0.0
  %2495 = vmatprep.subr.mxu0 0.0
  %2496 = vmatpush1.msra.mxu0 0.0
  %2497 = vmatprep.subr.mxu0 0.0
  %2498 = vmatpush1.msra.mxu0 0.0
  %2499 = vmatprep.subr.mxu0 0.0
  %2500 = vmatpush1.msra.mxu0 0.0
  %2501 = vmatprep.subr.mxu0 0.0
  %2502 = vmatpush1.msra.mxu0 0.0
  %2503 = vmatprep.subr.mxu0 0.0
  %2504 = vmatpush1.msra.mxu0 0.0
  %2505 = vmatprep.subr.mxu0 0.0
  %2506 = vmatpush1.msra.mxu0 0.0
  %2507 = vmatprep.subr.mxu0 0.0
  %2508 = vmatpush1.msra.mxu0 0.0
  %2509 = vmatprep.subr.mxu0 0.0
  %2510 = vmatpush1.msra.mxu0 0.0
  %2511 = vmatprep.subr.mxu0 0.0
  %2512 = vmatpush1.msra.mxu0 0.0
  %2513 = vmatprep.subr.mxu0 0.0
  %2514 = vmatpush1.msra.mxu0 0.0
  %2515 = vmatprep.subr.mxu0 0.0
  %2516 = vmatpush1.msra.mxu0 0.0
  %2517 = vmatprep.subr.mxu0 0.0
  %2518 = vmatpush1.msra.mxu0 0.0
  %2519 = vmatprep.subr.mxu0 0.0
  %2520 = vmatpush1.msra.mxu0 0.0
  %2521 = vmatprep.subr.mxu0 0.0
  %2522 = vmatpush1.msra.mxu0 0.0
  %2523 = vmatprep.subr.mxu0 0.0
  %2524 = vmatpush1.msra.mxu0 0.0
  %2525 = vmatprep.subr.mxu0 0.0
  %2526 = vmatpush1.msra.mxu0 0.0
  %2527 = vmatprep.mubr.f32.mxu0 0.0
  %2528 = vmatmul.mubr.f32.gmra.mrb[0].mxu0 %v2458
  %v2529 = vpop.f32.mrb[0].mxu0
  %v2530 = vadd.f32 0.0, %v2529
  %v2531 = vpop.f32.mrb[0].mxu0
  %2532 = vmatprep.mubr.f32.mxu0 0.0
  %2533 = vmatmul.mubr.f32.gmra.mrb[0].mxu0 %v2461
  %v2534 = vpop.f32.mrb[0].mxu0
  %v2535 = vadd.f32 0.0, %v2534
  %v2536 = vpop.f32.mrb[0].mxu0
  %2537 = vdwg.mxu0
  %2540 = vrot.lane.b32.xlu0 %v2034, 32
  %v2541 = vpop.permute.xlu0 %2540
  %2542 = vrot.lane.b32.xlu0 %v2036, 32
  %v2543 = vpop.permute.xlu0 %2542
  %v2547 = vsel %vm154, %v2530, 0
  %v2550 = vsel %vm154, %v2535, 0
  %2552 = vmatprep.subr.mxu0 0.0
  %2553 = vmatpush1.msra.mxu0 %v2541
  %2554 = vmatprep.subr.mxu0 0.0
  %2555 = vmatpush1.msra.mxu0 %v2543
  %2556 = vmatprep.subr.mxu0 0.0
  %2557 = vmatpush1.msra.mxu0 0.0
  %2558 = vmatprep.subr.mxu0 0.0
  %2559 = vmatpush1.msra.mxu0 0.0
  %2560 = vmatprep.subr.mxu0 0.0
  %2561 = vmatpush1.msra.mxu0 0.0
  %2562 = vmatprep.subr.mxu0 0.0
  %2563 = vmatpush1.msra.mxu0 0.0
  %2564 = vmatprep.subr.mxu0 0.0
  %2565 = vmatpush1.msra.mxu0 0.0
  %2566 = vmatprep.subr.mxu0 0.0
  %2567 = vmatpush1.msra.mxu0 0.0
  %2568 = vmatprep.subr.mxu0 0.0
  %2569 = vmatpush1.msra.mxu0 0.0
  %2570 = vmatprep.subr.mxu0 0.0
  %2571 = vmatpush1.msra.mxu0 0.0
  %2572 = vmatprep.subr.mxu0 0.0
  %2573 = vmatpush1.msra.mxu0 0.0
  %2574 = vmatprep.subr.mxu0 0.0
  %2575 = vmatpush1.msra.mxu0 0.0
  %2576 = vmatprep.subr.mxu0 0.0
  %2577 = vmatpush1.msra.mxu0 0.0
  %2578 = vmatprep.subr.mxu0 0.0
  %2579 = vmatpush1.msra.mxu0 0.0
  %2580 = vmatprep.subr.mxu0 0.0
  %2581 = vmatpush1.msra.mxu0 0.0
  %2582 = vmatprep.subr.mxu0 0.0
  %2583 = vmatpush1.msra.mxu0 0.0
  %2584 = vmatprep.subr.mxu0 0.0
  %2585 = vmatpush1.msra.mxu0 0.0
  %2586 = vmatprep.subr.mxu0 0.0
  %2587 = vmatpush1.msra.mxu0 0.0
  %2588 = vmatprep.subr.mxu0 0.0
  %2589 = vmatpush1.msra.mxu0 0.0
  %2590 = vmatprep.subr.mxu0 0.0
  %2591 = vmatpush1.msra.mxu0 0.0
  %2592 = vmatprep.subr.mxu0 0.0
  %2593 = vmatpush1.msra.mxu0 0.0
  %2594 = vmatprep.subr.mxu0 0.0
  %2595 = vmatpush1.msra.mxu0 0.0
  %2596 = vmatprep.subr.mxu0 0.0
  %2597 = vmatpush1.msra.mxu0 0.0
  %2598 = vmatprep.subr.mxu0 0.0
  %2599 = vmatpush1.msra.mxu0 0.0
  %2600 = vmatprep.subr.mxu0 0.0
  %2601 = vmatpush1.msra.mxu0 0.0
  %2602 = vmatprep.subr.mxu0 0.0
  %2603 = vmatpush1.msra.mxu0 0.0
  %2604 = vmatprep.subr.mxu0 0.0
  %2605 = vmatpush1.msra.mxu0 0.0
  %2606 = vmatprep.subr.mxu0 0.0
  %2607 = vmatpush1.msra.mxu0 0.0
  %2608 = vmatprep.subr.mxu0 0.0
  %2609 = vmatpush1.msra.mxu0 0.0
  %2610 = vmatprep.subr.mxu0 0.0
  %2611 = vmatpush1.msra.mxu0 0.0
  %2612 = vmatprep.subr.mxu0 0.0
  %2613 = vmatpush1.msra.mxu0 0.0
  %2614 = vmatprep.subr.mxu0 0.0
  %2615 = vmatpush1.msra.mxu0 0.0
  %2616 = vmatprep.mubr.f32.mxu0 0.0
  %2617 = vmatmul.mubr.f32.gmra.mrb[0].mxu0 %v2547
  %v2618 = vpop.f32.mrb[0].mxu0
  %v2619 = vadd.f32 0.0, %v2618
  %v2620 = vpop.f32.mrb[0].mxu0
  %2621 = vmatprep.mubr.f32.mxu0 0.0
  %2622 = vmatmul.mubr.f32.gmra.mrb[0].mxu0 %v2550
  %v2623 = vpop.f32.mrb[0].mxu0
  %v2624 = vadd.f32 0.0, %v2623
  %v2625 = vpop.f32.mrb[0].mxu0
  %2626 = vdwg.mxu0
  %2629 = vrot.lane.b32.xlu0 %v2030, 32
  %v2630 = vpop.permute.xlu0 %2629
  %2631 = vrot.lane.b32.xlu0 %v2032, 32
  %v2632 = vpop.permute.xlu0 %2631
  %v2636 = vsel %vm154, %v2326, 0
  %v2639 = vsel %vm154, %v2331, 0
  %2641 = vmatprep.subr.mxu0 0.0
  %2642 = vmatpush1.msra.mxu0 %v2630
  %2643 = vmatprep.subr.mxu0 0.0
  %2644 = vmatpush1.msra.mxu0 %v2632
  %2645 = vmatprep.subr.mxu0 0.0
  %2646 = vmatpush1.msra.mxu0 0.0
  %2647 = vmatprep.subr.mxu0 0.0
  %2648 = vmatpush1.msra.mxu0 0.0
  %2649 = vmatprep.subr.mxu0 0.0
  %2650 = vmatpush1.msra.mxu0 0.0
  %2651 = vmatprep.subr.mxu0 0.0
  %2652 = vmatpush1.msra.mxu0 0.0
  %2653 = vmatprep.subr.mxu0 0.0
  %2654 = vmatpush1.msra.mxu0 0.0
  %2655 = vmatprep.subr.mxu0 0.0
  %2656 = vmatpush1.msra.mxu0 0.0
  %2657 = vmatprep.subr.mxu0 0.0
  %2658 = vmatpush1.msra.mxu0 0.0
  %2659 = vmatprep.subr.mxu0 0.0
  %2660 = vmatpush1.msra.mxu0 0.0
  %2661 = vmatprep.subr.mxu0 0.0
  %2662 = vmatpush1.msra.mxu0 0.0
  %2663 = vmatprep.subr.mxu0 0.0
  %2664 = vmatpush1.msra.mxu0 0.0
  %2665 = vmatprep.subr.mxu0 0.0
  %2666 = vmatpush1.msra.mxu0 0.0
  %2667 = vmatprep.subr.mxu0 0.0
  %2668 = vmatpush1.msra.mxu0 0.0
  %2669 = vmatprep.subr.mxu0 0.0
  %2670 = vmatpush1.msra.mxu0 0.0
  %2671 = vmatprep.subr.mxu0 0.0
  %2672 = vmatpush1.msra.mxu0 0.0
  %2673 = vmatprep.subr.mxu0 0.0
  %2674 = vmatpush1.msra.mxu0 0.0
  %2675 = vmatprep.subr.mxu0 0.0
  %2676 = vmatpush1.msra.mxu0 0.0
  %2677 = vmatprep.subr.mxu0 0.0
  %2678 = vmatpush1.msra.mxu0 0.0
  %2679 = vmatprep.subr.mxu0 0.0
  %2680 = vmatpush1.msra.mxu0 0.0
  %2681 = vmatprep.subr.mxu0 0.0
  %2682 = vmatpush1.msra.mxu0 0.0
  %2683 = vmatprep.subr.mxu0 0.0
  %2684 = vmatpush1.msra.mxu0 0.0
  %2685 = vmatprep.subr.mxu0 0.0
  %2686 = vmatpush1.msra.mxu0 0.0
  %2687 = vmatprep.subr.mxu0 0.0
  %2688 = vmatpush1.msra.mxu0 0.0
  %2689 = vmatprep.subr.mxu0 0.0
  %2690 = vmatpush1.msra.mxu0 0.0
  %2691 = vmatprep.subr.mxu0 0.0
  %2692 = vmatpush1.msra.mxu0 0.0
  %2693 = vmatprep.subr.mxu0 0.0
  %2694 = vmatpush1.msra.mxu0 0.0
  %2695 = vmatprep.subr.mxu0 0.0
  %2696 = vmatpush1.msra.mxu0 0.0
  %2697 = vmatprep.subr.mxu0 0.0
  %2698 = vmatpush1.msra.mxu0 0.0
  %2699 = vmatprep.subr.mxu0 0.0
  %2700 = vmatpush1.msra.mxu0 0.0
  %2701 = vmatprep.subr.mxu0 0.0
  %2702 = vmatpush1.msra.mxu0 0.0
  %2703 = vmatprep.subr.mxu0 0.0
  %2704 = vmatpush1.msra.mxu0 0.0
  %2705 = vmatprep.mubr.f32.mxu0 0.0
  %2706 = vmatmul.mubr.f32.gmra.mrb[0].mxu0 %v2636
  %v2707 = vpop.f32.mrb[0].mxu0
  %v2708 = vadd.f32 %v2619, %v2707
  %v2709 = vpop.f32.mrb[0].mxu0
  %2710 = vmatprep.mubr.f32.mxu0 0.0
  %2711 = vmatmul.mubr.f32.gmra.mrb[0].mxu0 %v2639
  %v2712 = vpop.f32.mrb[0].mxu0
  %v2713 = vadd.f32 %v2624, %v2712
  %v2714 = vpop.f32.mrb[0].mxu0
  %2715 = vdwg.mxu0
  %v2716 = vlaneseq
  %v2717 = vshrl.u32 %v2716, 7
  %v2718 = vsub.s32 1, %v2717
  %v2719 = vrot.slane %v2046, %v2718
  %v2720 = vadd.f32 %v2708, %v2719
  %v2721 = vadd.f32 %v2713, %v2719
  %v2722 = vadd.f32 %v2028, %v2720
  %v2723 = vadd.f32 %v2029, %v2721
  %v2724 = vsel %vm66, %v2722, 0.0
  %2725 = vadd.xlane.f32.xlu0 %v2724
  %v2726 = vpop.xlane.xlu0 %2725
  %v2727 = vsel %vm66, %v2723, 0.0
  %2728 = vadd.xlane.f32.xlu0 %v2727
  %v2729 = vpop.xlane.xlu0 %2728
  %v2730 = vmul.f32 %v2726, %v747
  %v2731 = vmul.f32 %v2729, %v747
  %v2732 = vsub.f32 %v2722, %v2730
  %v2733 = vsub.f32 %v2723, %v2731
  %v2734 = vmul.f32 %v2732, %v2732
  %v2735 = vmul.f32 %v2733, %v2733
  %v2736 = vsel %vm66, %v2734, 0.0
  %2737 = vadd.xlane.f32.xlu0 %v2736
  %v2738 = vpop.xlane.xlu0 %2737
  %v2739 = vsel %vm66, %v2735, 0.0
  %2740 = vadd.xlane.f32.xlu0 %v2739
  %v2741 = vpop.xlane.xlu0 %2740
  %v2742 = vmul.f32 %v2738, %v747
  %v2743 = vmul.f32 %v2741, %v747
  %v2744 = vadd.f32 %v2742, 1e-05
  %v2745 = vadd.f32 %v2743, 1e-05
  %v2746 = vrsqrt.pop %v2744
  %v2747 = vrsqrt.pop %v2745
  %v2748 = vmul.f32 %v2732, %v2746
  %v2749 = vmul.f32 %v2733, %v2747
  %v2750 = vlaneseq
  %v2751 = vshrl.u32 %v2750, 7
  %v2752 = vsub.s32 2, %v2751
  %v2753 = vrot.slane %v2046, %v2752
  %v2754 = vmul.f32 %v2748, %v2753
  %v2755 = vmul.f32 %v2749, %v2753
  %v2756 = vlaneseq
  %v2757 = vshrl.u32 %v2756, 7
  %v2758 = vsub.s32 3, %v2757
  %v2759 = vrot.slane %v2046, %v2758
  %v2760 = vadd.f32 %v2754, %v2759
  %v2761 = vadd.f32 %v2755, %v2759
  %v2762 = vlaneseq
  %v2763 = vshrl.u32 %v2762, 7
  %v2764 = vsub.s32 4, %v2763
  %v2765 = vrot.slane %v2046, %v2764
  %v2767 = vsel %vm66, %v2760, 0
  %v2770 = vsel %vm66, %v2761, 0
  %2772 = vmatprep.subr.mxu0 0.0
  %2773 = vmatpush1.msra.mxu0 %v2031
  %2774 = vmatprep.subr.mxu0 0.0
  %2775 = vmatpush1.msra.mxu0 %v2033
  %2776 = vmatprep.subr.mxu0 0.0
  %2777 = vmatpush1.msra.mxu0 %v2035
  %2778 = vmatprep.subr.mxu0 0.0
  %2779 = vmatpush1.msra.mxu0 %v2037
  %2780 = vmatprep.subr.mxu0 0.0
  %2781 = vmatpush1.msra.mxu0 0.0
  %2782 = vmatprep.subr.mxu0 0.0
  %2783 = vmatpush1.msra.mxu0 0.0
  %2784 = vmatprep.subr.mxu0 0.0
  %2785 = vmatpush1.msra.mxu0 0.0
  %2786 = vmatprep.subr.mxu0 0.0
  %2787 = vmatpush1.msra.mxu0 0.0
  %2788 = vmatprep.subr.mxu0 0.0
  %2789 = vmatpush1.msra.mxu0 0.0
  %2790 = vmatprep.subr.mxu0 0.0
  %2791 = vmatpush1.msra.mxu0 0.0
  %2792 = vmatprep.subr.mxu0 0.0
  %2793 = vmatpush1.msra.mxu0 0.0
  %2794 = vmatprep.subr.mxu0 0.0
  %2795 = vmatpush1.msra.mxu0 0.0
  %2796 = vmatprep.subr.mxu0 0.0
  %2797 = vmatpush1.msra.mxu0 0.0
  %2798 = vmatprep.subr.mxu0 0.0
  %2799 = vmatpush1.msra.mxu0 0.0
  %2800 = vmatprep.subr.mxu0 0.0
  %2801 = vmatpush1.msra.mxu0 0.0
  %2802 = vmatprep.subr.mxu0 0.0
  %2803 = vmatpush1.msra.mxu0 0.0
  %2804 = vmatprep.subr.mxu0 0.0
  %2805 = vmatpush1.msra.mxu0 0.0
  %2806 = vmatprep.subr.mxu0 0.0
  %2807 = vmatpush1.msra.mxu0 0.0
  %2808 = vmatprep.subr.mxu0 0.0
  %2809 = vmatpush1.msra.mxu0 0.0
  %2810 = vmatprep.subr.mxu0 0.0
  %2811 = vmatpush1.msra.mxu0 0.0
  %2812 = vmatprep.subr.mxu0 0.0
  %2813 = vmatpush1.msra.mxu0 0.0
  %2814 = vmatprep.subr.mxu0 0.0
  %2815 = vmatpush1.msra.mxu0 0.0
  %2816 = vmatprep.subr.mxu0 0.0
  %2817 = vmatpush1.msra.mxu0 0.0
  %2818 = vmatprep.subr.mxu0 0.0
  %2819 = vmatpush1.msra.mxu0 0.0
  %2820 = vmatprep.subr.mxu0 0.0
  %2821 = vmatpush1.msra.mxu0 0.0
  %2822 = vmatprep.subr.mxu0 0.0
  %2823 = vmatpush1.msra.mxu0 0.0
  %2824 = vmatprep.subr.mxu0 0.0
  %2825 = vmatpush1.msra.mxu0 0.0
  %2826 = vmatprep.subr.mxu0 0.0
  %2827 = vmatpush1.msra.mxu0 0.0
  %2828 = vmatprep.subr.mxu0 0.0
  %2829 = vmatpush1.msra.mxu0 0.0
  %2830 = vmatprep.subr.mxu0 0.0
  %2831 = vmatpush1.msra.mxu0 0.0
  %2832 = vmatprep.subr.mxu0 0.0
  %2833 = vmatpush1.msra.mxu0 0.0
  %2834 = vmatprep.subr.mxu0 0.0
  %2835 = vmatpush1.msra.mxu0 0.0
  %2836 = vmatprep.mubr.f32.mxu0 0.0
  %2837 = vmatmul.mubr.f32.gmra.mrb[0].mxu0 %v2767
  %v2838 = vpop.f32.mrb[0].mxu0
  %v2839 = vadd.f32 %v2765, %v2838
  %v2840 = vpop.f32.mrb[0].mxu0
  %2841 = vmatprep.mubr.f32.mxu0 0.0
  %2842 = vmatmul.mubr.f32.gmra.mrb[0].mxu0 %v2770
  %v2843 = vpop.f32.mrb[0].mxu0
  %v2844 = vadd.f32 %v2765, %v2843
  %v2845 = vpop.f32.mrb[0].mxu0
  %2846 = vdwg.mxu0
  %v2847 = vmax.f32 %v2839, 0.0
  %v2848 = vmax.f32 %v2844, 0.0
  %v2849 = vlaneseq
  %v2850 = vshrl.u32 %v2849, 7
  %v2851 = vsub.s32 5, %v2850
  %v2852 = vrot.slane %v2046, %v2851
  %v2854 = vsel %vm871, %v2847, 0
  %v2857 = vsel %vm871, %v2848, 0
  %2859 = vmatprep.subr.mxu0 0.0
  %2860 = vmatpush1.msra.mxu0 %v2038
  %2861 = vmatprep.subr.mxu0 0.0
  %2862 = vmatpush1.msra.mxu0 %v2039
  %2863 = vmatprep.subr.mxu0 0.0
  %2864 = vmatpush1.msra.mxu0 %v2040
  %2865 = vmatprep.subr.mxu0 0.0
  %2866 = vmatpush1.msra.mxu0 %v2041
  %2867 = vmatprep.subr.mxu0 0.0
  %2868 = vmatpush1.msra.mxu0 %v2042
  %2869 = vmatprep.subr.mxu0 0.0
  %2870 = vmatpush1.msra.mxu0 %v2043
  %2871 = vmatprep.subr.mxu0 0.0
  %2872 = vmatpush1.msra.mxu0 %v2044
  %2873 = vmatprep.subr.mxu0 0.0
  %2874 = vmatpush1.msra.mxu0 %v2045
  %2875 = vmatprep.subr.mxu0 0.0
  %2876 = vmatpush1.msra.mxu0 0.0
  %2877 = vmatprep.subr.mxu0 0.0
  %2878 = vmatpush1.msra.mxu0 0.0
  %2879 = vmatprep.subr.mxu0 0.0
  %2880 = vmatpush1.msra.mxu0 0.0
  %2881 = vmatprep.subr.mxu0 0.0
  %2882 = vmatpush1.msra.mxu0 0.0
  %2883 = vmatprep.subr.mxu0 0.0
  %2884 = vmatpush1.msra.mxu0 0.0
  %2885 = vmatprep.subr.mxu0 0.0
  %2886 = vmatpush1.msra.mxu0 0.0
  %2887 = vmatprep.subr.mxu0 0.0
  %2888 = vmatpush1.msra.mxu0 0.0
  %2889 = vmatprep.subr.mxu0 0.0
  %2890 = vmatpush1.msra.mxu0 0.0
  %2891 = vmatprep.subr.mxu0 0.0
  %2892 = vmatpush1.msra.mxu0 0.0
  %2893 = vmatprep.subr.mxu0 0.0
  %2894 = vmatpush1.msra.mxu0 0.0
  %2895 = vmatprep.subr.mxu0 0.0
  %2896 = vmatpush1.msra.mxu0 0.0
  %2897 = vmatprep.subr.mxu0 0.0
  %2898 = vmatpush1.msra.mxu0 0.0
  %2899 = vmatprep.subr.mxu0 0.0
  %2900 = vmatpush1.msra.mxu0 0.0
  %2901 = vmatprep.subr.mxu0 0.0
  %2902 = vmatpush1.msra.mxu0 0.0
  %2903 = vmatprep.subr.mxu0 0.0
  %2904 = vmatpush1.msra.mxu0 0.0
  %2905 = vmatprep.subr.mxu0 0.0
  %2906 = vmatpush1.msra.mxu0 0.0
  %2907 = vmatprep.subr.mxu0 0.0
  %2908 = vmatpush1.msra.mxu0 0.0
  %2909 = vmatprep.subr.mxu0 0.0
  %2910 = vmatpush1.msra.mxu0 0.0
  %2911 = vmatprep.subr.mxu0 0.0
  %2912 = vmatpush1.msra.mxu0 0.0
  %2913 = vmatprep.subr.mxu0 0.0
  %2914 = vmatpush1.msra.mxu0 0.0
  %2915 = vmatprep.subr.mxu0 0.0
  %2916 = vmatpush1.msra.mxu0 0.0
  %2917 = vmatprep.subr.mxu0 0.0
  %2918 = vmatpush1.msra.mxu0 0.0
  %2919 = vmatprep.subr.mxu0 0.0
  %2920 = vmatpush1.msra.mxu0 0.0
  %2921 = vmatprep.subr.mxu0 0.0
  %2922 = vmatpush1.msra.mxu0 0.0
  %2923 = vmatprep.mubr.f32.mxu0 0.0
  %2924 = vmatmul.mubr.f32.gmra.mrb[0].mxu0 %v2854
  %v2925 = vpop.f32.mrb[0].mxu0
  %v2926 = vadd.f32 %v2852, %v2925
  %v2927 = vpop.f32.mrb[0].mxu0
  %2928 = vmatprep.mubr.f32.mxu0 0.0
  %2929 = vmatmul.mubr.f32.gmra.mrb[0].mxu0 %v2857
  %v2930 = vpop.f32.mrb[0].mxu0
  %v2931 = vadd.f32 %v2852, %v2930
  %v2932 = vpop.f32.mrb[0].mxu0
  %2933 = vdwg.mxu0
  %v2934 = vadd.f32 %v2760, %v2926
  %v2935 = vadd.f32 %v2761, %v2931
  %v2936 = vsel %vm66, %v2934, 0.0
  %2937 = vadd.xlane.f32.xlu0 %v2936
  %v2938 = vpop.xlane.xlu0 %2937
  %v2939 = vsel %vm66, %v2935, 0.0
  %2940 = vadd.xlane.f32.xlu0 %v2939
  %v2941 = vpop.xlane.xlu0 %2940
  %v2942 = vmul.f32 %v2938, %v747
  %v2943 = vmul.f32 %v2941, %v747
  %v2944 = vsub.f32 %v2934, %v2942
  %v2945 = vsub.f32 %v2935, %v2943
  %v2946 = vmul.f32 %v2944, %v2944
  %v2947 = vmul.f32 %v2945, %v2945
  %v2948 = vsel %vm66, %v2946, 0.0
  %2949 = vadd.xlane.f32.xlu0 %v2948
  %v2950 = vpop.xlane.xlu0 %2949
  %v2951 = vsel %vm66, %v2947, 0.0
  %2952 = vadd.xlane.f32.xlu0 %v2951
  %v2953 = vpop.xlane.xlu0 %2952
  %v2954 = vmul.f32 %v2950, %v747
  %v2955 = vmul.f32 %v2953, %v747
  %v2956 = vadd.f32 %v2954, 1e-05
  %v2957 = vadd.f32 %v2955, 1e-05
  %v2958 = vrsqrt.pop %v2956
  %v2959 = vrsqrt.pop %v2957
  %v2960 = vmul.f32 %v2944, %v2958
  %v2961 = vmul.f32 %v2945, %v2959
  %v2962 = vlaneseq
  %v2963 = vshrl.u32 %v2962, 7
  %v2964 = vsub.s32 6, %v2963
  %v2965 = vrot.slane %v2046, %v2964
  %v2966 = vmul.f32 %v2960, %v2965
  %v2967 = vmul.f32 %v2961, %v2965
  %v2968 = vlaneseq
  %v2969 = vshrl.u32 %v2968, 7
  %v2970 = vsub.s32 7, %v2969
  %v2971 = vrot.slane %v2046, %v2970
  %v2972 = vadd.f32 %v2966, %v2971
  %v2973 = vadd.f32 %v2967, %v2971
  %s2974 = scalar_lea.vmem %s6, 64
  %v2975 = vld [vmem:[%s2974] sm:$0xff]
  %v2976 = vld [vmem:[%s2974 + $0x8] sm:$0xff]
  %v2977 = vld [vmem:[%s2974 + $0x10] sm:$0xff]
  %v2978 = vld [vmem:[%s2974 + $0x18] sm:$0xff]
  %v2979 = vld [vmem:[%s2974 + $0x20] sm:$0xff]
  %v2980 = vld [vmem:[%s2974 + $0x28] sm:$0xff]
  %v2981 = vld [vmem:[%s2974 + $0x30] sm:$0xff]
  %v2982 = vld [vmem:[%s2974 + $0x38] sm:$0xff]
  %s2983 = scalar_lea.vmem %s7, 64
  %v2984 = vld [vmem:[%s2983] sm:$0xff]
  %v2985 = vld [vmem:[%s2983 + $0x8] sm:$0xff]
  %v2986 = vld [vmem:[%s2983 + $0x10] sm:$0xff]
  %v2987 = vld [vmem:[%s2983 + $0x18] sm:$0xff]
  %v2988 = vld [vmem:[%s2983 + $0x20] sm:$0xff]
  %v2989 = vld [vmem:[%s2983 + $0x28] sm:$0xff]
  %v2990 = vld [vmem:[%s2983 + $0x30] sm:$0xff]
  %v2991 = vld [vmem:[%s2983 + $0x38] sm:$0xff]
  %s2992 = scalar_lea.vmem %s8, 8
  %v2993 = vld [vmem:[%s2992] sm:$0xff]
  %v2994 = vlaneseq
  %v2995 = vshrl.u32 %v2994, 7
  %v2996 = vsub.s32 0, %v2995
  %v2997 = vrot.slane %v2993, %v2996
  %v2999 = vsel %vm66, %v2972, 0
  %v3002 = vsel %vm66, %v2973, 0
  %3004 = vmatprep.subr.mxu0 0.0
  %3005 = vmatpush1.msra.mxu0 %v2975
  %3006 = vmatprep.subr.mxu0 0.0
  %3007 = vmatpush1.msra.mxu0 %v2977
  %3008 = vmatprep.subr.mxu0 0.0
  %3009 = vmatpush1.msra.mxu0 %v2979
  %3010 = vmatprep.subr.mxu0 0.0
  %3011 = vmatpush1.msra.mxu0 %v2981
  %3012 = vmatprep.subr.mxu0 0.0
  %3013 = vmatpush1.msra.mxu0 0.0
  %3014 = vmatprep.subr.mxu0 0.0
  %3015 = vmatpush1.msra.mxu0 0.0
  %3016 = vmatprep.subr.mxu0 0.0
  %3017 = vmatpush1.msra.mxu0 0.0
  %3018 = vmatprep.subr.mxu0 0.0
  %3019 = vmatpush1.msra.mxu0 0.0
  %3020 = vmatprep.subr.mxu0 0.0
  %3021 = vmatpush1.msra.mxu0 0.0
  %3022 = vmatprep.subr.mxu0 0.0
  %3023 = vmatpush1.msra.mxu0 0.0
  %3024 = vmatprep.subr.mxu0 0.0
  %3025 = vmatpush1.msra.mxu0 0.0
  %3026 = vmatprep.subr.mxu0 0.0
  %3027 = vmatpush1.msra.mxu0 0.0
  %3028 = vmatprep.subr.mxu0 0.0
  %3029 = vmatpush1.msra.mxu0 0.0
  %3030 = vmatprep.subr.mxu0 0.0
  %3031 = vmatpush1.msra.mxu0 0.0
  %3032 = vmatprep.subr.mxu0 0.0
  %3033 = vmatpush1.msra.mxu0 0.0
  %3034 = vmatprep.subr.mxu0 0.0
  %3035 = vmatpush1.msra.mxu0 0.0
  %3036 = vmatprep.subr.mxu0 0.0
  %3037 = vmatpush1.msra.mxu0 0.0
  %3038 = vmatprep.subr.mxu0 0.0
  %3039 = vmatpush1.msra.mxu0 0.0
  %3040 = vmatprep.subr.mxu0 0.0
  %3041 = vmatpush1.msra.mxu0 0.0
  %3042 = vmatprep.subr.mxu0 0.0
  %3043 = vmatpush1.msra.mxu0 0.0
  %3044 = vmatprep.subr.mxu0 0.0
  %3045 = vmatpush1.msra.mxu0 0.0
  %3046 = vmatprep.subr.mxu0 0.0
  %3047 = vmatpush1.msra.mxu0 0.0
  %3048 = vmatprep.subr.mxu0 0.0
  %3049 = vmatpush1.msra.mxu0 0.0
  %3050 = vmatprep.subr.mxu0 0.0
  %3051 = vmatpush1.msra.mxu0 0.0
  %3052 = vmatprep.subr.mxu0 0.0
  %3053 = vmatpush1.msra.mxu0 0.0
  %3054 = vmatprep.subr.mxu0 0.0
  %3055 = vmatpush1.msra.mxu0 0.0
  %3056 = vmatprep.subr.mxu0 0.0
  %3057 = vmatpush1.msra.mxu0 0.0
  %3058 = vmatprep.subr.mxu0 0.0
  %3059 = vmatpush1.msra.mxu0 0.0
  %3060 = vmatprep.subr.mxu0 0.0
  %3061 = vmatpush1.msra.mxu0 0.0
  %3062 = vmatprep.subr.mxu0 0.0
  %3063 = vmatpush1.msra.mxu0 0.0
  %3064 = vmatprep.subr.mxu0 0.0
  %3065 = vmatpush1.msra.mxu0 0.0
  %3066 = vmatprep.subr.mxu0 0.0
  %3067 = vmatpush1.msra.mxu0 0.0
  %3068 = vmatprep.mubr.f32.mxu0 0.0
  %3069 = vmatmul.mubr.f32.gmra.mrb[0].mxu0 %v2999
  %v3070 = vpop.f32.mrb[0].mxu0
  %v3071 = vadd.f32 %v2997, %v3070
  %v3072 = vpop.f32.mrb[0].mxu0
  %3073 = vmatprep.mubr.f32.mxu0 0.0
  %3074 = vmatmul.mubr.f32.gmra.mrb[0].mxu0 %v3002
  %v3075 = vpop.f32.mrb[0].mxu0
  %v3076 = vadd.f32 %v2997, %v3075
  %v3077 = vpop.f32.mrb[0].mxu0
  %3078 = vdwg.mxu0
  %3081 = vrot.lane.b32.xlu0 %v3071, 96
  %v3082 = vpop.permute.xlu0 %3081
  %3083 = vrot.lane.b32.xlu0 %v3076, 96
  %v3084 = vpop.permute.xlu0 %3083
  %v3085 = vsel %vm154, %v3071, 0
  %v3087 = vsel %vm154, %v3076, 0
  %v3089 = vsel %vm154, %v3082, 0
  %v3091 = vsel %vm154, %v3084, 0
  %3093 = vmatprep.subr.mxu0 0.0
  %3094 = vmatpush1.xpose.msra.mxu0 %v3089
  %3095 = vmatprep.subr.mxu0 0.0
  %3096 = vmatpush1.xpose.msra.mxu0 %v3091
  %3097 = vmatprep.subr.mxu0 0.0
  %3098 = vmatpush1.xpose.msra.mxu0 0.0
  %3099 = vmatprep.subr.mxu0 0.0
  %3100 = vmatpush1.xpose.msra.mxu0 0.0
  %3101 = vmatprep.subr.mxu0 0.0
  %3102 = vmatpush1.xpose.msra.mxu0 0.0
  %3103 = vmatprep.subr.mxu0 0.0
  %3104 = vmatpush1.xpose.msra.mxu0 0.0
  %3105 = vmatprep.subr.mxu0 0.0
  %3106 = vmatpush1.xpose.msra.mxu0 0.0
  %3107 = vmatprep.subr.mxu0 0.0
  %3108 = vmatpush1.xpose.msra.mxu0 0.0
  %3109 = vmatprep.subr.mxu0 0.0
  %3110 = vmatpush1.xpose.msra.mxu0 0.0
  %3111 = vmatprep.subr.mxu0 0.0
  %3112 = vmatpush1.xpose.msra.mxu0 0.0
  %3113 = vmatprep.subr.mxu0 0.0
  %3114 = vmatpush1.xpose.msra.mxu0 0.0
  %3115 = vmatprep.subr.mxu0 0.0
  %3116 = vmatpush1.xpose.msra.mxu0 0.0
  %3117 = vmatprep.subr.mxu0 0.0
  %3118 = vmatpush1.xpose.msra.mxu0 0.0
  %3119 = vmatprep.subr.mxu0 0.0
  %3120 = vmatpush1.xpose.msra.mxu0 0.0
  %3121 = vmatprep.subr.mxu0 0.0
  %3122 = vmatpush1.xpose.msra.mxu0 0.0
  %3123 = vmatprep.subr.mxu0 0.0
  %3124 = vmatpush1.xpose.msra.mxu0 0.0
  %3125 = vmatprep.subr.mxu0 0.0
  %3126 = vmatpush1.xpose.msra.mxu0 0.0
  %3127 = vmatprep.subr.mxu0 0.0
  %3128 = vmatpush1.xpose.msra.mxu0 0.0
  %3129 = vmatprep.subr.mxu0 0.0
  %3130 = vmatpush1.xpose.msra.mxu0 0.0
  %3131 = vmatprep.subr.mxu0 0.0
  %3132 = vmatpush1.xpose.msra.mxu0 0.0
  %3133 = vmatprep.subr.mxu0 0.0
  %3134 = vmatpush1.xpose.msra.mxu0 0.0
  %3135 = vmatprep.subr.mxu0 0.0
  %3136 = vmatpush1.xpose.msra.mxu0 0.0
  %3137 = vmatprep.subr.mxu0 0.0
  %3138 = vmatpush1.xpose.msra.mxu0 0.0
  %3139 = vmatprep.subr.mxu0 0.0
  %3140 = vmatpush1.xpose.msra.mxu0 0.0
  %3141 = vmatprep.subr.mxu0 0.0
  %3142 = vmatpush1.xpose.msra.mxu0 0.0
  %3143 = vmatprep.subr.mxu0 0.0
  %3144 = vmatpush1.xpose.msra.mxu0 0.0
  %3145 = vmatprep.subr.mxu0 0.0
  %3146 = vmatpush1.xpose.msra.mxu0 0.0
  %3147 = vmatprep.subr.mxu0 0.0
  %3148 = vmatpush1.xpose.msra.mxu0 0.0
  %3149 = vmatprep.subr.mxu0 0.0
  %3150 = vmatpush1.xpose.msra.mxu0 0.0
  %3151 = vmatprep.subr.mxu0 0.0
  %3152 = vmatpush1.xpose.msra.mxu0 0.0
  %3153 = vmatprep.subr.mxu0 0.0
  %3154 = vmatpush1.xpose.msra.mxu0 0.0
  %3155 = vmatprep.subr.mxu0 0.0
  %3156 = vmatpush1.xpose.msra.mxu0 0.0
  %3157 = vmatprep.mubr.f32.mxu0 0.0
  %3158 = vmatmul.mubr.f32.gmra.mrb[0].mxu0 %v3085
  %v3159 = vpop.f32.mrb[0].mxu0
  %v3160 = vadd.f32 0.0, %v3159
  %v3161 = vpop.f32.mrb[0].mxu0
  %3162 = vmatprep.mubr.f32.mxu0 0.0
  %3163 = vmatmul.mubr.f32.gmra.mrb[0].mxu0 %v3087
  %v3164 = vpop.f32.mrb[0].mxu0
  %v3165 = vadd.f32 0.0, %v3164
  %v3166 = vpop.f32.mrb[0].mxu0
  %3167 = vdwg.mxu0
  %v3168 = vmul.f32 %v3160, 0.25
  %v3169 = vmul.f32 %v3165, 0.25
  %v3170 = vadd.f32 %v3168, %v38
  %v3171 = vadd.f32 %v3169, %v39
  %v3172 = vsel %vm154, %v3170, -inf
  %3173 = vmax.xlane.f32.xlu0 %v3172
  %v3174 = vpop.xlane.xlu0 %3173
  %v3175 = vsel %vm154, %v3171, -inf
  %3176 = vmax.xlane.f32.xlu0 %v3175
  %v3177 = vpop.xlane.xlu0 %3176
  %v3178 = vsub.f32 %v3170, %v3174
  %v3179 = vsub.f32 %v3171, %v3177
  %v3180 = vmul.f32 %v3178, 1.442695
  %v3181 = vpow.pop %v3180
  %v3182 = vmul.f32 %v3179, 1.442695
  %v3183 = vpow.pop %v3182
  %v3184 = vsel %vm154, %v3181, 0.0
  %3185 = vadd.xlane.f32.xlu0 %v3184
  %v3186 = vpop.xlane.xlu0 %3185
  %v3187 = vsel %vm154, %v3183, 0.0
  %3188 = vadd.xlane.f32.xlu0 %v3187
  %v3189 = vpop.xlane.xlu0 %3188
  %v3190 = vrcp.pop %v3186
  %v3191 = vrcp.pop %v3189
  %v3192 = vmul.f32 %v3181, %v3190
  %v3193 = vmul.f32 %v3183, %v3191
  %3194 = vrot.lane.b32.xlu0 %v3071, 64
  %v3195 = vpop.permute.xlu0 %3194
  %3196 = vrot.lane.b32.xlu0 %v3076, 64
  %v3197 = vpop.permute.xlu0 %3196
  %v3201 = vsel %vm154, %v3192, 0
  %v3204 = vsel %vm154, %v3193, 0
  %3206 = vmatprep.subr.mxu0 0.0
  %3207 = vmatpush1.msra.mxu0 %v3195
  %3208 = vmatprep.subr.mxu0 0.0
  %3209 = vmatpush1.msra.mxu0 %v3197
  %3210 = vmatprep.subr.mxu0 0.0
  %3211 = vmatpush1.msra.mxu0 0.0
  %3212 = vmatprep.subr.mxu0 0.0
  %3213 = vmatpush1.msra.mxu0 0.0
  %3214 = vmatprep.subr.mxu0 0.0
  %3215 = vmatpush1.msra.mxu0 0.0
  %3216 = vmatprep.subr.mxu0 0.0
  %3217 = vmatpush1.msra.mxu0 0.0
  %3218 = vmatprep.subr.mxu0 0.0
  %3219 = vmatpush1.msra.mxu0 0.0
  %3220 = vmatprep.subr.mxu0 0.0
  %3221 = vmatpush1.msra.mxu0 0.0
  %3222 = vmatprep.subr.mxu0 0.0
  %3223 = vmatpush1.msra.mxu0 0.0
  %3224 = vmatprep.subr.mxu0 0.0
  %3225 = vmatpush1.msra.mxu0 0.0
  %3226 = vmatprep.subr.mxu0 0.0
  %3227 = vmatpush1.msra.mxu0 0.0
  %3228 = vmatprep.subr.mxu0 0.0
  %3229 = vmatpush1.msra.mxu0 0.0
  %3230 = vmatprep.subr.mxu0 0.0
  %3231 = vmatpush1.msra.mxu0 0.0
  %3232 = vmatprep.subr.mxu0 0.0
  %3233 = vmatpush1.msra.mxu0 0.0
  %3234 = vmatprep.subr.mxu0 0.0
  %3235 = vmatpush1.msra.mxu0 0.0
  %3236 = vmatprep.subr.mxu0 0.0
  %3237 = vmatpush1.msra.mxu0 0.0
  %3238 = vmatprep.subr.mxu0 0.0
  %3239 = vmatpush1.msra.mxu0 0.0
  %3240 = vmatprep.subr.mxu0 0.0
  %3241 = vmatpush1.msra.mxu0 0.0
  %3242 = vmatprep.subr.mxu0 0.0
  %3243 = vmatpush1.msra.mxu0 0.0
  %3244 = vmatprep.subr.mxu0 0.0
  %3245 = vmatpush1.msra.mxu0 0.0
  %3246 = vmatprep.subr.mxu0 0.0
  %3247 = vmatpush1.msra.mxu0 0.0
  %3248 = vmatprep.subr.mxu0 0.0
  %3249 = vmatpush1.msra.mxu0 0.0
  %3250 = vmatprep.subr.mxu0 0.0
  %3251 = vmatpush1.msra.mxu0 0.0
  %3252 = vmatprep.subr.mxu0 0.0
  %3253 = vmatpush1.msra.mxu0 0.0
  %3254 = vmatprep.subr.mxu0 0.0
  %3255 = vmatpush1.msra.mxu0 0.0
  %3256 = vmatprep.subr.mxu0 0.0
  %3257 = vmatpush1.msra.mxu0 0.0
  %3258 = vmatprep.subr.mxu0 0.0
  %3259 = vmatpush1.msra.mxu0 0.0
  %3260 = vmatprep.subr.mxu0 0.0
  %3261 = vmatpush1.msra.mxu0 0.0
  %3262 = vmatprep.subr.mxu0 0.0
  %3263 = vmatpush1.msra.mxu0 0.0
  %3264 = vmatprep.subr.mxu0 0.0
  %3265 = vmatpush1.msra.mxu0 0.0
  %3266 = vmatprep.subr.mxu0 0.0
  %3267 = vmatpush1.msra.mxu0 0.0
  %3268 = vmatprep.subr.mxu0 0.0
  %3269 = vmatpush1.msra.mxu0 0.0
  %3270 = vmatprep.mubr.f32.mxu0 0.0
  %3271 = vmatmul.mubr.f32.gmra.mrb[0].mxu0 %v3201
  %v3272 = vpop.f32.mrb[0].mxu0
  %v3273 = vadd.f32 0.0, %v3272
  %v3274 = vpop.f32.mrb[0].mxu0
  %3275 = vmatprep.mubr.f32.mxu0 0.0
  %3276 = vmatmul.mubr.f32.gmra.mrb[0].mxu0 %v3204
  %v3277 = vpop.f32.mrb[0].mxu0
  %v3278 = vadd.f32 0.0, %v3277
  %v3279 = vpop.f32.mrb[0].mxu0
  %3280 = vdwg.mxu0
  %3281 = vrot.lane.b32.xlu0 %v3071, 112
  %v3282 = vpop.permute.xlu0 %3281
  %3283 = vrot.lane.b32.xlu0 %v3076, 112
  %v3284 = vpop.permute.xlu0 %3283
  %3285 = vrot.lane.b32.xlu0 %v3071, 80
  %v3286 = vpop.permute.xlu0 %3285
  %3287 = vrot.lane.b32.xlu0 %v3076, 80
  %v3288 = vpop.permute.xlu0 %3287
  %v3289 = vsel %vm154, %v3282, 0
  %v3291 = vsel %vm154, %v3284, 0
  %v3293 = vsel %vm154, %v3286, 0
  %v3295 = vsel %vm154, %v3288, 0
  %3297 = vmatprep.subr.mxu0 0.0
  %3298 = vmatpush1.xpose.msra.mxu0 %v3293
  %3299 = vmatprep.subr.mxu0 0.0
  %3300 = vmatpush1.xpose.msra.mxu0 %v3295
  %3301 = vmatprep.subr.mxu0 0.0
  %3302 = vmatpush1.xpose.msra.mxu0 0.0
  %3303 = vmatprep.subr.mxu0 0.0
  %3304 = vmatpush1.xpose.msra.mxu0 0.0
  %3305 = vmatprep.subr.mxu0 0.0
  %3306 = vmatpush1.xpose.msra.mxu0 0.0
  %3307 = vmatprep.subr.mxu0 0.0
  %3308 = vmatpush1.xpose.msra.mxu0 0.0
  %3309 = vmatprep.subr.mxu0 0.0
  %3310 = vmatpush1.xpose.msra.mxu0 0.0
  %3311 = vmatprep.subr.mxu0 0.0
  %3312 = vmatpush1.xpose.msra.mxu0 0.0
  %3313 = vmatprep.subr.mxu0 0.0
  %3314 = vmatpush1.xpose.msra.mxu0 0.0
  %3315 = vmatprep.subr.mxu0 0.0
  %3316 = vmatpush1.xpose.msra.mxu0 0.0
  %3317 = vmatprep.subr.mxu0 0.0
  %3318 = vmatpush1.xpose.msra.mxu0 0.0
  %3319 = vmatprep.subr.mxu0 0.0
  %3320 = vmatpush1.xpose.msra.mxu0 0.0
  %3321 = vmatprep.subr.mxu0 0.0
  %3322 = vmatpush1.xpose.msra.mxu0 0.0
  %3323 = vmatprep.subr.mxu0 0.0
  %3324 = vmatpush1.xpose.msra.mxu0 0.0
  %3325 = vmatprep.subr.mxu0 0.0
  %3326 = vmatpush1.xpose.msra.mxu0 0.0
  %3327 = vmatprep.subr.mxu0 0.0
  %3328 = vmatpush1.xpose.msra.mxu0 0.0
  %3329 = vmatprep.subr.mxu0 0.0
  %3330 = vmatpush1.xpose.msra.mxu0 0.0
  %3331 = vmatprep.subr.mxu0 0.0
  %3332 = vmatpush1.xpose.msra.mxu0 0.0
  %3333 = vmatprep.subr.mxu0 0.0
  %3334 = vmatpush1.xpose.msra.mxu0 0.0
  %3335 = vmatprep.subr.mxu0 0.0
  %3336 = vmatpush1.xpose.msra.mxu0 0.0
  %3337 = vmatprep.subr.mxu0 0.0
  %3338 = vmatpush1.xpose.msra.mxu0 0.0
  %3339 = vmatprep.subr.mxu0 0.0
  %3340 = vmatpush1.xpose.msra.mxu0 0.0
  %3341 = vmatprep.subr.mxu0 0.0
  %3342 = vmatpush1.xpose.msra.mxu0 0.0
  %3343 = vmatprep.subr.mxu0 0.0
  %3344 = vmatpush1.xpose.msra.mxu0 0.0
  %3345 = vmatprep.subr.mxu0 0.0
  %3346 = vmatpush1.xpose.msra.mxu0 0.0
  %3347 = vmatprep.subr.mxu0 0.0
  %3348 = vmatpush1.xpose.msra.mxu0 0.0
  %3349 = vmatprep.subr.mxu0 0.0
  %3350 = vmatpush1.xpose.msra.mxu0 0.0
  %3351 = vmatprep.subr.mxu0 0.0
  %3352 = vmatpush1.xpose.msra.mxu0 0.0
  %3353 = vmatprep.subr.mxu0 0.0
  %3354 = vmatpush1.xpose.msra.mxu0 0.0
  %3355 = vmatprep.subr.mxu0 0.0
  %3356 = vmatpush1.xpose.msra.mxu0 0.0
  %3357 = vmatprep.subr.mxu0 0.0
  %3358 = vmatpush1.xpose.msra.mxu0 0.0
  %3359 = vmatprep.subr.mxu0 0.0
  %3360 = vmatpush1.xpose.msra.mxu0 0.0
  %3361 = vmatprep.mubr.f32.mxu0 0.0
  %3362 = vmatmul.mubr.f32.gmra.mrb[0].mxu0 %v3289
  %v3363 = vpop.f32.mrb[0].mxu0
  %v3364 = vadd.f32 0.0, %v3363
  %v3365 = vpop.f32.mrb[0].mxu0
  %3366 = vmatprep.mubr.f32.mxu0 0.0
  %3367 = vmatmul.mubr.f32.gmra.mrb[0].mxu0 %v3291
  %v3368 = vpop.f32.mrb[0].mxu0
  %v3369 = vadd.f32 0.0, %v3368
  %v3370 = vpop.f32.mrb[0].mxu0
  %3371 = vdwg.mxu0
  %v3372 = vmul.f32 %v3364, 0.25
  %v3373 = vmul.f32 %v3369, 0.25
  %v3374 = vadd.f32 %v3372, %v38
  %v3375 = vadd.f32 %v3373, %v39
  %v3376 = vsel %vm154, %v3374, -inf
  %3377 = vmax.xlane.f32.xlu0 %v3376
  %v3378 = vpop.xlane.xlu0 %3377
  %v3379 = vsel %vm154, %v3375, -inf
  %3380 = vmax.xlane.f32.xlu0 %v3379
  %v3381 = vpop.xlane.xlu0 %3380
  %v3382 = vsub.f32 %v3374, %v3378
  %v3383 = vsub.f32 %v3375, %v3381
  %v3384 = vmul.f32 %v3382, 1.442695
  %v3385 = vpow.pop %v3384
  %v3386 = vmul.f32 %v3383, 1.442695
  %v3387 = vpow.pop %v3386
  %v3388 = vsel %vm154, %v3385, 0.0
  %3389 = vadd.xlane.f32.xlu0 %v3388
  %v3390 = vpop.xlane.xlu0 %3389
  %v3391 = vsel %vm154, %v3387, 0.0
  %3392 = vadd.xlane.f32.xlu0 %v3391
  %v3393 = vpop.xlane.xlu0 %3392
  %v3394 = vrcp.pop %v3390
  %v3395 = vrcp.pop %v3393
  %v3396 = vmul.f32 %v3385, %v3394
  %v3397 = vmul.f32 %v3387, %v3395
  %3398 = vrot.lane.b32.xlu0 %v3071, 48
  %v3399 = vpop.permute.xlu0 %3398
  %3400 = vrot.lane.b32.xlu0 %v3076, 48
  %v3401 = vpop.permute.xlu0 %3400
  %v3405 = vsel %vm154, %v3396, 0
  %v3408 = vsel %vm154, %v3397, 0
  %3410 = vmatprep.subr.mxu0 0.0
  %3411 = vmatpush1.msra.mxu0 %v3399
  %3412 = vmatprep.subr.mxu0 0.0
  %3413 = vmatpush1.msra.mxu0 %v3401
  %3414 = vmatprep.subr.mxu0 0.0
  %3415 = vmatpush1.msra.mxu0 0.0
  %3416 = vmatprep.subr.mxu0 0.0
  %3417 = vmatpush1.msra.mxu0 0.0
  %3418 = vmatprep.subr.mxu0 0.0
  %3419 = vmatpush1.msra.mxu0 0.0
  %3420 = vmatprep.subr.mxu0 0.0
  %3421 = vmatpush1.msra.mxu0 0.0
  %3422 = vmatprep.subr.mxu0 0.0
  %3423 = vmatpush1.msra.mxu0 0.0
  %3424 = vmatprep.subr.mxu0 0.0
  %3425 = vmatpush1.msra.mxu0 0.0
  %3426 = vmatprep.subr.mxu0 0.0
  %3427 = vmatpush1.msra.mxu0 0.0
  %3428 = vmatprep.subr.mxu0 0.0
  %3429 = vmatpush1.msra.mxu0 0.0
  %3430 = vmatprep.subr.mxu0 0.0
  %3431 = vmatpush1.msra.mxu0 0.0
  %3432 = vmatprep.subr.mxu0 0.0
  %3433 = vmatpush1.msra.mxu0 0.0
  %3434 = vmatprep.subr.mxu0 0.0
  %3435 = vmatpush1.msra.mxu0 0.0
  %3436 = vmatprep.subr.mxu0 0.0
  %3437 = vmatpush1.msra.mxu0 0.0
  %3438 = vmatprep.subr.mxu0 0.0
  %3439 = vmatpush1.msra.mxu0 0.0
  %3440 = vmatprep.subr.mxu0 0.0
  %3441 = vmatpush1.msra.mxu0 0.0
  %3442 = vmatprep.subr.mxu0 0.0
  %3443 = vmatpush1.msra.mxu0 0.0
  %3444 = vmatprep.subr.mxu0 0.0
  %3445 = vmatpush1.msra.mxu0 0.0
  %3446 = vmatprep.subr.mxu0 0.0
  %3447 = vmatpush1.msra.mxu0 0.0
  %3448 = vmatprep.subr.mxu0 0.0
  %3449 = vmatpush1.msra.mxu0 0.0
  %3450 = vmatprep.subr.mxu0 0.0
  %3451 = vmatpush1.msra.mxu0 0.0
  %3452 = vmatprep.subr.mxu0 0.0
  %3453 = vmatpush1.msra.mxu0 0.0
  %3454 = vmatprep.subr.mxu0 0.0
  %3455 = vmatpush1.msra.mxu0 0.0
  %3456 = vmatprep.subr.mxu0 0.0
  %3457 = vmatpush1.msra.mxu0 0.0
  %3458 = vmatprep.subr.mxu0 0.0
  %3459 = vmatpush1.msra.mxu0 0.0
  %3460 = vmatprep.subr.mxu0 0.0
  %3461 = vmatpush1.msra.mxu0 0.0
  %3462 = vmatprep.subr.mxu0 0.0
  %3463 = vmatpush1.msra.mxu0 0.0
  %3464 = vmatprep.subr.mxu0 0.0
  %3465 = vmatpush1.msra.mxu0 0.0
  %3466 = vmatprep.subr.mxu0 0.0
  %3467 = vmatpush1.msra.mxu0 0.0
  %3468 = vmatprep.subr.mxu0 0.0
  %3469 = vmatpush1.msra.mxu0 0.0
  %3470 = vmatprep.subr.mxu0 0.0
  %3471 = vmatpush1.msra.mxu0 0.0
  %3472 = vmatprep.subr.mxu0 0.0
  %3473 = vmatpush1.msra.mxu0 0.0
  %3474 = vmatprep.mubr.f32.mxu0 0.0
  %3475 = vmatmul.mubr.f32.gmra.mrb[0].mxu0 %v3405
  %v3476 = vpop.f32.mrb[0].mxu0
  %v3477 = vadd.f32 0.0, %v3476
  %v3478 = vpop.f32.mrb[0].mxu0
  %3479 = vmatprep.mubr.f32.mxu0 0.0
  %3480 = vmatmul.mubr.f32.gmra.mrb[0].mxu0 %v3408
  %v3481 = vpop.f32.mrb[0].mxu0
  %v3482 = vadd.f32 0.0, %v3481
  %v3483 = vpop.f32.mrb[0].mxu0
  %3484 = vdwg.mxu0
  %3487 = vrot.lane.b32.xlu0 %v2979, 32
  %v3488 = vpop.permute.xlu0 %3487
  %3489 = vrot.lane.b32.xlu0 %v2981, 32
  %v3490 = vpop.permute.xlu0 %3489
  %v3494 = vsel %vm154, %v3477, 0
  %v3497 = vsel %vm154, %v3482, 0
  %3499 = vmatprep.subr.mxu0 0.0
  %3500 = vmatpush1.msra.mxu0 %v3488
  %3501 = vmatprep.subr.mxu0 0.0
  %3502 = vmatpush1.msra.mxu0 %v3490
  %3503 = vmatprep.subr.mxu0 0.0
  %3504 = vmatpush1.msra.mxu0 0.0
  %3505 = vmatprep.subr.mxu0 0.0
  %3506 = vmatpush1.msra.mxu0 0.0
  %3507 = vmatprep.subr.mxu0 0.0
  %3508 = vmatpush1.msra.mxu0 0.0
  %3509 = vmatprep.subr.mxu0 0.0
  %3510 = vmatpush1.msra.mxu0 0.0
  %3511 = vmatprep.subr.mxu0 0.0
  %3512 = vmatpush1.msra.mxu0 0.0
  %3513 = vmatprep.subr.mxu0 0.0
  %3514 = vmatpush1.msra.mxu0 0.0
  %3515 = vmatprep.subr.mxu0 0.0
  %3516 = vmatpush1.msra.mxu0 0.0
  %3517 = vmatprep.subr.mxu0 0.0
  %3518 = vmatpush1.msra.mxu0 0.0
  %3519 = vmatprep.subr.mxu0 0.0
  %3520 = vmatpush1.msra.mxu0 0.0
  %3521 = vmatprep.subr.mxu0 0.0
  %3522 = vmatpush1.msra.mxu0 0.0
  %3523 = vmatprep.subr.mxu0 0.0
  %3524 = vmatpush1.msra.mxu0 0.0
  %3525 = vmatprep.subr.mxu0 0.0
  %3526 = vmatpush1.msra.mxu0 0.0
  %3527 = vmatprep.subr.mxu0 0.0
  %3528 = vmatpush1.msra.mxu0 0.0
  %3529 = vmatprep.subr.mxu0 0.0
  %3530 = vmatpush1.msra.mxu0 0.0
  %3531 = vmatprep.subr.mxu0 0.0
  %3532 = vmatpush1.msra.mxu0 0.0
  %3533 = vmatprep.subr.mxu0 0.0
  %3534 = vmatpush1.msra.mxu0 0.0
  %3535 = vmatprep.subr.mxu0 0.0
  %3536 = vmatpush1.msra.mxu0 0.0
  %3537 = vmatprep.subr.mxu0 0.0
  %3538 = vmatpush1.msra.mxu0 0.0
  %3539 = vmatprep.subr.mxu0 0.0
  %3540 = vmatpush1.msra.mxu0 0.0
  %3541 = vmatprep.subr.mxu0 0.0
  %3542 = vmatpush1.msra.mxu0 0.0
  %3543 = vmatprep.subr.mxu0 0.0
  %3544 = vmatpush1.msra.mxu0 0.0
  %3545 = vmatprep.subr.mxu0 0.0
  %3546 = vmatpush1.msra.mxu0 0.0
  %3547 = vmatprep.subr.mxu0 0.0
  %3548 = vmatpush1.msra.mxu0 0.0
  %3549 = vmatprep.subr.mxu0 0.0
  %3550 = vmatpush1.msra.mxu0 0.0
  %3551 = vmatprep.subr.mxu0 0.0
  %3552 = vmatpush1.msra.mxu0 0.0
  %3553 = vmatprep.subr.mxu0 0.0
  %3554 = vmatpush1.msra.mxu0 0.0
  %3555 = vmatprep.subr.mxu0 0.0
  %3556 = vmatpush1.msra.mxu0 0.0
  %3557 = vmatprep.subr.mxu0 0.0
  %3558 = vmatpush1.msra.mxu0 0.0
  %3559 = vmatprep.subr.mxu0 0.0
  %3560 = vmatpush1.msra.mxu0 0.0
  %3561 = vmatprep.subr.mxu0 0.0
  %3562 = vmatpush1.msra.mxu0 0.0
  %3563 = vmatprep.mubr.f32.mxu0 0.0
  %3564 = vmatmul.mubr.f32.gmra.mrb[0].mxu0 %v3494
  %v3565 = vpop.f32.mrb[0].mxu0
  %v3566 = vadd.f32 0.0, %v3565
  %v3567 = vpop.f32.mrb[0].mxu0
  %3568 = vmatprep.mubr.f32.mxu0 0.0
  %3569 = vmatmul.mubr.f32.gmra.mrb[0].mxu0 %v3497
  %v3570 = vpop.f32.mrb[0].mxu0
  %v3571 = vadd.f32 0.0, %v3570
  %v3572 = vpop.f32.mrb[0].mxu0
  %3573 = vdwg.mxu0
  %3576 = vrot.lane.b32.xlu0 %v2975, 32
  %v3577 = vpop.permute.xlu0 %3576
  %3578 = vrot.lane.b32.xlu0 %v2977, 32
  %v3579 = vpop.permute.xlu0 %3578
  %v3583 = vsel %vm154, %v3273, 0
  %v3586 = vsel %vm154, %v3278, 0
  %3588 = vmatprep.subr.mxu0 0.0
  %3589 = vmatpush1.msra.mxu0 %v3577
  %3590 = vmatprep.subr.mxu0 0.0
  %3591 = vmatpush1.msra.mxu0 %v3579
  %3592 = vmatprep.subr.mxu0 0.0
  %3593 = vmatpush1.msra.mxu0 0.0
  %3594 = vmatprep.subr.mxu0 0.0
  %3595 = vmatpush1.msra.mxu0 0.0
  %3596 = vmatprep.subr.mxu0 0.0
  %3597 = vmatpush1.msra.mxu0 0.0
  %3598 = vmatprep.subr.mxu0 0.0
  %3599 = vmatpush1.msra.mxu0 0.0
  %3600 = vmatprep.subr.mxu0 0.0
  %3601 = vmatpush1.msra.mxu0 0.0
  %3602 = vmatprep.subr.mxu0 0.0
  %3603 = vmatpush1.msra.mxu0 0.0
  %3604 = vmatprep.subr.mxu0 0.0
  %3605 = vmatpush1.msra.mxu0 0.0
  %3606 = vmatprep.subr.mxu0 0.0
  %3607 = vmatpush1.msra.mxu0 0.0
  %3608 = vmatprep.subr.mxu0 0.0
  %3609 = vmatpush1.msra.mxu0 0.0
  %3610 = vmatprep.subr.mxu0 0.0
  %3611 = vmatpush1.msra.mxu0 0.0
  %3612 = vmatprep.subr.mxu0 0.0
  %3613 = vmatpush1.msra.mxu0 0.0
  %3614 = vmatprep.subr.mxu0 0.0
  %3615 = vmatpush1.msra.mxu0 0.0
  %3616 = vmatprep.subr.mxu0 0.0
  %3617 = vmatpush1.msra.mxu0 0.0
  %3618 = vmatprep.subr.mxu0 0.0
  %3619 = vmatpush1.msra.mxu0 0.0
  %3620 = vmatprep.subr.mxu0 0.0
  %3621 = vmatpush1.msra.mxu0 0.0
  %3622 = vmatprep.subr.mxu0 0.0
  %3623 = vmatpush1.msra.mxu0 0.0
  %3624 = vmatprep.subr.mxu0 0.0
  %3625 = vmatpush1.msra.mxu0 0.0
  %3626 = vmatprep.subr.mxu0 0.0
  %3627 = vmatpush1.msra.mxu0 0.0
  %3628 = vmatprep.subr.mxu0 0.0
  %3629 = vmatpush1.msra.mxu0 0.0
  %3630 = vmatprep.subr.mxu0 0.0
  %3631 = vmatpush1.msra.mxu0 0.0
  %3632 = vmatprep.subr.mxu0 0.0
  %3633 = vmatpush1.msra.mxu0 0.0
  %3634 = vmatprep.subr.mxu0 0.0
  %3635 = vmatpush1.msra.mxu0 0.0
  %3636 = vmatprep.subr.mxu0 0.0
  %3637 = vmatpush1.msra.mxu0 0.0
  %3638 = vmatprep.subr.mxu0 0.0
  %3639 = vmatpush1.msra.mxu0 0.0
  %3640 = vmatprep.subr.mxu0 0.0
  %3641 = vmatpush1.msra.mxu0 0.0
  %3642 = vmatprep.subr.mxu0 0.0
  %3643 = vmatpush1.msra.mxu0 0.0
  %3644 = vmatprep.subr.mxu0 0.0
  %3645 = vmatpush1.msra.mxu0 0.0
  %3646 = vmatprep.subr.mxu0 0.0
  %3647 = vmatpush1.msra.mxu0 0.0
  %3648 = vmatprep.subr.mxu0 0.0
  %3649 = vmatpush1.msra.mxu0 0.0
  %3650 = vmatprep.subr.mxu0 0.0
  %3651 = vmatpush1.msra.mxu0 0.0
  %3652 = vmatprep.mubr.f32.mxu0 0.0
  %3653 = vmatmul.mubr.f32.gmra.mrb[0].mxu0 %v3583
  %v3654 = vpop.f32.mrb[0].mxu0
  %v3655 = vadd.f32 %v3566, %v3654
  %v3656 = vpop.f32.mrb[0].mxu0
  %3657 = vmatprep.mubr.f32.mxu0 0.0
  %3658 = vmatmul.mubr.f32.gmra.mrb[0].mxu0 %v3586
  %v3659 = vpop.f32.mrb[0].mxu0
  %v3660 = vadd.f32 %v3571, %v3659
  %v3661 = vpop.f32.mrb[0].mxu0
  %3662 = vdwg.mxu0
  %v3663 = vlaneseq
  %v3664 = vshrl.u32 %v3663, 7
  %v3665 = vsub.s32 1, %v3664
  %v3666 = vrot.slane %v2993, %v3665
  %v3667 = vadd.f32 %v3655, %v3666
  %v3668 = vadd.f32 %v3660, %v3666
  %v3669 = vadd.f32 %v2972, %v3667
  %v3670 = vadd.f32 %v2973, %v3668
  %v3671 = vsel %vm66, %v3669, 0.0
  %3672 = vadd.xlane.f32.xlu0 %v3671
  %v3673 = vpop.xlane.xlu0 %3672
  %v3674 = vsel %vm66, %v3670, 0.0
  %3675 = vadd.xlane.f32.xlu0 %v3674
  %v3676 = vpop.xlane.xlu0 %3675
  %v3677 = vmul.f32 %v3673, %v747
  %v3678 = vmul.f32 %v3676, %v747
  %v3679 = vsub.f32 %v3669, %v3677
  %v3680 = vsub.f32 %v3670, %v3678
  %v3681 = vmul.f32 %v3679, %v3679
  %v3682 = vmul.f32 %v3680, %v3680
  %v3683 = vsel %vm66, %v3681, 0.0
  %3684 = vadd.xlane.f32.xlu0 %v3683
  %v3685 = vpop.xlane.xlu0 %3684
  %v3686 = vsel %vm66, %v3682, 0.0
  %3687 = vadd.xlane.f32.xlu0 %v3686
  %v3688 = vpop.xlane.xlu0 %3687
  %v3689 = vmul.f32 %v3685, %v747
  %v3690 = vmul.f32 %v3688, %v747
  %v3691 = vadd.f32 %v3689, 1e-05
  %v3692 = vadd.f32 %v3690, 1e-05
  %v3693 = vrsqrt.pop %v3691
  %v3694 = vrsqrt.pop %v3692
  %v3695 = vmul.f32 %v3679, %v3693
  %v3696 = vmul.f32 %v3680, %v3694
  %v3697 = vlaneseq
  %v3698 = vshrl.u32 %v3697, 7
  %v3699 = vsub.s32 2, %v3698
  %v3700 = vrot.slane %v2993, %v3699
  %v3701 = vmul.f32 %v3695, %v3700
  %v3702 = vmul.f32 %v3696, %v3700
  %v3703 = vlaneseq
  %v3704 = vshrl.u32 %v3703, 7
  %v3705 = vsub.s32 3, %v3704
  %v3706 = vrot.slane %v2993, %v3705
  %v3707 = vadd.f32 %v3701, %v3706
  %v3708 = vadd.f32 %v3702, %v3706
  %v3709 = vlaneseq
  %v3710 = vshrl.u32 %v3709, 7
  %v3711 = vsub.s32 4, %v3710
  %v3712 = vrot.slane %v2993, %v3711
  %v3714 = vsel %vm66, %v3707, 0
  %v3717 = vsel %vm66, %v3708, 0
  %3719 = vmatprep.subr.mxu0 0.0
  %3720 = vmatpush1.msra.mxu0 %v2976
  %3721 = vmatprep.subr.mxu0 0.0
  %3722 = vmatpush1.msra.mxu0 %v2978
  %3723 = vmatprep.subr.mxu0 0.0
  %3724 = vmatpush1.msra.mxu0 %v2980
  %3725 = vmatprep.subr.mxu0 0.0
  %3726 = vmatpush1.msra.mxu0 %v2982
  %3727 = vmatprep.subr.mxu0 0.0
  %3728 = vmatpush1.msra.mxu0 0.0
  %3729 = vmatprep.subr.mxu0 0.0
  %3730 = vmatpush1.msra.mxu0 0.0
  %3731 = vmatprep.subr.mxu0 0.0
  %3732 = vmatpush1.msra.mxu0 0.0
  %3733 = vmatprep.subr.mxu0 0.0
  %3734 = vmatpush1.msra.mxu0 0.0
  %3735 = vmatprep.subr.mxu0 0.0
  %3736 = vmatpush1.msra.mxu0 0.0
  %3737 = vmatprep.subr.mxu0 0.0
  %3738 = vmatpush1.msra.mxu0 0.0
  %3739 = vmatprep.subr.mxu0 0.0
  %3740 = vmatpush1.msra.mxu0 0.0
  %3741 = vmatprep.subr.mxu0 0.0
  %3742 = vmatpush1.msra.mxu0 0.0
  %3743 = vmatprep.subr.mxu0 0.0
  %3744 = vmatpush1.msra.mxu0 0.0
  %3745 = vmatprep.subr.mxu0 0.0
  %3746 = vmatpush1.msra.mxu0 0.0
  %3747 = vmatprep.subr.mxu0 0.0
  %3748 = vmatpush1.msra.mxu0 0.0
  %3749 = vmatprep.subr.mxu0 0.0
  %3750 = vmatpush1.msra.mxu0 0.0
  %3751 = vmatprep.subr.mxu0 0.0
  %3752 = vmatpush1.msra.mxu0 0.0
  %3753 = vmatprep.subr.mxu0 0.0
  %3754 = vmatpush1.msra.mxu0 0.0
  %3755 = vmatprep.subr.mxu0 0.0
  %3756 = vmatpush1.msra.mxu0 0.0
  %3757 = vmatprep.subr.mxu0 0.0
  %3758 = vmatpush1.msra.mxu0 0.0
  %3759 = vmatprep.subr.mxu0 0.0
  %3760 = vmatpush1.msra.mxu0 0.0
  %3761 = vmatprep.subr.mxu0 0.0
  %3762 = vmatpush1.msra.mxu0 0.0
  %3763 = vmatprep.subr.mxu0 0.0
  %3764 = vmatpush1.msra.mxu0 0.0
  %3765 = vmatprep.subr.mxu0 0.0
  %3766 = vmatpush1.msra.mxu0 0.0
  %3767 = vmatprep.subr.mxu0 0.0
  %3768 = vmatpush1.msra.mxu0 0.0
  %3769 = vmatprep.subr.mxu0 0.0
  %3770 = vmatpush1.msra.mxu0 0.0
  %3771 = vmatprep.subr.mxu0 0.0
  %3772 = vmatpush1.msra.mxu0 0.0
  %3773 = vmatprep.subr.mxu0 0.0
  %3774 = vmatpush1.msra.mxu0 0.0
  %3775 = vmatprep.subr.mxu0 0.0
  %3776 = vmatpush1.msra.mxu0 0.0
  %3777 = vmatprep.subr.mxu0 0.0
  %3778 = vmatpush1.msra.mxu0 0.0
  %3779 = vmatprep.subr.mxu0 0.0
  %3780 = vmatpush1.msra.mxu0 0.0
  %3781 = vmatprep.subr.mxu0 0.0
  %3782 = vmatpush1.msra.mxu0 0.0
  %3783 = vmatprep.mubr.f32.mxu0 0.0
  %3784 = vmatmul.mubr.f32.gmra.mrb[0].mxu0 %v3714
  %v3785 = vpop.f32.mrb[0].mxu0
  %v3786 = vadd.f32 %v3712, %v3785
  %v3787 = vpop.f32.mrb[0].mxu0
  %3788 = vmatprep.mubr.f32.mxu0 0.0
  %3789 = vmatmul.mubr.f32.gmra.mrb[0].mxu0 %v3717
  %v3790 = vpop.f32.mrb[0].mxu0
  %v3791 = vadd.f32 %v3712, %v3790
  %v3792 = vpop.f32.mrb[0].mxu0
  %3793 = vdwg.mxu0
  %v3794 = vmax.f32 %v3786, 0.0
  %v3795 = vmax.f32 %v3791, 0.0
  %v3796 = vlaneseq
  %v3797 = vshrl.u32 %v3796, 7
  %v3798 = vsub.s32 5, %v3797
  %v3799 = vrot.slane %v2993, %v3798
  %v3801 = vsel %vm871, %v3794, 0
  %v3804 = vsel %vm871, %v3795, 0
  %3806 = vmatprep.subr.mxu0 0.0
  %3807 = vmatpush1.msra.mxu0 %v2984
  %3808 = vmatprep.subr.mxu0 0.0
  %3809 = vmatpush1.msra.mxu0 %v2985
  %3810 = vmatprep.subr.mxu0 0.0
  %3811 = vmatpush1.msra.mxu0 %v2986
  %3812 = vmatprep.subr.mxu0 0.0
  %3813 = vmatpush1.msra.mxu0 %v2987
  %3814 = vmatprep.subr.mxu0 0.0
  %3815 = vmatpush1.msra.mxu0 %v2988
  %3816 = vmatprep.subr.mxu0 0.0
  %3817 = vmatpush1.msra.mxu0 %v2989
  %3818 = vmatprep.subr.mxu0 0.0
  %3819 = vmatpush1.msra.mxu0 %v2990
  %3820 = vmatprep.subr.mxu0 0.0
  %3821 = vmatpush1.msra.mxu0 %v2991
  %3822 = vmatprep.subr.mxu0 0.0
  %3823 = vmatpush1.msra.mxu0 0.0
  %3824 = vmatprep.subr.mxu0 0.0
  %3825 = vmatpush1.msra.mxu0 0.0
  %3826 = vmatprep.subr.mxu0 0.0
  %3827 = vmatpush1.msra.mxu0 0.0
  %3828 = vmatprep.subr.mxu0 0.0
  %3829 = vmatpush1.msra.mxu0 0.0
  %3830 = vmatprep.subr.mxu0 0.0
  %3831 = vmatpush1.msra.mxu0 0.0
  %3832 = vmatprep.subr.mxu0 0.0
  %3833 = vmatpush1.msra.mxu0 0.0
  %3834 = vmatprep.subr.mxu0 0.0
  %3835 = vmatpush1.msra.mxu0 0.0
  %3836 = vmatprep.subr.mxu0 0.0
  %3837 = vmatpush1.msra.mxu0 0.0
  %3838 = vmatprep.subr.mxu0 0.0
  %3839 = vmatpush1.msra.mxu0 0.0
  %3840 = vmatprep.subr.mxu0 0.0
  %3841 = vmatpush1.msra.mxu0 0.0
  %3842 = vmatprep.subr.mxu0 0.0
  %3843 = vmatpush1.msra.mxu0 0.0
  %3844 = vmatprep.subr.mxu0 0.0
  %3845 = vmatpush1.msra.mxu0 0.0
  %3846 = vmatprep.subr.mxu0 0.0
  %3847 = vmatpush1.msra.mxu0 0.0
  %3848 = vmatprep.subr.mxu0 0.0
  %3849 = vmatpush1.msra.mxu0 0.0
  %3850 = vmatprep.subr.mxu0 0.0
  %3851 = vmatpush1.msra.mxu0 0.0
  %3852 = vmatprep.subr.mxu0 0.0
  %3853 = vmatpush1.msra.mxu0 0.0
  %3854 = vmatprep.subr.mxu0 0.0
  %3855 = vmatpush1.msra.mxu0 0.0
  %3856 = vmatprep.subr.mxu0 0.0
  %3857 = vmatpush1.msra.mxu0 0.0
  %3858 = vmatprep.subr.mxu0 0.0
  %3859 = vmatpush1.msra.mxu0 0.0
  %3860 = vmatprep.subr.mxu0 0.0
  %3861 = vmatpush1.msra.mxu0 0.0
  %3862 = vmatprep.subr.mxu0 0.0
  %3863 = vmatpush1.msra.mxu0 0.0
  %3864 = vmatprep.subr.mxu0 0.0
  %3865 = vmatpush1.msra.mxu0 0.0
  %3866 = vmatprep.subr.mxu0 0.0
  %3867 = vmatpush1.msra.mxu0 0.0
  %3868 = vmatprep.subr.mxu0 0.0
  %3869 = vmatpush1.msra.mxu0 0.0
  %3870 = vmatprep.mubr.f32.mxu0 0.0
  %3871 = vmatmul.mubr.f32.gmra.mrb[0].mxu0 %v3801
  %v3872 = vpop.f32.mrb[0].mxu0
  %v3873 = vadd.f32 %v3799, %v3872
  %v3874 = vpop.f32.mrb[0].mxu0
  %3875 = vmatprep.mubr.f32.mxu0 0.0
  %3876 = vmatmul.mubr.f32.gmra.mrb[0].mxu0 %v3804
  %v3877 = vpop.f32.mrb[0].mxu0
  %v3878 = vadd.f32 %v3799, %v3877
  %v3879 = vpop.f32.mrb[0].mxu0
  %3880 = vdwg.mxu0
  %v3881 = vadd.f32 %v3707, %v3873
  %v3882 = vadd.f32 %v3708, %v3878
  %v3883 = vsel %vm66, %v3881, 0.0
  %3884 = vadd.xlane.f32.xlu0 %v3883
  %v3885 = vpop.xlane.xlu0 %3884
  %v3886 = vsel %vm66, %v3882, 0.0
  %3887 = vadd.xlane.f32.xlu0 %v3886
  %v3888 = vpop.xlane.xlu0 %3887
  %v3889 = vmul.f32 %v3885, %v747
  %v3890 = vmul.f32 %v3888, %v747
  %v3891 = vsub.f32 %v3881, %v3889
  %v3892 = vsub.f32 %v3882, %v3890
  %v3893 = vmul.f32 %v3891, %v3891
  %v3894 = vmul.f32 %v3892, %v3892
  %v3895 = vsel %vm66, %v3893, 0.0
  %3896 = vadd.xlane.f32.xlu0 %v3895
  %v3897 = vpop.xlane.xlu0 %3896
  %v3898 = vsel %vm66, %v3894, 0.0
  %3899 = vadd.xlane.f32.xlu0 %v3898
  %v3900 = vpop.xlane.xlu0 %3899
  %v3901 = vmul.f32 %v3897, %v747
  %v3902 = vmul.f32 %v3900, %v747
  %v3903 = vadd.f32 %v3901, 1e-05
  %v3904 = vadd.f32 %v3902, 1e-05
  %v3905 = vrsqrt.pop %v3903
  %v3906 = vrsqrt.pop %v3904
  %v3907 = vmul.f32 %v3891, %v3905
  %v3908 = vmul.f32 %v3892, %v3906
  %v3909 = vlaneseq
  %v3910 = vshrl.u32 %v3909, 7
  %v3911 = vsub.s32 6, %v3910
  %v3912 = vrot.slane %v2993, %v3911
  %v3913 = vmul.f32 %v3907, %v3912
  %v3914 = vmul.f32 %v3908, %v3912
  %v3915 = vlaneseq
  %v3916 = vshrl.u32 %v3915, 7
  %v3917 = vsub.s32 7, %v3916
  %v3918 = vrot.slane %v2993, %v3917
  %v3919 = vadd.f32 %v3913, %v3918
  %v3920 = vadd.f32 %v3914, %v3918
  %v3921 = vld [vmem:[%s9] sm:$0xff]
  %v3922 = vld [vmem:[%s9 + $0x8] sm:$0xff]
  %v3923 = vld [vmem:[%s9 + $0x10] sm:$0xff]
  %v3924 = vld [vmem:[%s9 + $0x18] sm:$0xff]
  %v3925 = vld [vmem:[%s9 + $0x20] sm:$0x1]
  %v3926 = vlaneseq
  %v3927 = vshrl.u32 %v3926, 7
  %v3928 = vsub.s32 0, %v3927
  %v3929 = vrot.slane %v3925, %v3928
  %v3931 = vsel %vm66, %v3919, 0
  %v3934 = vsel %vm66, %v3920, 0
  %3936 = vmatprep.subr.mxu0 0.0
  %3937 = vmatpush1.msra.mxu0 %v3921
  %3938 = vmatprep.subr.mxu0 0.0
  %3939 = vmatpush1.msra.mxu0 %v3922
  %3940 = vmatprep.subr.mxu0 0.0
  %3941 = vmatpush1.msra.mxu0 %v3923
  %3942 = vmatprep.subr.mxu0 0.0
  %3943 = vmatpush1.msra.mxu0 %v3924
  %3944 = vmatprep.subr.mxu0 0.0
  %3945 = vmatpush1.msra.mxu0 0.0
  %3946 = vmatprep.subr.mxu0 0.0
  %3947 = vmatpush1.msra.mxu0 0.0
  %3948 = vmatprep.subr.mxu0 0.0
  %3949 = vmatpush1.msra.mxu0 0.0
  %3950 = vmatprep.subr.mxu0 0.0
  %3951 = vmatpush1.msra.mxu0 0.0
  %3952 = vmatprep.subr.mxu0 0.0
  %3953 = vmatpush1.msra.mxu0 0.0
  %3954 = vmatprep.subr.mxu0 0.0
  %3955 = vmatpush1.msra.mxu0 0.0
  %3956 = vmatprep.subr.mxu0 0.0
  %3957 = vmatpush1.msra.mxu0 0.0
  %3958 = vmatprep.subr.mxu0 0.0
  %3959 = vmatpush1.msra.mxu0 0.0
  %3960 = vmatprep.subr.mxu0 0.0
  %3961 = vmatpush1.msra.mxu0 0.0
  %3962 = vmatprep.subr.mxu0 0.0
  %3963 = vmatpush1.msra.mxu0 0.0
  %3964 = vmatprep.subr.mxu0 0.0
  %3965 = vmatpush1.msra.mxu0 0.0
  %3966 = vmatprep.subr.mxu0 0.0
  %3967 = vmatpush1.msra.mxu0 0.0
  %3968 = vmatprep.subr.mxu0 0.0
  %3969 = vmatpush1.msra.mxu0 0.0
  %3970 = vmatprep.subr.mxu0 0.0
  %3971 = vmatpush1.msra.mxu0 0.0
  %3972 = vmatprep.subr.mxu0 0.0
  %3973 = vmatpush1.msra.mxu0 0.0
  %3974 = vmatprep.subr.mxu0 0.0
  %3975 = vmatpush1.msra.mxu0 0.0
  %3976 = vmatprep.subr.mxu0 0.0
  %3977 = vmatpush1.msra.mxu0 0.0
  %3978 = vmatprep.subr.mxu0 0.0
  %3979 = vmatpush1.msra.mxu0 0.0
  %3980 = vmatprep.subr.mxu0 0.0
  %3981 = vmatpush1.msra.mxu0 0.0
  %3982 = vmatprep.subr.mxu0 0.0
  %3983 = vmatpush1.msra.mxu0 0.0
  %3984 = vmatprep.subr.mxu0 0.0
  %3985 = vmatpush1.msra.mxu0 0.0
  %3986 = vmatprep.subr.mxu0 0.0
  %3987 = vmatpush1.msra.mxu0 0.0
  %3988 = vmatprep.subr.mxu0 0.0
  %3989 = vmatpush1.msra.mxu0 0.0
  %3990 = vmatprep.subr.mxu0 0.0
  %3991 = vmatpush1.msra.mxu0 0.0
  %3992 = vmatprep.subr.mxu0 0.0
  %3993 = vmatpush1.msra.mxu0 0.0
  %3994 = vmatprep.subr.mxu0 0.0
  %3995 = vmatpush1.msra.mxu0 0.0
  %3996 = vmatprep.subr.mxu0 0.0
  %3997 = vmatpush1.msra.mxu0 0.0
  %3998 = vmatprep.subr.mxu0 0.0
  %3999 = vmatpush1.msra.mxu0 0.0
  %4000 = vmatprep.mubr.f32.mxu0 0.0
  %4001 = vmatmul.mubr.f32.gmra.mrb[0].mxu0 %v3931
  %v4002 = vpop.f32.mrb[0].mxu0
  %v4003 = vadd.f32 %v3929, %v4002
  %v4004 = vpop.f32.mrb[0].mxu0
  %4005 = vmatprep.mubr.f32.mxu0 0.0
  %4006 = vmatmul.mubr.f32.gmra.mrb[0].mxu0 %v3934
  %v4007 = vpop.f32.mrb[0].mxu0
  %v4008 = vadd.f32 %v3929, %v4007
  %v4009 = vpop.f32.mrb[0].mxu0
  %4010 = vdwg.mxu0
  %4011 = vst [vmem:[%s10] sm:$0xff] %v4003
  %4012 = vst [vmem:[%s10 + $0x8] sm:$0xff] %v4008
  // Predicated region
  $region42: #{primitive_ae_forward.1} parent=0 // pred_check
    _
  $region43: #{primitive_ae_forward.1} parent=0 // pred_check_branch
    %4014 = sbr.rel (0) target = $region45
  $region44: #{primitive_ae_forward.1} parent=0 // pred_region
    _
  $region45: #{primitive_ae_forward.1} parent=0 // pred_fallthru
    _
  // Predicated region
  $region46: #{primitive_ae_forward.1} parent=0 // pred_check
    _
  $region47: #{primitive_ae_forward.1} parent=0 // pred_check_branch
    %4016 = sbr.rel (0) target = $region49
  $region48: #{primitive_ae_forward.1} parent=0 // pred_region
    _
  $region49: #{primitive_ae_forward.1} parent=0 // pred_fallthru
    _

</llo_original>
